<compile_context>
chip_gen: v6e
topology: v6e:2x2x1
jax: 0.10.0
libtpu: 0.0.40
codegen_flags: <defaults>
</compile_context>

<pallas_src>
import math
import functools

import jax
import jax.numpy as jnp
from jax.experimental import pallas as pl
from jax.experimental.pallas import tpu as pltpu

# ---- model config (from PCNN.__init__ / CNN.__init__ / Embedding.__init__) --
CIN = 60            # word_dim == pos_dim == conv in_channels
COUT = 100          # conv out_channels
KSIZES = (3, 5, 7)
NTAPS = max(KSIZES)             # 7
MAXPAD = max(KSIZES) // 2       # 3
FC1_OUT = 80
NCLASS = 11
POS_SIZE = 62

# ---- lane-friendly padded sizes ---------------------------------------------
TAPK = 64                       # padded CIN (lane dim of the embedding slab)
COUTP = 128                     # per-branch padded COUT
NP = len(KSIZES) * COUTP        # 384 (concatenated conv features)
F1P = 128                       # padded fc1 output
NOUTP = 128                     # padded logits (sliced back to 11)


def _round_up(x, m):
    return -(-x // m) * m


def _gelu_erf(x):
    # exact GELU as in the reference GELU module: x * 0.5 * (1 + erf(x/sqrt(2)))
    return x * 0.5 * (1.0 + jax.lax.erf(x / jnp.float32(math.sqrt(2.0))))


def pcnn_kernel(x_ref, fill_ref, wc_ref, w1_ref, b1_ref, w2_ref, b2_ref,
                o_ref, *, tb, lp):
    """One batch tile: TB rows, LP (8-aligned) sequence positions each."""
    cd = x_ref.dtype                      # matmul operand dtype
    rows = tb * lp

    # --- in-kernel tap expansion: 7 accumulating K=64 MXU matmuls ------------
    # Tap t of the halo-padded slab paired with wc[t] realizes all three
    # Conv1d branches at once (weights outside a branch's support are zero).
    y = jnp.zeros((rows, NP), jnp.float32)
    for t in range(NTAPS):
        xt = x_ref[:, t:t + lp, :].reshape(rows, TAPK)
        y = y + jnp.dot(xt, wc_ref[t], preferred_element_type=jnp.float32)

    # exact erf-GELU (parity with the torch GELU module), f32 epilogue.
    # TODO(synk): tanh-approx / bf16 GELU would move this off the f32 VALU path.
    y = _gelu_erf(y)

    # --- vectorized seq_len_to_mask + max-pool --------------------------------
    # fill: 0.0 = valid, 1e-12 = pad position (< L), -1e30 = alignment-only row.
    fill = fill_ref[...]                               # (rows, 1) f32
    y = jnp.where(fill == 0.0, y, fill)                # one lane-broadcast select
    pooled = jnp.max(y.reshape(tb, lp, NP), axis=1)    # (tb, 384) lane-dense

    # --- FC head: (TB,384)@(384,128) -> leaky_relu -> (TB,128)@(128,128) -----
    h = jnp.dot(pooled.astype(cd), w1_ref[...],
                preferred_element_type=jnp.float32) + b1_ref[...]
    h = jnp.where(h > 0, h, jnp.float32(0.01) * h)     # F.leaky_relu (f32)
    out = jnp.dot(h.astype(cd), w2_ref[...],
                  preferred_element_type=jnp.float32) + b2_ref[...]
    o_ref[...] = out                                   # (TB, 128) unmasked store


def pcnn_forward(word, lens, head_pos, tail_pos, params,
                 *, compute_dtype=jnp.bfloat16):
    """word/head_pos/tail_pos: int32 [B, L]; lens: int32 [B].

    compute_dtype=jnp.bfloat16 (default) feeds bf16 operands to every matmul
    (f32 accumulation, f32 epilogue) — halves the dominant HBM stream on every
    generation.  compute_dtype=jnp.float32 gives exact float32 parity.
    """
    B, L = word.shape
    lp = _round_up(L, 8)                  # sublane-aligned sequence length
    lpp = lp + 2 * MAXPAD                 # + conv halo

    # Batch tile: target >=1024 MXU rows per step, tb a multiple of 8, and at
    # least 2 grid steps when the batch allows (v7x: 2 TensorCores).
    target_rows = 1024
    tb = max(8, (target_rows // lp) // 8 * 8)
    tb = min(tb, _round_up(B, 8))
    while tb > 8 and -(-B // tb) < 2:
        tb = max(8, (tb // 2) // 8 * 8)
    b_pad = _round_up(B, tb)
    nsteps = b_pad // tb
    rows = tb * lp                        # MXU M per grid step

    # ---- Embedding (sum strategy) -- gather glue stays in plain JAX ---------
    emb = (params["wordEmbed"][word]
           + params["headPosEmbed"][head_pos]
           + params["tailPosEmbed"][tail_pos]).astype(jnp.float32)  # (B, L, 60)

    # ---- single HBM activation stream: (b_pad, L+halo, 64) ------------------
    x_pad = jnp.pad(emb, ((0, b_pad - B),
                          (MAXPAD, MAXPAD + (lp - L)),
                          (0, TAPK - CIN))).astype(compute_dtype)   # (b_pad, lpp, 64)

    # ---- stacked per-tap conv weights (7, 64, 384) ---------------------------
    # Branch bi occupies columns [bi*128, bi*128+100); kernel tap j of a size-k
    # branch lands on slab tap t = MAXPAD - k//2 + j.  Other taps stay zero.
    wc = jnp.zeros((NTAPS, TAPK, NP), jnp.float32)
    for bi, (name, k) in enumerate((("conv3", 3), ("conv5", 5), ("conv7", 7))):
        w = params[name]                                     # (COUT, CIN, k)
        p = k // 2
        for j in range(k):
            t = MAXPAD - p + j
            wc = wc.at[t, :CIN, bi * COUTP:bi * COUTP + COUT].set(w[:, :, j].T)
    wc = wc.astype(compute_dtype)

    # ---- padded FC head ------------------------------------------------------
    w1t = params["fc1_w"].T                                  # (300, 80)
    w1_pad = jnp.zeros((NP, F1P), jnp.float32)
    for bi in range(len(KSIZES)):
        w1_pad = w1_pad.at[bi * COUTP:bi * COUTP + COUT, :FC1_OUT].set(
            w1t[bi * COUT:(bi + 1) * COUT])
    b1_pad = jnp.zeros((1, F1P), jnp.float32).at[0, :FC1_OUT].set(params["fc1_b"])
    w2_pad = jnp.zeros((F1P, NOUTP), jnp.float32).at[:FC1_OUT, :NCLASS].set(
        params["fc2_w"].T)
    b2_pad = jnp.zeros((1, NOUTP), jnp.float32).at[0, :NCLASS].set(params["fc2_b"])
    w1_pad = w1_pad.astype(compute_dtype)
    w2_pad = w2_pad.astype(compute_dtype)

    # ---- per-row fill column for the mask/max-pool ---------------------------
    # seq_len_to_mask in the torch reference uses max_len = lens.max(); the
    # module requires lens.max() == L (guaranteed by the data pipeline).
    lens_pad = jnp.pad(lens.astype(jnp.int32), (0, b_pad - B))
    pos = jnp.arange(lp, dtype=jnp.int32)[None, :]                   # (1, lp)
    fill = jnp.where(pos >= lens_pad[:, None], jnp.float32(1e-12),
                     jnp.float32(0.0))                               # pad -> 1e-12
    fill = jnp.where(pos >= L, jnp.float32(-1e30), fill)             # align rows never win
    fill = fill.reshape(b_pad * lp, 1)

    kern = functools.partial(pcnn_kernel, tb=tb, lp=lp)

    out = pl.pallas_call(
        kern,
        out_shape=jax.ShapeDtypeStruct((b_pad, NOUTP), jnp.float32),
        grid_spec=pltpu.PrefetchScalarGridSpec(
            num_scalar_prefetch=0,
            grid=(nsteps,),
            in_specs=[
                pl.BlockSpec((tb, lpp, TAPK), lambda i: (i, 0, 0)),   # emb slab
                pl.BlockSpec((rows, 1), lambda i: (i, 0)),            # fill column
                pl.BlockSpec((NTAPS, TAPK, NP), lambda i: (0, 0, 0)), # conv weights
                pl.BlockSpec((NP, F1P), lambda i: (0, 0)),            # fc1 w
                pl.BlockSpec((1, F1P), lambda i: (0, 0)),             # fc1 b
                pl.BlockSpec((F1P, NOUTP), lambda i: (0, 0)),         # fc2 w
                pl.BlockSpec((1, NOUTP), lambda i: (0, 0)),           # fc2 b
            ],
            out_specs=pl.BlockSpec((tb, NOUTP), lambda i: (i, 0)),
        ),
        compiler_params=pltpu.CompilerParams(
            dimension_semantics=("parallel",)),                       # v7x: 2 TCs
    )(x_pad, fill, wc, w1_pad, b1_pad, w2_pad, b2_pad)

    return out[:B, :NCLASS]                                           # (B, 11)


def pcnn_reference(word, lens, head_pos, tail_pos, params):
    """Pure-JAX reference (uses lax.conv_general_dilated) for validation."""
    B, L = word.shape
    emb = (params["wordEmbed"][word]
           + params["headPosEmbed"][head_pos]
           + params["tailPosEmbed"][tail_pos]).astype(jnp.float32)   # (B, L, CIN)
    x = jnp.transpose(emb, (0, 2, 1))                                # (B, CIN, L)
    outs = []
    for name, k in (("conv3", 3), ("conv5", 5), ("conv7", 7)):
        y = jax.lax.conv_general_dilated(
            x, params[name], window_strides=(1,),
            padding=[(k // 2, k // 2)],
            dimension_numbers=("NCH", "OIH", "NCH"))
        outs.append(_gelu_erf(y))
    cat = jnp.concatenate(outs, axis=1)                              # (B, 300, L)
    mask = jnp.arange(L)[None, :] >= lens[:, None]                   # (B, L)
    cat = jnp.where(mask[:, None, :], jnp.float32(1e-12), cat)
    xp = jnp.max(cat, axis=-1)                                       # (B, 300)
    h = xp @ params["fc1_w"].T + params["fc1_b"]
    h = jnp.where(h > 0, h, 0.01 * h)
    return h @ params["fc2_w"].T + params["fc2_b"]


def init_params(key, vocab_size):
    ks = jax.random.split(key, 10)

    def nrm(k, shape, scale=0.1):
        return (scale * jax.random.normal(k, shape)).astype(jnp.float32)

    params = {
        # Embeddings (padding_idx=0 rows are zero)
        "wordEmbed": nrm(ks[0], (vocab_size, CIN)).at[0].set(0.0),
        "headPosEmbed": nrm(ks[1], (POS_SIZE, CIN)).at[0].set(0.0),
        "tailPosEmbed": nrm(ks[2], (POS_SIZE, CIN)).at[0].set(0.0),
        # Conv1d weights: [Cout, Cin, k], bias=False
        "conv3": nrm(ks[3], (COUT, CIN, 3)),
        "conv5": nrm(ks[4], (COUT, CIN, 5)),
        "conv7": nrm(ks[5], (COUT, CIN, 7)),
        # Linear layers (torch convention: weight [out, in])
        "fc1_w": nrm(ks[6], (FC1_OUT, len(KSIZES) * COUT)),
        "fc1_b": nrm(ks[7], (FC1_OUT,)),
        "fc2_w": nrm(ks[8], (NCLASS, FC1_OUT)),
        "fc2_b": nrm(ks[9], (NCLASS,)),
    }
    return params


if __name__ == "__main__":
    key = jax.random.PRNGKey(0)
    kp, kw, kh, kt = jax.random.split(key, 4)

    B, L, VOCAB = 2, 16, 30
    params = init_params(kp, VOCAB)

    word = jax.random.randint(kw, (B, L), 1, VOCAB, dtype=jnp.int32)
    head_pos = jax.random.randint(kh, (B, L), 1, POS_SIZE, dtype=jnp.int32)
    tail_pos = jax.random.randint(kt, (B, L), 1, POS_SIZE, dtype=jnp.int32)
    lens = jnp.array([L, 10], dtype=jnp.int32)   # lens.max() == L

    ref = jax.block_until_ready(
        pcnn_reference(word, lens, head_pos, tail_pos, params))

    # f32 path: exact parity with the PyTorch float32 module.
    out_f32 = jax.block_until_ready(
        pcnn_forward(word, lens, head_pos, tail_pos, params,
                     compute_dtype=jnp.float32))
    assert out_f32.shape == (B, NCLASS), out_f32.shape
    assert jnp.allclose(out_f32, ref, rtol=1e-4, atol=1e-4), (out_f32, ref)

    # default bf16 MXU-operand path (recommended on v5e/v6e/v7x): f32
    # accumulation + f32 epilogue; checked at bf16-appropriate tolerance.
    out = jax.block_until_ready(
        pcnn_forward(word, lens, head_pos, tail_pos, params))
    assert out.shape == (B, NCLASS), out.shape
    assert jnp.allclose(out, ref, rtol=1e-1, atol=1e-1), (out, ref)

    print("KERNEL_OK")
</pallas_src>

<mosaic_0001>
module attributes {stable_mosaic.version = 11 : i64} {
  func.func @pcnn_kernel(%arg0: i32, %arg1: memref<8x22x64xf32, #tpu.memory_space<vmem>>, %arg2: memref<128x1xf32, #tpu.memory_space<vmem>>, %arg3: memref<7x64x384xf32, #tpu.memory_space<vmem>>, %arg4: memref<384x128xf32, #tpu.memory_space<vmem>>, %arg5: memref<1x128xf32, #tpu.memory_space<vmem>>, %arg6: memref<128x128xf32, #tpu.memory_space<vmem>>, %arg7: memref<1x128xf32, #tpu.memory_space<vmem>>, %arg8: memref<8x128xf32, #tpu.memory_space<vmem>>) attributes {dimension_semantics = [#tpu.dimension_semantics<parallel>], iteration_bounds = array<i64: 1>, scalar_prefetch = 0 : i64, scratch_operands = 0 : i64, tpu.core_type = #tpu.core_type<tc>, window_params = [{transform_indices = @transform_0, window_bounds = array<i64: 8, 22, 64>}, {transform_indices = @transform_1, window_bounds = array<i64: 128, 1>}, {pipeline_mode = #tpu.pipeline_mode<synchronous>, transform_indices = @transform_2, window_bounds = array<i64: 7, 64, 384>}, {pipeline_mode = #tpu.pipeline_mode<synchronous>, transform_indices = @transform_3, window_bounds = array<i64: 384, 128>}, {pipeline_mode = #tpu.pipeline_mode<synchronous>, transform_indices = @transform_4, window_bounds = array<i64: 1, 128>}, {pipeline_mode = #tpu.pipeline_mode<synchronous>, transform_indices = @transform_5, window_bounds = array<i64: 128, 128>}, {pipeline_mode = #tpu.pipeline_mode<synchronous>, transform_indices = @transform_6, window_bounds = array<i64: 1, 128>}, {transform_indices = @transform_7, window_bounds = array<i64: 8, 128>}]} {
    %cst = arith.constant 0.000000e+00 : f32
    %0 = vector.broadcast %cst : f32 to vector<128x384xf32>
    %c0 = arith.constant 0 : index
    %c0_0 = arith.constant 0 : index
    %c0_1 = arith.constant 0 : index
    %1 = vector.load %arg1[%c0, %c0_0, %c0_1] : memref<8x22x64xf32, #tpu.memory_space<vmem>>, vector<8x16x64xf32>
    %2 = vector.shape_cast %1 : vector<8x16x64xf32> to vector<128x64xf32>
    %c0_2 = arith.constant 0 : index
    %c0_3 = arith.constant 0 : index
    %c0_4 = arith.constant 0 : index
    %3 = vector.load %arg3[%c0_2, %c0_3, %c0_4] : memref<7x64x384xf32, #tpu.memory_space<vmem>>, vector<1x64x384xf32>
    %4 = vector.shape_cast %3 : vector<1x64x384xf32> to vector<64x384xf32>
    %cst_5 = arith.constant dense<0.000000e+00> : vector<128x384xf32>
    %5 = tpu.matmul %2, %4, %cst_5 {dimension_numbers = #tpu.dot_dimension_numbers<[1], [0], [0], [1], [0, 0, 1, 1], [], []>} : vector<128x64xf32>, vector<64x384xf32>, vector<128x384xf32> -> vector<128x384xf32>
    %6 = arith.addf %0, %5 : vector<128x384xf32>
    %c0_6 = arith.constant 0 : index
    %c1 = arith.constant 1 : index
    %c0_7 = arith.constant 0 : index
    %7 = vector.load %arg1[%c0_6, %c1, %c0_7] : memref<8x22x64xf32, #tpu.memory_space<vmem>>, vector<8x16x64xf32>
    %8 = vector.shape_cast %7 : vector<8x16x64xf32> to vector<128x64xf32>
    %c1_8 = arith.constant 1 : index
    %c0_9 = arith.constant 0 : index
    %c0_10 = arith.constant 0 : index
    %9 = vector.load %arg3[%c1_8, %c0_9, %c0_10] : memref<7x64x384xf32, #tpu.memory_space<vmem>>, vector<1x64x384xf32>
    %10 = vector.shape_cast %9 : vector<1x64x384xf32> to vector<64x384xf32>
    %cst_11 = arith.constant dense<0.000000e+00> : vector<128x384xf32>
    %11 = tpu.matmul %8, %10, %cst_11 {dimension_numbers = #tpu.dot_dimension_numbers<[1], [0], [0], [1], [0, 0, 1, 1], [], []>} : vector<128x64xf32>, vector<64x384xf32>, vector<128x384xf32> -> vector<128x384xf32>
    %12 = arith.addf %6, %11 : vector<128x384xf32>
    %c0_12 = arith.constant 0 : index
    %c2 = arith.constant 2 : index
    %c0_13 = arith.constant 0 : index
    %13 = vector.load %arg1[%c0_12, %c2, %c0_13] : memref<8x22x64xf32, #tpu.memory_space<vmem>>, vector<8x16x64xf32>
    %14 = vector.shape_cast %13 : vector<8x16x64xf32> to vector<128x64xf32>
    %c2_14 = arith.constant 2 : index
    %c0_15 = arith.constant 0 : index
    %c0_16 = arith.constant 0 : index
    %15 = vector.load %arg3[%c2_14, %c0_15, %c0_16] : memref<7x64x384xf32, #tpu.memory_space<vmem>>, vector<1x64x384xf32>
    %16 = vector.shape_cast %15 : vector<1x64x384xf32> to vector<64x384xf32>
    %cst_17 = arith.constant dense<0.000000e+00> : vector<128x384xf32>
    %17 = tpu.matmul %14, %16, %cst_17 {dimension_numbers = #tpu.dot_dimension_numbers<[1], [0], [0], [1], [0, 0, 1, 1], [], []>} : vector<128x64xf32>, vector<64x384xf32>, vector<128x384xf32> -> vector<128x384xf32>
    %18 = arith.addf %12, %17 : vector<128x384xf32>
    %c0_18 = arith.constant 0 : index
    %c3 = arith.constant 3 : index
    %c0_19 = arith.constant 0 : index
    %19 = vector.load %arg1[%c0_18, %c3, %c0_19] : memref<8x22x64xf32, #tpu.memory_space<vmem>>, vector<8x16x64xf32>
    %20 = vector.shape_cast %19 : vector<8x16x64xf32> to vector<128x64xf32>
    %c3_20 = arith.constant 3 : index
    %c0_21 = arith.constant 0 : index
    %c0_22 = arith.constant 0 : index
    %21 = vector.load %arg3[%c3_20, %c0_21, %c0_22] : memref<7x64x384xf32, #tpu.memory_space<vmem>>, vector<1x64x384xf32>
    %22 = vector.shape_cast %21 : vector<1x64x384xf32> to vector<64x384xf32>
    %cst_23 = arith.constant dense<0.000000e+00> : vector<128x384xf32>
    %23 = tpu.matmul %20, %22, %cst_23 {dimension_numbers = #tpu.dot_dimension_numbers<[1], [0], [0], [1], [0, 0, 1, 1], [], []>} : vector<128x64xf32>, vector<64x384xf32>, vector<128x384xf32> -> vector<128x384xf32>
    %24 = arith.addf %18, %23 : vector<128x384xf32>
    %c0_24 = arith.constant 0 : index
    %c4 = arith.constant 4 : index
    %c0_25 = arith.constant 0 : index
    %25 = vector.load %arg1[%c0_24, %c4, %c0_25] : memref<8x22x64xf32, #tpu.memory_space<vmem>>, vector<8x16x64xf32>
    %26 = vector.shape_cast %25 : vector<8x16x64xf32> to vector<128x64xf32>
    %c4_26 = arith.constant 4 : index
    %c0_27 = arith.constant 0 : index
    %c0_28 = arith.constant 0 : index
    %27 = vector.load %arg3[%c4_26, %c0_27, %c0_28] : memref<7x64x384xf32, #tpu.memory_space<vmem>>, vector<1x64x384xf32>
    %28 = vector.shape_cast %27 : vector<1x64x384xf32> to vector<64x384xf32>
    %cst_29 = arith.constant dense<0.000000e+00> : vector<128x384xf32>
    %29 = tpu.matmul %26, %28, %cst_29 {dimension_numbers = #tpu.dot_dimension_numbers<[1], [0], [0], [1], [0, 0, 1, 1], [], []>} : vector<128x64xf32>, vector<64x384xf32>, vector<128x384xf32> -> vector<128x384xf32>
    %30 = arith.addf %24, %29 : vector<128x384xf32>
    %c0_30 = arith.constant 0 : index
    %c5 = arith.constant 5 : index
    %c0_31 = arith.constant 0 : index
    %31 = vector.load %arg1[%c0_30, %c5, %c0_31] : memref<8x22x64xf32, #tpu.memory_space<vmem>>, vector<8x16x64xf32>
    %32 = vector.shape_cast %31 : vector<8x16x64xf32> to vector<128x64xf32>
    %c5_32 = arith.constant 5 : index
    %c0_33 = arith.constant 0 : index
    %c0_34 = arith.constant 0 : index
    %33 = vector.load %arg3[%c5_32, %c0_33, %c0_34] : memref<7x64x384xf32, #tpu.memory_space<vmem>>, vector<1x64x384xf32>
    %34 = vector.shape_cast %33 : vector<1x64x384xf32> to vector<64x384xf32>
    %cst_35 = arith.constant dense<0.000000e+00> : vector<128x384xf32>
    %35 = tpu.matmul %32, %34, %cst_35 {dimension_numbers = #tpu.dot_dimension_numbers<[1], [0], [0], [1], [0, 0, 1, 1], [], []>} : vector<128x64xf32>, vector<64x384xf32>, vector<128x384xf32> -> vector<128x384xf32>
    %36 = arith.addf %30, %35 : vector<128x384xf32>
    %c0_36 = arith.constant 0 : index
    %c6 = arith.constant 6 : index
    %c0_37 = arith.constant 0 : index
    %37 = vector.load %arg1[%c0_36, %c6, %c0_37] : memref<8x22x64xf32, #tpu.memory_space<vmem>>, vector<8x16x64xf32>
    %38 = vector.shape_cast %37 : vector<8x16x64xf32> to vector<128x64xf32>
    %c6_38 = arith.constant 6 : index
    %c0_39 = arith.constant 0 : index
    %c0_40 = arith.constant 0 : index
    %39 = vector.load %arg3[%c6_38, %c0_39, %c0_40] : memref<7x64x384xf32, #tpu.memory_space<vmem>>, vector<1x64x384xf32>
    %40 = vector.shape_cast %39 : vector<1x64x384xf32> to vector<64x384xf32>
    %cst_41 = arith.constant dense<0.000000e+00> : vector<128x384xf32>
    %41 = tpu.matmul %38, %40, %cst_41 {dimension_numbers = #tpu.dot_dimension_numbers<[1], [0], [0], [1], [0, 0, 1, 1], [], []>} : vector<128x64xf32>, vector<64x384xf32>, vector<128x384xf32> -> vector<128x384xf32>
    %42 = arith.addf %36, %41 : vector<128x384xf32>
    %cst_42 = arith.constant 5.000000e-01 : f32
    %43 = vector.broadcast %cst_42 : f32 to vector<128x384xf32>
    %44 = arith.mulf %42, %43 : vector<128x384xf32>
    %cst_43 = arith.constant 1.41421354 : f32
    %45 = vector.broadcast %cst_43 : f32 to vector<128x384xf32>
    %46 = arith.divf %42, %45 : vector<128x384xf32>
    %47 = math.erf %46 : vector<128x384xf32>
    %cst_44 = arith.constant 1.000000e+00 : f32
    %48 = vector.broadcast %cst_44 : f32 to vector<128x384xf32>
    %49 = arith.addf %48, %47 : vector<128x384xf32>
    %50 = arith.mulf %44, %49 : vector<128x384xf32>
    %c0_45 = arith.constant 0 : index
    %c0_46 = arith.constant 0 : index
    %51 = vector.load %arg2[%c0_45, %c0_46] : memref<128x1xf32, #tpu.memory_space<vmem>>, vector<128x1xf32>
    %cst_47 = arith.constant 0.000000e+00 : f32
    %52 = vector.broadcast %cst_47 : f32 to vector<128x1xf32>
    %53 = arith.cmpf oeq, %51, %52 : vector<128x1xf32>
    %54 = vector.shape_cast %53 : vector<128x1xi1> to vector<128x1xi1>
    %55 = vector.broadcast %54 : vector<128x1xi1> to vector<128x384xi1>
    %56 = vector.shape_cast %51 : vector<128x1xf32> to vector<128x1xf32>
    %57 = vector.broadcast %56 : vector<128x1xf32> to vector<128x384xf32>
    %58 = arith.select %55, %50, %57 : vector<128x384xi1>, vector<128x384xf32>
    %59 = vector.shape_cast %58 : vector<128x384xf32> to vector<8x16x384xf32>
    %cst_48 = arith.constant dense<0xFF800000> : vector<8x384xf32>
    %60 = vector.multi_reduction <maximumf>, %59, %cst_48 [1] : vector<8x16x384xf32> to vector<8x384xf32>
    %c0_49 = arith.constant 0 : index
    %c0_50 = arith.constant 0 : index
    %61 = vector.load %arg4[%c0_49, %c0_50] : memref<384x128xf32, #tpu.memory_space<vmem>>, vector<384x128xf32>
    %cst_51 = arith.constant dense<0.000000e+00> : vector<8x128xf32>
    %62 = tpu.matmul %60, %61, %cst_51 {dimension_numbers = #tpu.dot_dimension_numbers<[1], [0], [0], [1], [0, 0, 1, 1], [], []>} : vector<8x384xf32>, vector<384x128xf32>, vector<8x128xf32> -> vector<8x128xf32>
    %c0_52 = arith.constant 0 : index
    %c0_53 = arith.constant 0 : index
    %63 = vector.load %arg5[%c0_52, %c0_53] : memref<1x128xf32, #tpu.memory_space<vmem>>, vector<1x128xf32>
    %64 = vector.broadcast %63 : vector<1x128xf32> to vector<8x128xf32>
    %65 = arith.addf %62, %64 : vector<8x128xf32>
    %cst_54 = arith.constant 0.000000e+00 : f32
    %66 = vector.broadcast %cst_54 : f32 to vector<8x128xf32>
    %67 = arith.cmpf ogt, %65, %66 : vector<8x128xf32>
    %cst_55 = arith.constant 0.00999999977 : f32
    %68 = vector.broadcast %cst_55 : f32 to vector<8x128xf32>
    %69 = arith.mulf %68, %65 : vector<8x128xf32>
    %70 = arith.select %67, %65, %69 : vector<8x128xi1>, vector<8x128xf32>
    %c0_56 = arith.constant 0 : index
    %c0_57 = arith.constant 0 : index
    %71 = vector.load %arg6[%c0_56, %c0_57] : memref<128x128xf32, #tpu.memory_space<vmem>>, vector<128x128xf32>
    %cst_58 = arith.constant dense<0.000000e+00> : vector<8x128xf32>
    %72 = tpu.matmul %70, %71, %cst_58 {dimension_numbers = #tpu.dot_dimension_numbers<[1], [0], [0], [1], [0, 0, 1, 1], [], []>} : vector<8x128xf32>, vector<128x128xf32>, vector<8x128xf32> -> vector<8x128xf32>
    %c0_59 = arith.constant 0 : index
    %c0_60 = arith.constant 0 : index
    %73 = vector.load %arg7[%c0_59, %c0_60] : memref<1x128xf32, #tpu.memory_space<vmem>>, vector<1x128xf32>
    %74 = vector.broadcast %73 : vector<1x128xf32> to vector<8x128xf32>
    %75 = arith.addf %72, %74 : vector<8x128xf32>
    %c0_61 = arith.constant 0 : index
    %c0_62 = arith.constant 0 : index
    %76 = vector.load %arg8[%c0_61, %c0_62] : memref<8x128xf32, #tpu.memory_space<vmem>>, vector<8x128xf32>
    tpu.vector_store %arg8[%c0_61, %c0_62], %75 {strides = array<i32>} : memref<8x128xf32, #tpu.memory_space<vmem>>, vector<8x128xf32>,
    return
  }
  func.func @transform_0(%arg0: i32) -> (i32, i32, i32) {
    %c0_i32 = arith.constant 0 : i32
    %c0_i32_0 = arith.constant 0 : i32
    %c0_i32_1 = arith.constant 0 : i32
    return %arg0, %c0_i32, %c0_i32_0 : i32, i32, i32
  }
  func.func @transform_1(%arg0: i32) -> (i32, i32) {
    %c0_i32 = arith.constant 0 : i32
    %c0_i32_0 = arith.constant 0 : i32
    return %arg0, %c0_i32 : i32, i32
  }
  func.func @transform_2(%arg0: i32) -> (i32, i32, i32) {
    %c0_i32 = arith.constant 0 : i32
    %c0_i32_0 = arith.constant 0 : i32
    %c0_i32_1 = arith.constant 0 : i32
    %c0_i32_2 = arith.constant 0 : i32
    return %c0_i32, %c0_i32_0, %c0_i32_1 : i32, i32, i32
  }
  func.func @transform_3(%arg0: i32) -> (i32, i32) {
    %c0_i32 = arith.constant 0 : i32
    %c0_i32_0 = arith.constant 0 : i32
    %c0_i32_1 = arith.constant 0 : i32
    return %c0_i32, %c0_i32_0 : i32, i32
  }
  func.func @transform_4(%arg0: i32) -> (i32, i32) {
    %c0_i32 = arith.constant 0 : i32
    %c0_i32_0 = arith.constant 0 : i32
    %c0_i32_1 = arith.constant 0 : i32
    return %c0_i32, %c0_i32_0 : i32, i32
  }
  func.func @transform_5(%arg0: i32) -> (i32, i32) {
    %c0_i32 = arith.constant 0 : i32
    %c0_i32_0 = arith.constant 0 : i32
    %c0_i32_1 = arith.constant 0 : i32
    return %c0_i32, %c0_i32_0 : i32, i32
  }
  func.func @transform_6(%arg0: i32) -> (i32, i32) {
    %c0_i32 = arith.constant 0 : i32
    %c0_i32_0 = arith.constant 0 : i32
    %c0_i32_1 = arith.constant 0 : i32
    return %c0_i32, %c0_i32_0 : i32, i32
  }
  func.func @transform_7(%arg0: i32) -> (i32, i32) {
    %c0_i32 = arith.constant 0 : i32
    %c0_i32_0 = arith.constant 0 : i32
    return %arg0, %c0_i32 : i32, i32
  }
}

</mosaic_0001>

<llo_original>
// kernel: tpu_custom_call.1
$region0: #{tpu_custom_call.1}
  #allocation0 [shape = 'u32[]', space=smem, size = 0x4, offset = 0x4, fixed_abs, tag = 'smem constant byte address 0x4 - core index']
  #allocation1 [shape = 'u32[144,128]{1,0:T(1,128)}', space=vmem, size = 0x12000, scoped, tag = 'internal scratch']
  %s0 = inlined_call_operand.vmem [shape: f32[8,22,64], index: 0, kind: input, shape index: {}]
  %s1 = inlined_call_operand.vmem [shape: f32[128,1], index: 1, kind: input, shape index: {}]
  %s2 = inlined_call_operand.hbm [shape: f32[7,64,384], index: 2, kind: input, shape index: {}]
  %s3 = inlined_call_operand.vmem [shape: f32[384,128], index: 3, kind: input, shape index: {}]
  %s4 = inlined_call_operand.vmem [shape: f32[1,128], index: 4, kind: input, shape index: {}]
  %s5 = inlined_call_operand.hbm [shape: f32[128,128], index: 5, kind: input, shape index: {}]
  %s6 = inlined_call_operand.vmem [shape: f32[1,128], index: 6, kind: input, shape index: {}]
  %s7 = inlined_call_operand.hbm [shape: f32[8,128], index: 7, kind: output, shape index: {}]
  %s8 = sld [smem:[#allocation0]]
  $region46: #{tpu_custom_call.1} parent=0
    _
  %s10 = ssub.s32 1, %s8
  %s11 = scalar_select 0, %s10, %s8
  $region1: #{tpu_custom_call.1} parent=0
    #allocation2 [shape = 'u8[688128]{0}', space=vmem, size = 0xa8000, scoped, tag = 'input window, operand 2, single buffered']
    #allocation3 [shape = 's32[1]{0}', space=sflag, size = 0x4, scoped, tag = 'scoped memory for tpu_custom_call.1']
    #allocation4 [shape = 's32[1]{0}', space=sflag, size = 0x4, scoped, tag = 'scoped memory for tpu_custom_call.1']
    #allocation5 [shape = 'u8[65536]{0}', space=vmem, size = 0x10000, scoped, tag = 'input window, operand 5, single buffered']
    #allocation6 [shape = 's32[1]{0}', space=sflag, size = 0x4, scoped, tag = 'scoped memory for tpu_custom_call.1']
    #allocation7 [shape = 'u8[4096]{0}', space=vmem, size = 0x1000, scoped, tag = 'output window, operand 0, single buffered']
    %12 = vsyncpa [#allocation3], 0
    %13 = vsyncpa [#allocation6], 0
    %14 = vsyncpa [#allocation4], 0
    // Predicated region
    $region2: #{tpu_custom_call.1} parent=1 // pred_check
      _
    $region3: #{tpu_custom_call.1} parent=1 // pred_check_branch
      %16 = sbr.rel (0) target = $region5
    $region4: #{tpu_custom_call.1} parent=1 // pred_region
      _
    $region5: #{tpu_custom_call.1} parent=1 // pred_fallthru
      _
    // Predicated region
    $region6: #{tpu_custom_call.1} parent=1 // pred_check
      _
    $region7: #{tpu_custom_call.1} parent=1 // pred_check_branch
      %18 = sbr.rel (0) target = $region9
    $region8: #{tpu_custom_call.1} parent=1 // pred_region
      _
    $region9: #{tpu_custom_call.1} parent=1 // pred_fallthru
      _
    // Predicated region
    $region10: #{tpu_custom_call.1} parent=1 // pred_check
      _
    $region11: #{tpu_custom_call.1} parent=1 // pred_check_branch
      %20 = sbr.rel (0) target = $region13
    $region12: #{tpu_custom_call.1} parent=1 // pred_region
      %s22 = ssub.s32 21504, 21504
      %23 = vsyncadd [#allocation3], %s22
      %s24 = sshll.u32 [#allocation2], 4
      %s25 = int_to_ptr.vmem [resolvable:$true] %s24
      %30 = dma.hbm_to_vmem [thread:$0]  %s2, 21504, %s25, [#allocation3], 384, 384, 24
    $region13: #{tpu_custom_call.1} parent=1 // pred_fallthru
      _
    // Predicated region
    $region14: #{tpu_custom_call.1} parent=1 // pred_check
      _
    $region15: #{tpu_custom_call.1} parent=1 // pred_check_branch
      %32 = sbr.rel (0) target = $region17
    $region16: #{tpu_custom_call.1} parent=1 // pred_region
      _
    $region17: #{tpu_custom_call.1} parent=1 // pred_fallthru
      _
    // Predicated region
    $region18: #{tpu_custom_call.1} parent=1 // pred_check
      _
    $region19: #{tpu_custom_call.1} parent=1 // pred_check_branch
      %34 = sbr.rel (0) target = $region21
    $region20: #{tpu_custom_call.1} parent=1 // pred_region
      _
    $region21: #{tpu_custom_call.1} parent=1 // pred_fallthru
      _
    // Predicated region
    $region22: #{tpu_custom_call.1} parent=1 // pred_check
      _
    $region23: #{tpu_custom_call.1} parent=1 // pred_check_branch
      %36 = sbr.rel (0) target = $region25
    $region24: #{tpu_custom_call.1} parent=1 // pred_region
      %s38 = ssub.s32 2048, 2048
      %39 = vsyncadd [#allocation6], %s38
      %s40 = sshll.u32 [#allocation5], 4
      %s41 = int_to_ptr.vmem [resolvable:$true] %s40
      %46 = dma.hbm_to_vmem [thread:$0]  %s5, 2048, %s41, [#allocation6], 128, 128, 8
    $region25: #{tpu_custom_call.1} parent=1 // pred_fallthru
      _
    // Predicated region
    $region26: #{tpu_custom_call.1} parent=1 // pred_check
      _
    $region27: #{tpu_custom_call.1} parent=1 // pred_check_branch
      %48 = sbr.rel (0) target = $region29
    $region28: #{tpu_custom_call.1} parent=1 // pred_region
      _
    $region29: #{tpu_custom_call.1} parent=1 // pred_fallthru
      _
    // Predicated region
    $region30: #{tpu_custom_call.1} parent=1 // pred_check
      _
    $region31: #{tpu_custom_call.1} parent=1 // pred_check_branch
      %50 = sbr.rel (0) target = $region33
    $region32: #{tpu_custom_call.1} parent=1 // pred_region
      %51 = dma.done [#allocation3], 21504
    $region33: #{tpu_custom_call.1} parent=1 // pred_fallthru
      _
    // Predicated region
    $region34: #{tpu_custom_call.1} parent=1 // pred_check
      _
    $region35: #{tpu_custom_call.1} parent=1 // pred_check_branch
      %53 = sbr.rel (0) target = $region37
    $region36: #{tpu_custom_call.1} parent=1 // pred_region
      %54 = dma.done [#allocation6], 2048
    $region37: #{tpu_custom_call.1} parent=1 // pred_fallthru
      _
    %v55 = vld [vmem:[%s0] sm:$0xff]
    %v56 = vld [vmem:[%s0 + $0x8] sm:$0xff]
    %v57 = vld [vmem:[%s0 + $0x18] sm:$0xff]
    %v58 = vld [vmem:[%s0 + $0x20] sm:$0xff]
    %v59 = vld [vmem:[%s0 + $0x30] sm:$0xff]
    %v60 = vld [vmem:[%s0 + $0x38] sm:$0xff]
    %v61 = vld [vmem:[%s0 + $0x48] sm:$0xff]
    %v62 = vld [vmem:[%s0 + $0x50] sm:$0xff]
    %v63 = vld [vmem:[%s0 + $0x60] sm:$0xff]
    %v64 = vld [vmem:[%s0 + $0x68] sm:$0xff]
    %v65 = vld [vmem:[%s0 + $0x78] sm:$0xff]
    %v66 = vld [vmem:[%s0 + $0x80] sm:$0xff]
    %v67 = vld [vmem:[%s0 + $0x90] sm:$0xff]
    %v68 = vld [vmem:[%s0 + $0x98] sm:$0xff]
    %v69 = vld [vmem:[%s0 + $0xa8] sm:$0xff]
    %v70 = vld [vmem:[%s0 + $0xb0] sm:$0xff]
    %v71 = vld [vmem:[#allocation2] sm:$0xff]
    %v72 = vld [vmem:[#allocation2 + $0x8] sm:$0xff]
    %v73 = vld [vmem:[#allocation2 + $0x10] sm:$0xff]
    %v74 = vld [vmem:[#allocation2 + $0x18] sm:$0xff]
    %v75 = vld [vmem:[#allocation2 + $0x20] sm:$0xff]
    %v76 = vld [vmem:[#allocation2 + $0x28] sm:$0xff]
    %v77 = vld [vmem:[#allocation2 + $0x30] sm:$0xff]
    %v78 = vld [vmem:[#allocation2 + $0x38] sm:$0xff]
    %v79 = vld [vmem:[#allocation2 + $0x40] sm:$0xff]
    %v80 = vld [vmem:[#allocation2 + $0x48] sm:$0xff]
    %v81 = vld [vmem:[#allocation2 + $0x50] sm:$0xff]
    %v82 = vld [vmem:[#allocation2 + $0x58] sm:$0xff]
    %v83 = vld [vmem:[#allocation2 + $0x60] sm:$0xff]
    %v84 = vld [vmem:[#allocation2 + $0x68] sm:$0xff]
    %v85 = vld [vmem:[#allocation2 + $0x70] sm:$0xff]
    %v86 = vld [vmem:[#allocation2 + $0x78] sm:$0xff]
    %v87 = vld [vmem:[#allocation2 + $0x80] sm:$0xff]
    %v88 = vld [vmem:[#allocation2 + $0x88] sm:$0xff]
    %v89 = vld [vmem:[#allocation2 + $0x90] sm:$0xff]
    %v90 = vld [vmem:[#allocation2 + $0x98] sm:$0xff]
    %v91 = vld [vmem:[#allocation2 + $0xa0] sm:$0xff]
    %v92 = vld [vmem:[#allocation2 + $0xa8] sm:$0xff]
    %v93 = vld [vmem:[#allocation2 + $0xb0] sm:$0xff]
    %v94 = vld [vmem:[#allocation2 + $0xb8] sm:$0xff]
    %v95 = vld [vmem:[%s0 + $0x1] sm:$0xff]
    %v96 = vld [vmem:[%s0 + $0x9] sm:$0xff]
    %v97 = vld [vmem:[%s0 + $0x19] sm:$0xff]
    %v98 = vld [vmem:[%s0 + $0x21] sm:$0xff]
    %v99 = vld [vmem:[%s0 + $0x31] sm:$0xff]
    %v100 = vld [vmem:[%s0 + $0x39] sm:$0xff]
    %v101 = vld [vmem:[%s0 + $0x49] sm:$0xff]
    %v102 = vld [vmem:[%s0 + $0x51] sm:$0xff]
    %v103 = vld [vmem:[%s0 + $0x61] sm:$0xff]
    %v104 = vld [vmem:[%s0 + $0x69] sm:$0xff]
    %v105 = vld [vmem:[%s0 + $0x79] sm:$0xff]
    %v106 = vld [vmem:[%s0 + $0x81] sm:$0xff]
    %v107 = vld [vmem:[%s0 + $0x91] sm:$0xff]
    %v108 = vld [vmem:[%s0 + $0x99] sm:$0xff]
    %v109 = vld [vmem:[%s0 + $0xa9] sm:$0xff]
    %v110 = vld [vmem:[%s0 + $0xb1] sm:$0xff]
    %s111 = scalar_lea.vmem [#allocation2], 192
    %v112 = vld [vmem:[%s111] sm:$0xff]
    %v113 = vld [vmem:[%s111 + $0x8] sm:$0xff]
    %v114 = vld [vmem:[%s111 + $0x10] sm:$0xff]
    %v115 = vld [vmem:[%s111 + $0x18] sm:$0xff]
    %v116 = vld [vmem:[%s111 + $0x20] sm:$0xff]
    %v117 = vld [vmem:[%s111 + $0x28] sm:$0xff]
    %v118 = vld [vmem:[%s111 + $0x30] sm:$0xff]
    %v119 = vld [vmem:[%s111 + $0x38] sm:$0xff]
    %v120 = vld [vmem:[%s111 + $0x40] sm:$0xff]
    %v121 = vld [vmem:[%s111 + $0x48] sm:$0xff]
    %v122 = vld [vmem:[%s111 + $0x50] sm:$0xff]
    %v123 = vld [vmem:[%s111 + $0x58] sm:$0xff]
    %v124 = vld [vmem:[%s111 + $0x60] sm:$0xff]
    %v125 = vld [vmem:[%s111 + $0x68] sm:$0xff]
    %v126 = vld [vmem:[%s111 + $0x70] sm:$0xff]
    %v127 = vld [vmem:[%s111 + $0x78] sm:$0xff]
    %v128 = vld [vmem:[%s111 + $0x80] sm:$0xff]
    %v129 = vld [vmem:[%s111 + $0x88] sm:$0xff]
    %v130 = vld [vmem:[%s111 + $0x90] sm:$0xff]
    %v131 = vld [vmem:[%s111 + $0x98] sm:$0xff]
    %v132 = vld [vmem:[%s111 + $0xa0] sm:$0xff]
    %v133 = vld [vmem:[%s111 + $0xa8] sm:$0xff]
    %v134 = vld [vmem:[%s111 + $0xb0] sm:$0xff]
    %v135 = vld [vmem:[%s111 + $0xb8] sm:$0xff]
    %vm136 = vcmask 523264
    %v138 = vsel %vm136, %v95, 0
    %v141 = vsel %vm136, %v96, 0
    %v144 = vsel %vm136, %v97, 0
    %v147 = vsel %vm136, %v98, 0
    %v150 = vsel %vm136, %v99, 0
    %v153 = vsel %vm136, %v100, 0
    %v156 = vsel %vm136, %v101, 0
    %v159 = vsel %vm136, %v102, 0
    %v162 = vsel %vm136, %v103, 0
    %v165 = vsel %vm136, %v104, 0
    %v168 = vsel %vm136, %v105, 0
    %v171 = vsel %vm136, %v106, 0
    %v174 = vsel %vm136, %v107, 0
    %v177 = vsel %vm136, %v108, 0
    %v180 = vsel %vm136, %v109, 0
    %v183 = vsel %vm136, %v110, 0
    %185 = vmatprep.subr.mxu0 0.0
    %186 = vmatpush1.msra.mxu0 0.0
    %187 = vmatprep.subr.mxu0 0.0
    %188 = vmatpush1.msra.mxu0 0.0
    %189 = vmatprep.subr.mxu0 0.0
    %190 = vmatpush1.msra.mxu0 0.0
    %191 = vmatprep.subr.mxu0 0.0
    %192 = vmatpush1.msra.mxu0 0.0
    %193 = vmatprep.subr.mxu0 0.0
    %194 = vmatpush1.msra.mxu0 0.0
    %195 = vmatprep.subr.mxu0 0.0
    %196 = vmatpush1.msra.mxu0 0.0
    %197 = vmatprep.subr.mxu0 0.0
    %198 = vmatpush1.msra.mxu0 0.0
    %199 = vmatprep.subr.mxu0 0.0
    %200 = vmatpush1.msra.mxu0 0.0
    %201 = vmatprep.subr.mxu0 %v134
    %202 = vmatpush1.msra.mxu0 %v133
    %203 = vmatprep.subr.mxu0 %v131
    %204 = vmatpush1.msra.mxu0 %v130
    %205 = vmatprep.subr.mxu0 %v128
    %206 = vmatpush1.msra.mxu0 %v127
    %207 = vmatprep.subr.mxu0 %v125
    %208 = vmatpush1.msra.mxu0 %v124
    %209 = vmatprep.subr.mxu0 %v122
    %210 = vmatpush1.msra.mxu0 %v121
    %211 = vmatprep.subr.mxu0 %v119
    %212 = vmatpush1.msra.mxu0 %v118
    %213 = vmatprep.subr.mxu0 %v116
    %214 = vmatpush1.msra.mxu0 %v115
    %215 = vmatprep.subr.mxu0 %v113
    %216 = vmatpush1.msra.mxu0 %v112
    %217 = vmatprep.subr.mxu0 0.0
    %218 = vmatpush2.msra.mxu0 0.0
    %219 = vmatprep.subr.mxu0 0.0
    %220 = vmatpush2.msra.mxu0 0.0
    %221 = vmatprep.subr.mxu0 0.0
    %222 = vmatpush2.msra.mxu0 0.0
    %223 = vmatprep.subr.mxu0 0.0
    %224 = vmatpush2.msra.mxu0 0.0
    %225 = vmatprep.subr.mxu0 0.0
    %226 = vmatpush2.msra.mxu0 0.0
    %227 = vmatprep.subr.mxu0 0.0
    %228 = vmatpush2.msra.mxu0 0.0
    %229 = vmatprep.subr.mxu0 0.0
    %230 = vmatpush2.msra.mxu0 0.0
    %231 = vmatprep.subr.mxu0 0.0
    %232 = vmatpush2.msra.mxu0 0.0
    %233 = vmatprep.subr.mxu0 0.0
    %234 = vmatpush2.msra.mxu0 0.0
    %235 = vmatprep.subr.mxu0 0.0
    %236 = vmatpush2.msra.mxu0 0.0
    %237 = vmatprep.subr.mxu0 0.0
    %238 = vmatpush2.msra.mxu0 0.0
    %239 = vmatprep.subr.mxu0 0.0
    %240 = vmatpush2.msra.mxu0 0.0
    %241 = vmatprep.subr.mxu0 0.0
    %242 = vmatpush2.msra.mxu0 0.0
    %243 = vmatprep.subr.mxu0 0.0
    %244 = vmatpush2.msra.mxu0 0.0
    %245 = vmatprep.subr.mxu0 0.0
    %246 = vmatpush2.msra.mxu0 0.0
    %247 = vmatprep.subr.mxu0 0.0
    %248 = vmatpush2.msra.mxu0 0.0
    %249 = vmatprep.mubr.f32.mxu0 0.0
    %250 = vmatmul.mubr.f32.gmra.mxu0 %v138
    %v251 = vpop.f32.mrf.mxu0
    %v252 = vadd.f32 0.0, %v251
    %v253 = vpop.f32.mrf.mxu0
    %v254 = vadd.f32 0.0, %v253
    %255 = vmatprep.mubr.f32.mxu0 0.0
    %256 = vmatmul.mubr.f32.gmra.mxu0 %v141
    %v257 = vpop.f32.mrf.mxu0
    %v258 = vadd.f32 0.0, %v257
    %v259 = vpop.f32.mrf.mxu0
    %v260 = vadd.f32 0.0, %v259
    %261 = vmatprep.mubr.f32.mxu0 0.0
    %262 = vmatmul.mubr.f32.gmra.mxu0 %v144
    %v263 = vpop.f32.mrf.mxu0
    %v264 = vadd.f32 0.0, %v263
    %v265 = vpop.f32.mrf.mxu0
    %v266 = vadd.f32 0.0, %v265
    %267 = vmatprep.mubr.f32.mxu0 0.0
    %268 = vmatmul.mubr.f32.gmra.mxu0 %v147
    %v269 = vpop.f32.mrf.mxu0
    %v270 = vadd.f32 0.0, %v269
    %v271 = vpop.f32.mrf.mxu0
    %v272 = vadd.f32 0.0, %v271
    %273 = vmatprep.mubr.f32.mxu0 0.0
    %274 = vmatmul.mubr.f32.gmra.mxu0 %v150
    %v275 = vpop.f32.mrf.mxu0
    %v276 = vadd.f32 0.0, %v275
    %v277 = vpop.f32.mrf.mxu0
    %v278 = vadd.f32 0.0, %v277
    %279 = vmatprep.mubr.f32.mxu0 0.0
    %280 = vmatmul.mubr.f32.gmra.mxu0 %v153
    %v281 = vpop.f32.mrf.mxu0
    %v282 = vadd.f32 0.0, %v281
    %v283 = vpop.f32.mrf.mxu0
    %v284 = vadd.f32 0.0, %v283
    %285 = vmatprep.mubr.f32.mxu0 0.0
    %286 = vmatmul.mubr.f32.gmra.mxu0 %v156
    %v287 = vpop.f32.mrf.mxu0
    %v288 = vadd.f32 0.0, %v287
    %v289 = vpop.f32.mrf.mxu0
    %v290 = vadd.f32 0.0, %v289
    %291 = vmatprep.mubr.f32.mxu0 0.0
    %292 = vmatmul.mubr.f32.gmra.mxu0 %v159
    %v293 = vpop.f32.mrf.mxu0
    %v294 = vadd.f32 0.0, %v293
    %v295 = vpop.f32.mrf.mxu0
    %v296 = vadd.f32 0.0, %v295
    %297 = vmatprep.mubr.f32.mxu0 0.0
    %298 = vmatmul.mubr.f32.gmra.mxu0 %v162
    %v299 = vpop.f32.mrf.mxu0
    %v300 = vadd.f32 0.0, %v299
    %v301 = vpop.f32.mrf.mxu0
    %v302 = vadd.f32 0.0, %v301
    %303 = vmatprep.mubr.f32.mxu0 0.0
    %304 = vmatmul.mubr.f32.gmra.mxu0 %v165
    %v305 = vpop.f32.mrf.mxu0
    %v306 = vadd.f32 0.0, %v305
    %v307 = vpop.f32.mrf.mxu0
    %v308 = vadd.f32 0.0, %v307
    %309 = vmatprep.mubr.f32.mxu0 0.0
    %310 = vmatmul.mubr.f32.gmra.mxu0 %v168
    %v311 = vpop.f32.mrf.mxu0
    %v312 = vadd.f32 0.0, %v311
    %v313 = vpop.f32.mrf.mxu0
    %v314 = vadd.f32 0.0, %v313
    %315 = vmatprep.mubr.f32.mxu0 0.0
    %316 = vmatmul.mubr.f32.gmra.mxu0 %v171
    %v317 = vpop.f32.mrf.mxu0
    %v318 = vadd.f32 0.0, %v317
    %v319 = vpop.f32.mrf.mxu0
    %v320 = vadd.f32 0.0, %v319
    %321 = vmatprep.mubr.f32.mxu0 0.0
    %322 = vmatmul.mubr.f32.gmra.mxu0 %v174
    %v323 = vpop.f32.mrf.mxu0
    %v324 = vadd.f32 0.0, %v323
    %v325 = vpop.f32.mrf.mxu0
    %v326 = vadd.f32 0.0, %v325
    %327 = vmatprep.mubr.f32.mxu0 0.0
    %328 = vmatmul.mubr.f32.gmra.mxu0 %v177
    %v329 = vpop.f32.mrf.mxu0
    %v330 = vadd.f32 0.0, %v329
    %v331 = vpop.f32.mrf.mxu0
    %v332 = vadd.f32 0.0, %v331
    %333 = vmatprep.mubr.f32.mxu0 0.0
    %334 = vmatmul.mubr.f32.gmra.mxu0 %v180
    %v335 = vpop.f32.mrf.mxu0
    %v336 = vadd.f32 0.0, %v335
    %v337 = vpop.f32.mrf.mxu0
    %v338 = vadd.f32 0.0, %v337
    %339 = vmatprep.mubr.f32.mxu0 0.0
    %340 = vmatmul.mubr.f32.gmra.mxu0 %v183
    %v341 = vpop.f32.mrf.mxu0
    %v342 = vadd.f32 0.0, %v341
    %v343 = vpop.f32.mrf.mxu0
    %v344 = vadd.f32 0.0, %v343
    %345 = vdwg.mxu0
    %346 = vmatprep.subr.mxu0 0.0
    %347 = vmatpush1.msra.mxu0 0.0
    %348 = vmatprep.subr.mxu0 0.0
    %349 = vmatpush1.msra.mxu0 0.0
    %350 = vmatprep.subr.mxu0 0.0
    %351 = vmatpush1.msra.mxu0 0.0
    %352 = vmatprep.subr.mxu0 0.0
    %353 = vmatpush1.msra.mxu0 0.0
    %354 = vmatprep.subr.mxu0 0.0
    %355 = vmatpush1.msra.mxu0 0.0
    %356 = vmatprep.subr.mxu0 0.0
    %357 = vmatpush1.msra.mxu0 0.0
    %358 = vmatprep.subr.mxu0 0.0
    %359 = vmatpush1.msra.mxu0 0.0
    %360 = vmatprep.subr.mxu0 0.0
    %361 = vmatpush1.msra.mxu0 0.0
    %362 = vmatprep.subr.mxu0 0.0
    %363 = vmatpush1.msra.mxu0 %v135
    %364 = vmatprep.subr.mxu0 0.0
    %365 = vmatpush1.msra.mxu0 %v132
    %366 = vmatprep.subr.mxu0 0.0
    %367 = vmatpush1.msra.mxu0 %v129
    %368 = vmatprep.subr.mxu0 0.0
    %369 = vmatpush1.msra.mxu0 %v126
    %370 = vmatprep.subr.mxu0 0.0
    %371 = vmatpush1.msra.mxu0 %v123
    %372 = vmatprep.subr.mxu0 0.0
    %373 = vmatpush1.msra.mxu0 %v120
    %374 = vmatprep.subr.mxu0 0.0
    %375 = vmatpush1.msra.mxu0 %v117
    %376 = vmatprep.subr.mxu0 0.0
    %377 = vmatpush1.msra.mxu0 %v114
    %378 = vmatprep.subr.mxu0 0.0
    %379 = vmatpush2.msra.mxu0 0.0
    %380 = vmatprep.subr.mxu0 0.0
    %381 = vmatpush2.msra.mxu0 0.0
    %382 = vmatprep.subr.mxu0 0.0
    %383 = vmatpush2.msra.mxu0 0.0
    %384 = vmatprep.subr.mxu0 0.0
    %385 = vmatpush2.msra.mxu0 0.0
    %386 = vmatprep.subr.mxu0 0.0
    %387 = vmatpush2.msra.mxu0 0.0
    %388 = vmatprep.subr.mxu0 0.0
    %389 = vmatpush2.msra.mxu0 0.0
    %390 = vmatprep.subr.mxu0 0.0
    %391 = vmatpush2.msra.mxu0 0.0
    %392 = vmatprep.subr.mxu0 0.0
    %393 = vmatpush2.msra.mxu0 0.0
    %394 = vmatprep.subr.mxu0 0.0
    %395 = vmatpush2.msra.mxu0 0.0
    %396 = vmatprep.subr.mxu0 0.0
    %397 = vmatpush2.msra.mxu0 0.0
    %398 = vmatprep.subr.mxu0 0.0
    %399 = vmatpush2.msra.mxu0 0.0
    %400 = vmatprep.subr.mxu0 0.0
    %401 = vmatpush2.msra.mxu0 0.0
    %402 = vmatprep.subr.mxu0 0.0
    %403 = vmatpush2.msra.mxu0 0.0
    %404 = vmatprep.subr.mxu0 0.0
    %405 = vmatpush2.msra.mxu0 0.0
    %406 = vmatprep.subr.mxu0 0.0
    %407 = vmatpush2.msra.mxu0 0.0
    %408 = vmatprep.subr.mxu0 0.0
    %409 = vmatpush2.msra.mxu0 0.0
    %410 = vmatprep.mubr.f32.mxu0 0.0
    %411 = vmatmul.mubr.f32.gmra.mxu0 %v138
    %v412 = vpop.f32.mrf.mxu0
    %v413 = vadd.f32 0.0, %v412
    %v414 = vpop.f32.mrf.mxu0
    %415 = vmatprep.mubr.f32.mxu0 0.0
    %416 = vmatmul.mubr.f32.gmra.mxu0 %v141
    %v417 = vpop.f32.mrf.mxu0
    %v418 = vadd.f32 0.0, %v417
    %v419 = vpop.f32.mrf.mxu0
    %420 = vmatprep.mubr.f32.mxu0 0.0
    %421 = vmatmul.mubr.f32.gmra.mxu0 %v144
    %v422 = vpop.f32.mrf.mxu0
    %v423 = vadd.f32 0.0, %v422
    %v424 = vpop.f32.mrf.mxu0
    %425 = vmatprep.mubr.f32.mxu0 0.0
    %426 = vmatmul.mubr.f32.gmra.mxu0 %v147
    %v427 = vpop.f32.mrf.mxu0
    %v428 = vadd.f32 0.0, %v427
    %v429 = vpop.f32.mrf.mxu0
    %430 = vmatprep.mubr.f32.mxu0 0.0
    %431 = vmatmul.mubr.f32.gmra.mxu0 %v150
    %v432 = vpop.f32.mrf.mxu0
    %v433 = vadd.f32 0.0, %v432
    %v434 = vpop.f32.mrf.mxu0
    %435 = vmatprep.mubr.f32.mxu0 0.0
    %436 = vmatmul.mubr.f32.gmra.mxu0 %v153
    %v437 = vpop.f32.mrf.mxu0
    %v438 = vadd.f32 0.0, %v437
    %v439 = vpop.f32.mrf.mxu0
    %440 = vmatprep.mubr.f32.mxu0 0.0
    %441 = vmatmul.mubr.f32.gmra.mxu0 %v156
    %v442 = vpop.f32.mrf.mxu0
    %v443 = vadd.f32 0.0, %v442
    %v444 = vpop.f32.mrf.mxu0
    %445 = vmatprep.mubr.f32.mxu0 0.0
    %446 = vmatmul.mubr.f32.gmra.mxu0 %v159
    %v447 = vpop.f32.mrf.mxu0
    %v448 = vadd.f32 0.0, %v447
    %v449 = vpop.f32.mrf.mxu0
    %450 = vmatprep.mubr.f32.mxu0 0.0
    %451 = vmatmul.mubr.f32.gmra.mxu0 %v162
    %v452 = vpop.f32.mrf.mxu0
    %v453 = vadd.f32 0.0, %v452
    %v454 = vpop.f32.mrf.mxu0
    %455 = vmatprep.mubr.f32.mxu0 0.0
    %456 = vmatmul.mubr.f32.gmra.mxu0 %v165
    %v457 = vpop.f32.mrf.mxu0
    %v458 = vadd.f32 0.0, %v457
    %v459 = vpop.f32.mrf.mxu0
    %460 = vmatprep.mubr.f32.mxu0 0.0
    %461 = vmatmul.mubr.f32.gmra.mxu0 %v168
    %v462 = vpop.f32.mrf.mxu0
    %v463 = vadd.f32 0.0, %v462
    %v464 = vpop.f32.mrf.mxu0
    %465 = vmatprep.mubr.f32.mxu0 0.0
    %466 = vmatmul.mubr.f32.gmra.mxu0 %v171
    %v467 = vpop.f32.mrf.mxu0
    %v468 = vadd.f32 0.0, %v467
    %v469 = vpop.f32.mrf.mxu0
    %470 = vmatprep.mubr.f32.mxu0 0.0
    %471 = vmatmul.mubr.f32.gmra.mxu0 %v174
    %v472 = vpop.f32.mrf.mxu0
    %v473 = vadd.f32 0.0, %v472
    %v474 = vpop.f32.mrf.mxu0
    %475 = vmatprep.mubr.f32.mxu0 0.0
    %476 = vmatmul.mubr.f32.gmra.mxu0 %v177
    %v477 = vpop.f32.mrf.mxu0
    %v478 = vadd.f32 0.0, %v477
    %v479 = vpop.f32.mrf.mxu0
    %480 = vmatprep.mubr.f32.mxu0 0.0
    %481 = vmatmul.mubr.f32.gmra.mxu0 %v180
    %v482 = vpop.f32.mrf.mxu0
    %v483 = vadd.f32 0.0, %v482
    %v484 = vpop.f32.mrf.mxu0
    %485 = vmatprep.mubr.f32.mxu0 0.0
    %486 = vmatmul.mubr.f32.gmra.mxu0 %v183
    %v487 = vpop.f32.mrf.mxu0
    %v488 = vadd.f32 0.0, %v487
    %v489 = vpop.f32.mrf.mxu0
    %490 = vdwg.mxu0
    %v492 = vsel %vm136, %v55, 0
    %v495 = vsel %vm136, %v56, 0
    %v498 = vsel %vm136, %v57, 0
    %v501 = vsel %vm136, %v58, 0
    %v504 = vsel %vm136, %v59, 0
    %v507 = vsel %vm136, %v60, 0
    %v510 = vsel %vm136, %v61, 0
    %v513 = vsel %vm136, %v62, 0
    %v516 = vsel %vm136, %v63, 0
    %v519 = vsel %vm136, %v64, 0
    %v522 = vsel %vm136, %v65, 0
    %v525 = vsel %vm136, %v66, 0
    %v528 = vsel %vm136, %v67, 0
    %v531 = vsel %vm136, %v68, 0
    %v534 = vsel %vm136, %v69, 0
    %v537 = vsel %vm136, %v70, 0
    %539 = vmatprep.subr.mxu0 0.0
    %540 = vmatpush1.msra.mxu0 0.0
    %541 = vmatprep.subr.mxu0 0.0
    %542 = vmatpush1.msra.mxu0 0.0
    %543 = vmatprep.subr.mxu0 0.0
    %544 = vmatpush1.msra.mxu0 0.0
    %545 = vmatprep.subr.mxu0 0.0
    %546 = vmatpush1.msra.mxu0 0.0
    %547 = vmatprep.subr.mxu0 0.0
    %548 = vmatpush1.msra.mxu0 0.0
    %549 = vmatprep.subr.mxu0 0.0
    %550 = vmatpush1.msra.mxu0 0.0
    %551 = vmatprep.subr.mxu0 0.0
    %552 = vmatpush1.msra.mxu0 0.0
    %553 = vmatprep.subr.mxu0 0.0
    %554 = vmatpush1.msra.mxu0 0.0
    %555 = vmatprep.subr.mxu0 %v93
    %556 = vmatpush1.msra.mxu0 %v92
    %557 = vmatprep.subr.mxu0 %v90
    %558 = vmatpush1.msra.mxu0 %v89
    %559 = vmatprep.subr.mxu0 %v87
    %560 = vmatpush1.msra.mxu0 %v86
    %561 = vmatprep.subr.mxu0 %v84
    %562 = vmatpush1.msra.mxu0 %v83
    %563 = vmatprep.subr.mxu0 %v81
    %564 = vmatpush1.msra.mxu0 %v80
    %565 = vmatprep.subr.mxu0 %v78
    %566 = vmatpush1.msra.mxu0 %v77
    %567 = vmatprep.subr.mxu0 %v75
    %568 = vmatpush1.msra.mxu0 %v74
    %569 = vmatprep.subr.mxu0 %v72
    %570 = vmatpush1.msra.mxu0 %v71
    %571 = vmatprep.subr.mxu0 0.0
    %572 = vmatpush2.msra.mxu0 0.0
    %573 = vmatprep.subr.mxu0 0.0
    %574 = vmatpush2.msra.mxu0 0.0
    %575 = vmatprep.subr.mxu0 0.0
    %576 = vmatpush2.msra.mxu0 0.0
    %577 = vmatprep.subr.mxu0 0.0
    %578 = vmatpush2.msra.mxu0 0.0
    %579 = vmatprep.subr.mxu0 0.0
    %580 = vmatpush2.msra.mxu0 0.0
    %581 = vmatprep.subr.mxu0 0.0
    %582 = vmatpush2.msra.mxu0 0.0
    %583 = vmatprep.subr.mxu0 0.0
    %584 = vmatpush2.msra.mxu0 0.0
    %585 = vmatprep.subr.mxu0 0.0
    %586 = vmatpush2.msra.mxu0 0.0
    %587 = vmatprep.subr.mxu0 0.0
    %588 = vmatpush2.msra.mxu0 0.0
    %589 = vmatprep.subr.mxu0 0.0
    %590 = vmatpush2.msra.mxu0 0.0
    %591 = vmatprep.subr.mxu0 0.0
    %592 = vmatpush2.msra.mxu0 0.0
    %593 = vmatprep.subr.mxu0 0.0
    %594 = vmatpush2.msra.mxu0 0.0
    %595 = vmatprep.subr.mxu0 0.0
    %596 = vmatpush2.msra.mxu0 0.0
    %597 = vmatprep.subr.mxu0 0.0
    %598 = vmatpush2.msra.mxu0 0.0
    %599 = vmatprep.subr.mxu0 0.0
    %600 = vmatpush2.msra.mxu0 0.0
    %601 = vmatprep.subr.mxu0 0.0
    %602 = vmatpush2.msra.mxu0 0.0
    %603 = vmatprep.mubr.f32.mxu0 0.0
    %604 = vmatmul.mubr.f32.gmra.mxu0 %v492
    %v605 = vpop.f32.mrf.mxu0
    %v606 = vadd.f32 %v252, %v605
    %v607 = vpop.f32.mrf.mxu0
    %v608 = vadd.f32 %v254, %v607
    %609 = vmatprep.mubr.f32.mxu0 0.0
    %610 = vmatmul.mubr.f32.gmra.mxu0 %v495
    %v611 = vpop.f32.mrf.mxu0
    %v612 = vadd.f32 %v258, %v611
    %v613 = vpop.f32.mrf.mxu0
    %v614 = vadd.f32 %v260, %v613
    %615 = vmatprep.mubr.f32.mxu0 0.0
    %616 = vmatmul.mubr.f32.gmra.mxu0 %v498
    %v617 = vpop.f32.mrf.mxu0
    %v618 = vadd.f32 %v264, %v617
    %v619 = vpop.f32.mrf.mxu0
    %v620 = vadd.f32 %v266, %v619
    %621 = vmatprep.mubr.f32.mxu0 0.0
    %622 = vmatmul.mubr.f32.gmra.mxu0 %v501
    %v623 = vpop.f32.mrf.mxu0
    %v624 = vadd.f32 %v270, %v623
    %v625 = vpop.f32.mrf.mxu0
    %v626 = vadd.f32 %v272, %v625
    %627 = vmatprep.mubr.f32.mxu0 0.0
    %628 = vmatmul.mubr.f32.gmra.mxu0 %v504
    %v629 = vpop.f32.mrf.mxu0
    %v630 = vadd.f32 %v276, %v629
    %v631 = vpop.f32.mrf.mxu0
    %v632 = vadd.f32 %v278, %v631
    %633 = vmatprep.mubr.f32.mxu0 0.0
    %634 = vmatmul.mubr.f32.gmra.mxu0 %v507
    %v635 = vpop.f32.mrf.mxu0
    %v636 = vadd.f32 %v282, %v635
    %v637 = vpop.f32.mrf.mxu0
    %v638 = vadd.f32 %v284, %v637
    %639 = vmatprep.mubr.f32.mxu0 0.0
    %640 = vmatmul.mubr.f32.gmra.mxu0 %v510
    %v641 = vpop.f32.mrf.mxu0
    %v642 = vadd.f32 %v288, %v641
    %v643 = vpop.f32.mrf.mxu0
    %v644 = vadd.f32 %v290, %v643
    %645 = vmatprep.mubr.f32.mxu0 0.0
    %646 = vmatmul.mubr.f32.gmra.mxu0 %v513
    %v647 = vpop.f32.mrf.mxu0
    %v648 = vadd.f32 %v294, %v647
    %v649 = vpop.f32.mrf.mxu0
    %v650 = vadd.f32 %v296, %v649
    %651 = vmatprep.mubr.f32.mxu0 0.0
    %652 = vmatmul.mubr.f32.gmra.mxu0 %v516
    %v653 = vpop.f32.mrf.mxu0
    %v654 = vadd.f32 %v300, %v653
    %v655 = vpop.f32.mrf.mxu0
    %v656 = vadd.f32 %v302, %v655
    %657 = vmatprep.mubr.f32.mxu0 0.0
    %658 = vmatmul.mubr.f32.gmra.mxu0 %v519
    %v659 = vpop.f32.mrf.mxu0
    %v660 = vadd.f32 %v306, %v659
    %v661 = vpop.f32.mrf.mxu0
    %v662 = vadd.f32 %v308, %v661
    %663 = vmatprep.mubr.f32.mxu0 0.0
    %664 = vmatmul.mubr.f32.gmra.mxu0 %v522
    %v665 = vpop.f32.mrf.mxu0
    %v666 = vadd.f32 %v312, %v665
    %v667 = vpop.f32.mrf.mxu0
    %v668 = vadd.f32 %v314, %v667
    %669 = vmatprep.mubr.f32.mxu0 0.0
    %670 = vmatmul.mubr.f32.gmra.mxu0 %v525
    %v671 = vpop.f32.mrf.mxu0
    %v672 = vadd.f32 %v318, %v671
    %v673 = vpop.f32.mrf.mxu0
    %v674 = vadd.f32 %v320, %v673
    %675 = vmatprep.mubr.f32.mxu0 0.0
    %676 = vmatmul.mubr.f32.gmra.mxu0 %v528
    %v677 = vpop.f32.mrf.mxu0
    %v678 = vadd.f32 %v324, %v677
    %v679 = vpop.f32.mrf.mxu0
    %v680 = vadd.f32 %v326, %v679
    %681 = vmatprep.mubr.f32.mxu0 0.0
    %682 = vmatmul.mubr.f32.gmra.mxu0 %v531
    %v683 = vpop.f32.mrf.mxu0
    %v684 = vadd.f32 %v330, %v683
    %v685 = vpop.f32.mrf.mxu0
    %v686 = vadd.f32 %v332, %v685
    %687 = vmatprep.mubr.f32.mxu0 0.0
    %688 = vmatmul.mubr.f32.gmra.mxu0 %v534
    %v689 = vpop.f32.mrf.mxu0
    %v690 = vadd.f32 %v336, %v689
    %v691 = vpop.f32.mrf.mxu0
    %v692 = vadd.f32 %v338, %v691
    %693 = vmatprep.mubr.f32.mxu0 0.0
    %694 = vmatmul.mubr.f32.gmra.mxu0 %v537
    %v695 = vpop.f32.mrf.mxu0
    %v696 = vadd.f32 %v342, %v695
    %v697 = vpop.f32.mrf.mxu0
    %v698 = vadd.f32 %v344, %v697
    %699 = vdwg.mxu0
    %700 = vmatprep.subr.mxu0 0.0
    %701 = vmatpush1.msra.mxu0 0.0
    %702 = vmatprep.subr.mxu0 0.0
    %703 = vmatpush1.msra.mxu0 0.0
    %704 = vmatprep.subr.mxu0 0.0
    %705 = vmatpush1.msra.mxu0 0.0
    %706 = vmatprep.subr.mxu0 0.0
    %707 = vmatpush1.msra.mxu0 0.0
    %708 = vmatprep.subr.mxu0 0.0
    %709 = vmatpush1.msra.mxu0 0.0
    %710 = vmatprep.subr.mxu0 0.0
    %711 = vmatpush1.msra.mxu0 0.0
    %712 = vmatprep.subr.mxu0 0.0
    %713 = vmatpush1.msra.mxu0 0.0
    %714 = vmatprep.subr.mxu0 0.0
    %715 = vmatpush1.msra.mxu0 0.0
    %716 = vmatprep.subr.mxu0 0.0
    %717 = vmatpush1.msra.mxu0 %v94
    %718 = vmatprep.subr.mxu0 0.0
    %719 = vmatpush1.msra.mxu0 %v91
    %720 = vmatprep.subr.mxu0 0.0
    %721 = vmatpush1.msra.mxu0 %v88
    %722 = vmatprep.subr.mxu0 0.0
    %723 = vmatpush1.msra.mxu0 %v85
    %724 = vmatprep.subr.mxu0 0.0
    %725 = vmatpush1.msra.mxu0 %v82
    %726 = vmatprep.subr.mxu0 0.0
    %727 = vmatpush1.msra.mxu0 %v79
    %728 = vmatprep.subr.mxu0 0.0
    %729 = vmatpush1.msra.mxu0 %v76
    %730 = vmatprep.subr.mxu0 0.0
    %731 = vmatpush1.msra.mxu0 %v73
    %732 = vmatprep.subr.mxu0 0.0
    %733 = vmatpush2.msra.mxu0 0.0
    %734 = vmatprep.subr.mxu0 0.0
    %735 = vmatpush2.msra.mxu0 0.0
    %736 = vmatprep.subr.mxu0 0.0
    %737 = vmatpush2.msra.mxu0 0.0
    %738 = vmatprep.subr.mxu0 0.0
    %739 = vmatpush2.msra.mxu0 0.0
    %740 = vmatprep.subr.mxu0 0.0
    %741 = vmatpush2.msra.mxu0 0.0
    %742 = vmatprep.subr.mxu0 0.0
    %743 = vmatpush2.msra.mxu0 0.0
    %744 = vmatprep.subr.mxu0 0.0
    %745 = vmatpush2.msra.mxu0 0.0
    %746 = vmatprep.subr.mxu0 0.0
    %747 = vmatpush2.msra.mxu0 0.0
    %748 = vmatprep.subr.mxu0 0.0
    %749 = vmatpush2.msra.mxu0 0.0
    %750 = vmatprep.subr.mxu0 0.0
    %751 = vmatpush2.msra.mxu0 0.0
    %752 = vmatprep.subr.mxu0 0.0
    %753 = vmatpush2.msra.mxu0 0.0
    %754 = vmatprep.subr.mxu0 0.0
    %755 = vmatpush2.msra.mxu0 0.0
    %756 = vmatprep.subr.mxu0 0.0
    %757 = vmatpush2.msra.mxu0 0.0
    %758 = vmatprep.subr.mxu0 0.0
    %759 = vmatpush2.msra.mxu0 0.0
    %760 = vmatprep.subr.mxu0 0.0
    %761 = vmatpush2.msra.mxu0 0.0
    %762 = vmatprep.subr.mxu0 0.0
    %763 = vmatpush2.msra.mxu0 0.0
    %764 = vmatprep.mubr.f32.mxu0 0.0
    %765 = vmatmul.mubr.f32.gmra.mxu0 %v492
    %v766 = vpop.f32.mrf.mxu0
    %v767 = vadd.f32 %v413, %v766
    %v768 = vpop.f32.mrf.mxu0
    %769 = vmatprep.mubr.f32.mxu0 0.0
    %770 = vmatmul.mubr.f32.gmra.mxu0 %v495
    %v771 = vpop.f32.mrf.mxu0
    %v772 = vadd.f32 %v418, %v771
    %v773 = vpop.f32.mrf.mxu0
    %774 = vmatprep.mubr.f32.mxu0 0.0
    %775 = vmatmul.mubr.f32.gmra.mxu0 %v498
    %v776 = vpop.f32.mrf.mxu0
    %v777 = vadd.f32 %v423, %v776
    %v778 = vpop.f32.mrf.mxu0
    %779 = vmatprep.mubr.f32.mxu0 0.0
    %780 = vmatmul.mubr.f32.gmra.mxu0 %v501
    %v781 = vpop.f32.mrf.mxu0
    %v782 = vadd.f32 %v428, %v781
    %v783 = vpop.f32.mrf.mxu0
    %784 = vmatprep.mubr.f32.mxu0 0.0
    %785 = vmatmul.mubr.f32.gmra.mxu0 %v504
    %v786 = vpop.f32.mrf.mxu0
    %v787 = vadd.f32 %v433, %v786
    %v788 = vpop.f32.mrf.mxu0
    %789 = vmatprep.mubr.f32.mxu0 0.0
    %790 = vmatmul.mubr.f32.gmra.mxu0 %v507
    %v791 = vpop.f32.mrf.mxu0
    %v792 = vadd.f32 %v438, %v791
    %v793 = vpop.f32.mrf.mxu0
    %794 = vmatprep.mubr.f32.mxu0 0.0
    %795 = vmatmul.mubr.f32.gmra.mxu0 %v510
    %v796 = vpop.f32.mrf.mxu0
    %v797 = vadd.f32 %v443, %v796
    %v798 = vpop.f32.mrf.mxu0
    %799 = vmatprep.mubr.f32.mxu0 0.0
    %800 = vmatmul.mubr.f32.gmra.mxu0 %v513
    %v801 = vpop.f32.mrf.mxu0
    %v802 = vadd.f32 %v448, %v801
    %v803 = vpop.f32.mrf.mxu0
    %804 = vmatprep.mubr.f32.mxu0 0.0
    %805 = vmatmul.mubr.f32.gmra.mxu0 %v516
    %v806 = vpop.f32.mrf.mxu0
    %v807 = vadd.f32 %v453, %v806
    %v808 = vpop.f32.mrf.mxu0
    %809 = vmatprep.mubr.f32.mxu0 0.0
    %810 = vmatmul.mubr.f32.gmra.mxu0 %v519
    %v811 = vpop.f32.mrf.mxu0
    %v812 = vadd.f32 %v458, %v811
    %v813 = vpop.f32.mrf.mxu0
    %814 = vmatprep.mubr.f32.mxu0 0.0
    %815 = vmatmul.mubr.f32.gmra.mxu0 %v522
    %v816 = vpop.f32.mrf.mxu0
    %v817 = vadd.f32 %v463, %v816
    %v818 = vpop.f32.mrf.mxu0
    %819 = vmatprep.mubr.f32.mxu0 0.0
    %820 = vmatmul.mubr.f32.gmra.mxu0 %v525
    %v821 = vpop.f32.mrf.mxu0
    %v822 = vadd.f32 %v468, %v821
    %v823 = vpop.f32.mrf.mxu0
    %824 = vmatprep.mubr.f32.mxu0 0.0
    %825 = vmatmul.mubr.f32.gmra.mxu0 %v528
    %v826 = vpop.f32.mrf.mxu0
    %v827 = vadd.f32 %v473, %v826
    %v828 = vpop.f32.mrf.mxu0
    %829 = vmatprep.mubr.f32.mxu0 0.0
    %830 = vmatmul.mubr.f32.gmra.mxu0 %v531
    %v831 = vpop.f32.mrf.mxu0
    %v832 = vadd.f32 %v478, %v831
    %v833 = vpop.f32.mrf.mxu0
    %834 = vmatprep.mubr.f32.mxu0 0.0
    %835 = vmatmul.mubr.f32.gmra.mxu0 %v534
    %v836 = vpop.f32.mrf.mxu0
    %v837 = vadd.f32 %v483, %v836
    %v838 = vpop.f32.mrf.mxu0
    %839 = vmatprep.mubr.f32.mxu0 0.0
    %840 = vmatmul.mubr.f32.gmra.mxu0 %v537
    %v841 = vpop.f32.mrf.mxu0
    %v842 = vadd.f32 %v488, %v841
    %v843 = vpop.f32.mrf.mxu0
    %844 = vdwg.mxu0
    %v845 = vld [vmem:[%s0 + $0x2] sm:$0xff]
    %v846 = vld [vmem:[%s0 + $0xa] sm:$0xff]
    %v847 = vld [vmem:[%s0 + $0x1a] sm:$0xff]
    %v848 = vld [vmem:[%s0 + $0x22] sm:$0xff]
    %v849 = vld [vmem:[%s0 + $0x32] sm:$0xff]
    %v850 = vld [vmem:[%s0 + $0x3a] sm:$0xff]
    %v851 = vld [vmem:[%s0 + $0x4a] sm:$0xff]
    %v852 = vld [vmem:[%s0 + $0x52] sm:$0xff]
    %v853 = vld [vmem:[%s0 + $0x62] sm:$0xff]
    %v854 = vld [vmem:[%s0 + $0x6a] sm:$0xff]
    %v855 = vld [vmem:[%s0 + $0x7a] sm:$0xff]
    %v856 = vld [vmem:[%s0 + $0x82] sm:$0xff]
    %v857 = vld [vmem:[%s0 + $0x92] sm:$0xff]
    %v858 = vld [vmem:[%s0 + $0x9a] sm:$0xff]
    %v859 = vld [vmem:[%s0 + $0xaa] sm:$0xff]
    %v860 = vld [vmem:[%s0 + $0xb2] sm:$0xff]
    %s861 = scalar_lea.vmem [#allocation2], 384
    %v862 = vld [vmem:[%s861] sm:$0xff]
    %v863 = vld [vmem:[%s861 + $0x8] sm:$0xff]
    %v864 = vld [vmem:[%s861 + $0x10] sm:$0xff]
    %v865 = vld [vmem:[%s861 + $0x18] sm:$0xff]
    %v866 = vld [vmem:[%s861 + $0x20] sm:$0xff]
    %v867 = vld [vmem:[%s861 + $0x28] sm:$0xff]
    %v868 = vld [vmem:[%s861 + $0x30] sm:$0xff]
    %v869 = vld [vmem:[%s861 + $0x38] sm:$0xff]
    %v870 = vld [vmem:[%s861 + $0x40] sm:$0xff]
    %v871 = vld [vmem:[%s861 + $0x48] sm:$0xff]
    %v872 = vld [vmem:[%s861 + $0x50] sm:$0xff]
    %v873 = vld [vmem:[%s861 + $0x58] sm:$0xff]
    %v874 = vld [vmem:[%s861 + $0x60] sm:$0xff]
    %v875 = vld [vmem:[%s861 + $0x68] sm:$0xff]
    %v876 = vld [vmem:[%s861 + $0x70] sm:$0xff]
    %v877 = vld [vmem:[%s861 + $0x78] sm:$0xff]
    %v878 = vld [vmem:[%s861 + $0x80] sm:$0xff]
    %v879 = vld [vmem:[%s861 + $0x88] sm:$0xff]
    %v880 = vld [vmem:[%s861 + $0x90] sm:$0xff]
    %v881 = vld [vmem:[%s861 + $0x98] sm:$0xff]
    %v882 = vld [vmem:[%s861 + $0xa0] sm:$0xff]
    %v883 = vld [vmem:[%s861 + $0xa8] sm:$0xff]
    %v884 = vld [vmem:[%s861 + $0xb0] sm:$0xff]
    %v885 = vld [vmem:[%s861 + $0xb8] sm:$0xff]
    %v887 = vsel %vm136, %v845, 0
    %v890 = vsel %vm136, %v846, 0
    %v893 = vsel %vm136, %v847, 0
    %v896 = vsel %vm136, %v848, 0
    %v899 = vsel %vm136, %v849, 0
    %v902 = vsel %vm136, %v850, 0
    %v905 = vsel %vm136, %v851, 0
    %v908 = vsel %vm136, %v852, 0
    %v911 = vsel %vm136, %v853, 0
    %v914 = vsel %vm136, %v854, 0
    %v917 = vsel %vm136, %v855, 0
    %v920 = vsel %vm136, %v856, 0
    %v923 = vsel %vm136, %v857, 0
    %v926 = vsel %vm136, %v858, 0
    %v929 = vsel %vm136, %v859, 0
    %v932 = vsel %vm136, %v860, 0
    %934 = vmatprep.subr.mxu0 0.0
    %935 = vmatpush1.msra.mxu0 0.0
    %936 = vmatprep.subr.mxu0 0.0
    %937 = vmatpush1.msra.mxu0 0.0
    %938 = vmatprep.subr.mxu0 0.0
    %939 = vmatpush1.msra.mxu0 0.0
    %940 = vmatprep.subr.mxu0 0.0
    %941 = vmatpush1.msra.mxu0 0.0
    %942 = vmatprep.subr.mxu0 0.0
    %943 = vmatpush1.msra.mxu0 0.0
    %944 = vmatprep.subr.mxu0 0.0
    %945 = vmatpush1.msra.mxu0 0.0
    %946 = vmatprep.subr.mxu0 0.0
    %947 = vmatpush1.msra.mxu0 0.0
    %948 = vmatprep.subr.mxu0 0.0
    %949 = vmatpush1.msra.mxu0 0.0
    %950 = vmatprep.subr.mxu0 %v884
    %951 = vmatpush1.msra.mxu0 %v883
    %952 = vmatprep.subr.mxu0 %v881
    %953 = vmatpush1.msra.mxu0 %v880
    %954 = vmatprep.subr.mxu0 %v878
    %955 = vmatpush1.msra.mxu0 %v877
    %956 = vmatprep.subr.mxu0 %v875
    %957 = vmatpush1.msra.mxu0 %v874
    %958 = vmatprep.subr.mxu0 %v872
    %959 = vmatpush1.msra.mxu0 %v871
    %960 = vmatprep.subr.mxu0 %v869
    %961 = vmatpush1.msra.mxu0 %v868
    %962 = vmatprep.subr.mxu0 %v866
    %963 = vmatpush1.msra.mxu0 %v865
    %964 = vmatprep.subr.mxu0 %v863
    %965 = vmatpush1.msra.mxu0 %v862
    %966 = vmatprep.subr.mxu0 0.0
    %967 = vmatpush2.msra.mxu0 0.0
    %968 = vmatprep.subr.mxu0 0.0
    %969 = vmatpush2.msra.mxu0 0.0
    %970 = vmatprep.subr.mxu0 0.0
    %971 = vmatpush2.msra.mxu0 0.0
    %972 = vmatprep.subr.mxu0 0.0
    %973 = vmatpush2.msra.mxu0 0.0
    %974 = vmatprep.subr.mxu0 0.0
    %975 = vmatpush2.msra.mxu0 0.0
    %976 = vmatprep.subr.mxu0 0.0
    %977 = vmatpush2.msra.mxu0 0.0
    %978 = vmatprep.subr.mxu0 0.0
    %979 = vmatpush2.msra.mxu0 0.0
    %980 = vmatprep.subr.mxu0 0.0
    %981 = vmatpush2.msra.mxu0 0.0
    %982 = vmatprep.subr.mxu0 0.0
    %983 = vmatpush2.msra.mxu0 0.0
    %984 = vmatprep.subr.mxu0 0.0
    %985 = vmatpush2.msra.mxu0 0.0
    %986 = vmatprep.subr.mxu0 0.0
    %987 = vmatpush2.msra.mxu0 0.0
    %988 = vmatprep.subr.mxu0 0.0
    %989 = vmatpush2.msra.mxu0 0.0
    %990 = vmatprep.subr.mxu0 0.0
    %991 = vmatpush2.msra.mxu0 0.0
    %992 = vmatprep.subr.mxu0 0.0
    %993 = vmatpush2.msra.mxu0 0.0
    %994 = vmatprep.subr.mxu0 0.0
    %995 = vmatpush2.msra.mxu0 0.0
    %996 = vmatprep.subr.mxu0 0.0
    %997 = vmatpush2.msra.mxu0 0.0
    %998 = vmatprep.mubr.f32.mxu0 0.0
    %999 = vmatmul.mubr.f32.gmra.mxu0 %v887
    %v1000 = vpop.f32.mrf.mxu0
    %v1001 = vadd.f32 0.0, %v1000
    %v1002 = vpop.f32.mrf.mxu0
    %v1003 = vadd.f32 0.0, %v1002
    %1004 = vmatprep.mubr.f32.mxu0 0.0
    %1005 = vmatmul.mubr.f32.gmra.mxu0 %v890
    %v1006 = vpop.f32.mrf.mxu0
    %v1007 = vadd.f32 0.0, %v1006
    %v1008 = vpop.f32.mrf.mxu0
    %v1009 = vadd.f32 0.0, %v1008
    %1010 = vmatprep.mubr.f32.mxu0 0.0
    %1011 = vmatmul.mubr.f32.gmra.mxu0 %v893
    %v1012 = vpop.f32.mrf.mxu0
    %v1013 = vadd.f32 0.0, %v1012
    %v1014 = vpop.f32.mrf.mxu0
    %v1015 = vadd.f32 0.0, %v1014
    %1016 = vmatprep.mubr.f32.mxu0 0.0
    %1017 = vmatmul.mubr.f32.gmra.mxu0 %v896
    %v1018 = vpop.f32.mrf.mxu0
    %v1019 = vadd.f32 0.0, %v1018
    %v1020 = vpop.f32.mrf.mxu0
    %v1021 = vadd.f32 0.0, %v1020
    %1022 = vmatprep.mubr.f32.mxu0 0.0
    %1023 = vmatmul.mubr.f32.gmra.mxu0 %v899
    %v1024 = vpop.f32.mrf.mxu0
    %v1025 = vadd.f32 0.0, %v1024
    %v1026 = vpop.f32.mrf.mxu0
    %v1027 = vadd.f32 0.0, %v1026
    %1028 = vmatprep.mubr.f32.mxu0 0.0
    %1029 = vmatmul.mubr.f32.gmra.mxu0 %v902
    %v1030 = vpop.f32.mrf.mxu0
    %v1031 = vadd.f32 0.0, %v1030
    %v1032 = vpop.f32.mrf.mxu0
    %v1033 = vadd.f32 0.0, %v1032
    %1034 = vmatprep.mubr.f32.mxu0 0.0
    %1035 = vmatmul.mubr.f32.gmra.mxu0 %v905
    %v1036 = vpop.f32.mrf.mxu0
    %v1037 = vadd.f32 0.0, %v1036
    %v1038 = vpop.f32.mrf.mxu0
    %v1039 = vadd.f32 0.0, %v1038
    %1040 = vmatprep.mubr.f32.mxu0 0.0
    %1041 = vmatmul.mubr.f32.gmra.mxu0 %v908
    %v1042 = vpop.f32.mrf.mxu0
    %v1043 = vadd.f32 0.0, %v1042
    %v1044 = vpop.f32.mrf.mxu0
    %v1045 = vadd.f32 0.0, %v1044
    %1046 = vmatprep.mubr.f32.mxu0 0.0
    %1047 = vmatmul.mubr.f32.gmra.mxu0 %v911
    %v1048 = vpop.f32.mrf.mxu0
    %v1049 = vadd.f32 0.0, %v1048
    %v1050 = vpop.f32.mrf.mxu0
    %v1051 = vadd.f32 0.0, %v1050
    %1052 = vmatprep.mubr.f32.mxu0 0.0
    %1053 = vmatmul.mubr.f32.gmra.mxu0 %v914
    %v1054 = vpop.f32.mrf.mxu0
    %v1055 = vadd.f32 0.0, %v1054
    %v1056 = vpop.f32.mrf.mxu0
    %v1057 = vadd.f32 0.0, %v1056
    %1058 = vmatprep.mubr.f32.mxu0 0.0
    %1059 = vmatmul.mubr.f32.gmra.mxu0 %v917
    %v1060 = vpop.f32.mrf.mxu0
    %v1061 = vadd.f32 0.0, %v1060
    %v1062 = vpop.f32.mrf.mxu0
    %v1063 = vadd.f32 0.0, %v1062
    %1064 = vmatprep.mubr.f32.mxu0 0.0
    %1065 = vmatmul.mubr.f32.gmra.mxu0 %v920
    %v1066 = vpop.f32.mrf.mxu0
    %v1067 = vadd.f32 0.0, %v1066
    %v1068 = vpop.f32.mrf.mxu0
    %v1069 = vadd.f32 0.0, %v1068
    %1070 = vmatprep.mubr.f32.mxu0 0.0
    %1071 = vmatmul.mubr.f32.gmra.mxu0 %v923
    %v1072 = vpop.f32.mrf.mxu0
    %v1073 = vadd.f32 0.0, %v1072
    %v1074 = vpop.f32.mrf.mxu0
    %v1075 = vadd.f32 0.0, %v1074
    %1076 = vmatprep.mubr.f32.mxu0 0.0
    %1077 = vmatmul.mubr.f32.gmra.mxu0 %v926
    %v1078 = vpop.f32.mrf.mxu0
    %v1079 = vadd.f32 0.0, %v1078
    %v1080 = vpop.f32.mrf.mxu0
    %v1081 = vadd.f32 0.0, %v1080
    %1082 = vmatprep.mubr.f32.mxu0 0.0
    %1083 = vmatmul.mubr.f32.gmra.mxu0 %v929
    %v1084 = vpop.f32.mrf.mxu0
    %v1085 = vadd.f32 0.0, %v1084
    %v1086 = vpop.f32.mrf.mxu0
    %v1087 = vadd.f32 0.0, %v1086
    %1088 = vmatprep.mubr.f32.mxu0 0.0
    %1089 = vmatmul.mubr.f32.gmra.mxu0 %v932
    %v1090 = vpop.f32.mrf.mxu0
    %v1091 = vadd.f32 0.0, %v1090
    %v1092 = vpop.f32.mrf.mxu0
    %v1093 = vadd.f32 0.0, %v1092
    %1094 = vdwg.mxu0
    %1095 = vmatprep.subr.mxu0 0.0
    %1096 = vmatpush1.msra.mxu0 0.0
    %1097 = vmatprep.subr.mxu0 0.0
    %1098 = vmatpush1.msra.mxu0 0.0
    %1099 = vmatprep.subr.mxu0 0.0
    %1100 = vmatpush1.msra.mxu0 0.0
    %1101 = vmatprep.subr.mxu0 0.0
    %1102 = vmatpush1.msra.mxu0 0.0
    %1103 = vmatprep.subr.mxu0 0.0
    %1104 = vmatpush1.msra.mxu0 0.0
    %1105 = vmatprep.subr.mxu0 0.0
    %1106 = vmatpush1.msra.mxu0 0.0
    %1107 = vmatprep.subr.mxu0 0.0
    %1108 = vmatpush1.msra.mxu0 0.0
    %1109 = vmatprep.subr.mxu0 0.0
    %1110 = vmatpush1.msra.mxu0 0.0
    %1111 = vmatprep.subr.mxu0 0.0
    %1112 = vmatpush1.msra.mxu0 %v885
    %1113 = vmatprep.subr.mxu0 0.0
    %1114 = vmatpush1.msra.mxu0 %v882
    %1115 = vmatprep.subr.mxu0 0.0
    %1116 = vmatpush1.msra.mxu0 %v879
    %1117 = vmatprep.subr.mxu0 0.0
    %1118 = vmatpush1.msra.mxu0 %v876
    %1119 = vmatprep.subr.mxu0 0.0
    %1120 = vmatpush1.msra.mxu0 %v873
    %1121 = vmatprep.subr.mxu0 0.0
    %1122 = vmatpush1.msra.mxu0 %v870
    %1123 = vmatprep.subr.mxu0 0.0
    %1124 = vmatpush1.msra.mxu0 %v867
    %1125 = vmatprep.subr.mxu0 0.0
    %1126 = vmatpush1.msra.mxu0 %v864
    %1127 = vmatprep.subr.mxu0 0.0
    %1128 = vmatpush2.msra.mxu0 0.0
    %1129 = vmatprep.subr.mxu0 0.0
    %1130 = vmatpush2.msra.mxu0 0.0
    %1131 = vmatprep.subr.mxu0 0.0
    %1132 = vmatpush2.msra.mxu0 0.0
    %1133 = vmatprep.subr.mxu0 0.0
    %1134 = vmatpush2.msra.mxu0 0.0
    %1135 = vmatprep.subr.mxu0 0.0
    %1136 = vmatpush2.msra.mxu0 0.0
    %1137 = vmatprep.subr.mxu0 0.0
    %1138 = vmatpush2.msra.mxu0 0.0
    %1139 = vmatprep.subr.mxu0 0.0
    %1140 = vmatpush2.msra.mxu0 0.0
    %1141 = vmatprep.subr.mxu0 0.0
    %1142 = vmatpush2.msra.mxu0 0.0
    %1143 = vmatprep.subr.mxu0 0.0
    %1144 = vmatpush2.msra.mxu0 0.0
    %1145 = vmatprep.subr.mxu0 0.0
    %1146 = vmatpush2.msra.mxu0 0.0
    %1147 = vmatprep.subr.mxu0 0.0
    %1148 = vmatpush2.msra.mxu0 0.0
    %1149 = vmatprep.subr.mxu0 0.0
    %1150 = vmatpush2.msra.mxu0 0.0
    %1151 = vmatprep.subr.mxu0 0.0
    %1152 = vmatpush2.msra.mxu0 0.0
    %1153 = vmatprep.subr.mxu0 0.0
    %1154 = vmatpush2.msra.mxu0 0.0
    %1155 = vmatprep.subr.mxu0 0.0
    %1156 = vmatpush2.msra.mxu0 0.0
    %1157 = vmatprep.subr.mxu0 0.0
    %1158 = vmatpush2.msra.mxu0 0.0
    %1159 = vmatprep.mubr.f32.mxu0 0.0
    %1160 = vmatmul.mubr.f32.gmra.mxu0 %v887
    %v1161 = vpop.f32.mrf.mxu0
    %v1162 = vadd.f32 0.0, %v1161
    %v1163 = vpop.f32.mrf.mxu0
    %1164 = vmatprep.mubr.f32.mxu0 0.0
    %1165 = vmatmul.mubr.f32.gmra.mxu0 %v890
    %v1166 = vpop.f32.mrf.mxu0
    %v1167 = vadd.f32 0.0, %v1166
    %v1168 = vpop.f32.mrf.mxu0
    %1169 = vmatprep.mubr.f32.mxu0 0.0
    %1170 = vmatmul.mubr.f32.gmra.mxu0 %v893
    %v1171 = vpop.f32.mrf.mxu0
    %v1172 = vadd.f32 0.0, %v1171
    %v1173 = vpop.f32.mrf.mxu0
    %1174 = vmatprep.mubr.f32.mxu0 0.0
    %1175 = vmatmul.mubr.f32.gmra.mxu0 %v896
    %v1176 = vpop.f32.mrf.mxu0
    %v1177 = vadd.f32 0.0, %v1176
    %v1178 = vpop.f32.mrf.mxu0
    %1179 = vmatprep.mubr.f32.mxu0 0.0
    %1180 = vmatmul.mubr.f32.gmra.mxu0 %v899
    %v1181 = vpop.f32.mrf.mxu0
    %v1182 = vadd.f32 0.0, %v1181
    %v1183 = vpop.f32.mrf.mxu0
    %1184 = vmatprep.mubr.f32.mxu0 0.0
    %1185 = vmatmul.mubr.f32.gmra.mxu0 %v902
    %v1186 = vpop.f32.mrf.mxu0
    %v1187 = vadd.f32 0.0, %v1186
    %v1188 = vpop.f32.mrf.mxu0
    %1189 = vmatprep.mubr.f32.mxu0 0.0
    %1190 = vmatmul.mubr.f32.gmra.mxu0 %v905
    %v1191 = vpop.f32.mrf.mxu0
    %v1192 = vadd.f32 0.0, %v1191
    %v1193 = vpop.f32.mrf.mxu0
    %1194 = vmatprep.mubr.f32.mxu0 0.0
    %1195 = vmatmul.mubr.f32.gmra.mxu0 %v908
    %v1196 = vpop.f32.mrf.mxu0
    %v1197 = vadd.f32 0.0, %v1196
    %v1198 = vpop.f32.mrf.mxu0
    %1199 = vmatprep.mubr.f32.mxu0 0.0
    %1200 = vmatmul.mubr.f32.gmra.mxu0 %v911
    %v1201 = vpop.f32.mrf.mxu0
    %v1202 = vadd.f32 0.0, %v1201
    %v1203 = vpop.f32.mrf.mxu0
    %1204 = vmatprep.mubr.f32.mxu0 0.0
    %1205 = vmatmul.mubr.f32.gmra.mxu0 %v914
    %v1206 = vpop.f32.mrf.mxu0
    %v1207 = vadd.f32 0.0, %v1206
    %v1208 = vpop.f32.mrf.mxu0
    %1209 = vmatprep.mubr.f32.mxu0 0.0
    %1210 = vmatmul.mubr.f32.gmra.mxu0 %v917
    %v1211 = vpop.f32.mrf.mxu0
    %v1212 = vadd.f32 0.0, %v1211
    %v1213 = vpop.f32.mrf.mxu0
    %1214 = vmatprep.mubr.f32.mxu0 0.0
    %1215 = vmatmul.mubr.f32.gmra.mxu0 %v920
    %v1216 = vpop.f32.mrf.mxu0
    %v1217 = vadd.f32 0.0, %v1216
    %v1218 = vpop.f32.mrf.mxu0
    %1219 = vmatprep.mubr.f32.mxu0 0.0
    %1220 = vmatmul.mubr.f32.gmra.mxu0 %v923
    %v1221 = vpop.f32.mrf.mxu0
    %v1222 = vadd.f32 0.0, %v1221
    %v1223 = vpop.f32.mrf.mxu0
    %1224 = vmatprep.mubr.f32.mxu0 0.0
    %1225 = vmatmul.mubr.f32.gmra.mxu0 %v926
    %v1226 = vpop.f32.mrf.mxu0
    %v1227 = vadd.f32 0.0, %v1226
    %v1228 = vpop.f32.mrf.mxu0
    %1229 = vmatprep.mubr.f32.mxu0 0.0
    %1230 = vmatmul.mubr.f32.gmra.mxu0 %v929
    %v1231 = vpop.f32.mrf.mxu0
    %v1232 = vadd.f32 0.0, %v1231
    %v1233 = vpop.f32.mrf.mxu0
    %1234 = vmatprep.mubr.f32.mxu0 0.0
    %1235 = vmatmul.mubr.f32.gmra.mxu0 %v932
    %v1236 = vpop.f32.mrf.mxu0
    %v1237 = vadd.f32 0.0, %v1236
    %v1238 = vpop.f32.mrf.mxu0
    %1239 = vdwg.mxu0
    %v1240 = vadd.f32 %v606, %v1001
    %v1241 = vadd.f32 %v608, %v1003
    %v1242 = vadd.f32 %v767, %v1162
    %v1243 = vadd.f32 %v612, %v1007
    %v1244 = vadd.f32 %v614, %v1009
    %v1245 = vadd.f32 %v772, %v1167
    %v1246 = vadd.f32 %v618, %v1013
    %v1247 = vadd.f32 %v620, %v1015
    %v1248 = vadd.f32 %v777, %v1172
    %v1249 = vadd.f32 %v624, %v1019
    %v1250 = vadd.f32 %v626, %v1021
    %v1251 = vadd.f32 %v782, %v1177
    %v1252 = vadd.f32 %v630, %v1025
    %v1253 = vadd.f32 %v632, %v1027
    %v1254 = vadd.f32 %v787, %v1182
    %v1255 = vadd.f32 %v636, %v1031
    %v1256 = vadd.f32 %v638, %v1033
    %v1257 = vadd.f32 %v792, %v1187
    %v1258 = vadd.f32 %v642, %v1037
    %v1259 = vadd.f32 %v644, %v1039
    %v1260 = vadd.f32 %v797, %v1192
    %v1261 = vadd.f32 %v648, %v1043
    %v1262 = vadd.f32 %v650, %v1045
    %v1263 = vadd.f32 %v802, %v1197
    %v1264 = vadd.f32 %v654, %v1049
    %v1265 = vadd.f32 %v656, %v1051
    %v1266 = vadd.f32 %v807, %v1202
    %v1267 = vadd.f32 %v660, %v1055
    %v1268 = vadd.f32 %v662, %v1057
    %v1269 = vadd.f32 %v812, %v1207
    %v1270 = vadd.f32 %v666, %v1061
    %v1271 = vadd.f32 %v668, %v1063
    %v1272 = vadd.f32 %v817, %v1212
    %v1273 = vadd.f32 %v672, %v1067
    %v1274 = vadd.f32 %v674, %v1069
    %v1275 = vadd.f32 %v822, %v1217
    %v1276 = vadd.f32 %v678, %v1073
    %v1277 = vadd.f32 %v680, %v1075
    %v1278 = vadd.f32 %v827, %v1222
    %v1279 = vadd.f32 %v684, %v1079
    %v1280 = vadd.f32 %v686, %v1081
    %v1281 = vadd.f32 %v832, %v1227
    %v1282 = vadd.f32 %v690, %v1085
    %v1283 = vadd.f32 %v692, %v1087
    %v1284 = vadd.f32 %v837, %v1232
    %v1285 = vadd.f32 %v696, %v1091
    %v1286 = vadd.f32 %v698, %v1093
    %v1287 = vadd.f32 %v842, %v1237
    %v1288 = vld [vmem:[%s0 + $0x3] sm:$0xff]
    %v1289 = vld [vmem:[%s0 + $0xb] sm:$0xff]
    %v1290 = vld [vmem:[%s0 + $0x1b] sm:$0xff]
    %v1291 = vld [vmem:[%s0 + $0x23] sm:$0xff]
    %v1292 = vld [vmem:[%s0 + $0x33] sm:$0xff]
    %v1293 = vld [vmem:[%s0 + $0x3b] sm:$0xff]
    %v1294 = vld [vmem:[%s0 + $0x4b] sm:$0xff]
    %v1295 = vld [vmem:[%s0 + $0x53] sm:$0xff]
    %v1296 = vld [vmem:[%s0 + $0x63] sm:$0xff]
    %v1297 = vld [vmem:[%s0 + $0x6b] sm:$0xff]
    %v1298 = vld [vmem:[%s0 + $0x7b] sm:$0xff]
    %v1299 = vld [vmem:[%s0 + $0x83] sm:$0xff]
    %v1300 = vld [vmem:[%s0 + $0x93] sm:$0xff]
    %v1301 = vld [vmem:[%s0 + $0x9b] sm:$0xff]
    %v1302 = vld [vmem:[%s0 + $0xab] sm:$0xff]
    %v1303 = vld [vmem:[%s0 + $0xb3] sm:$0xff]
    %s1304 = scalar_lea.vmem [#allocation2], 576
    %v1305 = vld [vmem:[%s1304] sm:$0xff]
    %v1306 = vld [vmem:[%s1304 + $0x8] sm:$0xff]
    %v1307 = vld [vmem:[%s1304 + $0x10] sm:$0xff]
    %v1308 = vld [vmem:[%s1304 + $0x18] sm:$0xff]
    %v1309 = vld [vmem:[%s1304 + $0x20] sm:$0xff]
    %v1310 = vld [vmem:[%s1304 + $0x28] sm:$0xff]
    %v1311 = vld [vmem:[%s1304 + $0x30] sm:$0xff]
    %v1312 = vld [vmem:[%s1304 + $0x38] sm:$0xff]
    %v1313 = vld [vmem:[%s1304 + $0x40] sm:$0xff]
    %v1314 = vld [vmem:[%s1304 + $0x48] sm:$0xff]
    %v1315 = vld [vmem:[%s1304 + $0x50] sm:$0xff]
    %v1316 = vld [vmem:[%s1304 + $0x58] sm:$0xff]
    %v1317 = vld [vmem:[%s1304 + $0x60] sm:$0xff]
    %v1318 = vld [vmem:[%s1304 + $0x68] sm:$0xff]
    %v1319 = vld [vmem:[%s1304 + $0x70] sm:$0xff]
    %v1320 = vld [vmem:[%s1304 + $0x78] sm:$0xff]
    %v1321 = vld [vmem:[%s1304 + $0x80] sm:$0xff]
    %v1322 = vld [vmem:[%s1304 + $0x88] sm:$0xff]
    %v1323 = vld [vmem:[%s1304 + $0x90] sm:$0xff]
    %v1324 = vld [vmem:[%s1304 + $0x98] sm:$0xff]
    %v1325 = vld [vmem:[%s1304 + $0xa0] sm:$0xff]
    %v1326 = vld [vmem:[%s1304 + $0xa8] sm:$0xff]
    %v1327 = vld [vmem:[%s1304 + $0xb0] sm:$0xff]
    %v1328 = vld [vmem:[%s1304 + $0xb8] sm:$0xff]
    %v1330 = vsel %vm136, %v1288, 0
    %v1333 = vsel %vm136, %v1289, 0
    %v1336 = vsel %vm136, %v1290, 0
    %v1339 = vsel %vm136, %v1291, 0
    %v1342 = vsel %vm136, %v1292, 0
    %v1345 = vsel %vm136, %v1293, 0
    %v1348 = vsel %vm136, %v1294, 0
    %v1351 = vsel %vm136, %v1295, 0
    %v1354 = vsel %vm136, %v1296, 0
    %v1357 = vsel %vm136, %v1297, 0
    %v1360 = vsel %vm136, %v1298, 0
    %v1363 = vsel %vm136, %v1299, 0
    %v1366 = vsel %vm136, %v1300, 0
    %v1369 = vsel %vm136, %v1301, 0
    %v1372 = vsel %vm136, %v1302, 0
    %v1375 = vsel %vm136, %v1303, 0
    %1377 = vmatprep.subr.mxu0 0.0
    %1378 = vmatpush1.msra.mxu0 0.0
    %1379 = vmatprep.subr.mxu0 0.0
    %1380 = vmatpush1.msra.mxu0 0.0
    %1381 = vmatprep.subr.mxu0 0.0
    %1382 = vmatpush1.msra.mxu0 0.0
    %1383 = vmatprep.subr.mxu0 0.0
    %1384 = vmatpush1.msra.mxu0 0.0
    %1385 = vmatprep.subr.mxu0 0.0
    %1386 = vmatpush1.msra.mxu0 0.0
    %1387 = vmatprep.subr.mxu0 0.0
    %1388 = vmatpush1.msra.mxu0 0.0
    %1389 = vmatprep.subr.mxu0 0.0
    %1390 = vmatpush1.msra.mxu0 0.0
    %1391 = vmatprep.subr.mxu0 0.0
    %1392 = vmatpush1.msra.mxu0 0.0
    %1393 = vmatprep.subr.mxu0 %v1327
    %1394 = vmatpush1.msra.mxu0 %v1326
    %1395 = vmatprep.subr.mxu0 %v1324
    %1396 = vmatpush1.msra.mxu0 %v1323
    %1397 = vmatprep.subr.mxu0 %v1321
    %1398 = vmatpush1.msra.mxu0 %v1320
    %1399 = vmatprep.subr.mxu0 %v1318
    %1400 = vmatpush1.msra.mxu0 %v1317
    %1401 = vmatprep.subr.mxu0 %v1315
    %1402 = vmatpush1.msra.mxu0 %v1314
    %1403 = vmatprep.subr.mxu0 %v1312
    %1404 = vmatpush1.msra.mxu0 %v1311
    %1405 = vmatprep.subr.mxu0 %v1309
    %1406 = vmatpush1.msra.mxu0 %v1308
    %1407 = vmatprep.subr.mxu0 %v1306
    %1408 = vmatpush1.msra.mxu0 %v1305
    %1409 = vmatprep.subr.mxu0 0.0
    %1410 = vmatpush2.msra.mxu0 0.0
    %1411 = vmatprep.subr.mxu0 0.0
    %1412 = vmatpush2.msra.mxu0 0.0
    %1413 = vmatprep.subr.mxu0 0.0
    %1414 = vmatpush2.msra.mxu0 0.0
    %1415 = vmatprep.subr.mxu0 0.0
    %1416 = vmatpush2.msra.mxu0 0.0
    %1417 = vmatprep.subr.mxu0 0.0
    %1418 = vmatpush2.msra.mxu0 0.0
    %1419 = vmatprep.subr.mxu0 0.0
    %1420 = vmatpush2.msra.mxu0 0.0
    %1421 = vmatprep.subr.mxu0 0.0
    %1422 = vmatpush2.msra.mxu0 0.0
    %1423 = vmatprep.subr.mxu0 0.0
    %1424 = vmatpush2.msra.mxu0 0.0
    %1425 = vmatprep.subr.mxu0 0.0
    %1426 = vmatpush2.msra.mxu0 0.0
    %1427 = vmatprep.subr.mxu0 0.0
    %1428 = vmatpush2.msra.mxu0 0.0
    %1429 = vmatprep.subr.mxu0 0.0
    %1430 = vmatpush2.msra.mxu0 0.0
    %1431 = vmatprep.subr.mxu0 0.0
    %1432 = vmatpush2.msra.mxu0 0.0
    %1433 = vmatprep.subr.mxu0 0.0
    %1434 = vmatpush2.msra.mxu0 0.0
    %1435 = vmatprep.subr.mxu0 0.0
    %1436 = vmatpush2.msra.mxu0 0.0
    %1437 = vmatprep.subr.mxu0 0.0
    %1438 = vmatpush2.msra.mxu0 0.0
    %1439 = vmatprep.subr.mxu0 0.0
    %1440 = vmatpush2.msra.mxu0 0.0
    %1441 = vmatprep.mubr.f32.mxu0 0.0
    %1442 = vmatmul.mubr.f32.gmra.mxu0 %v1330
    %v1443 = vpop.f32.mrf.mxu0
    %v1444 = vadd.f32 0.0, %v1443
    %v1445 = vpop.f32.mrf.mxu0
    %v1446 = vadd.f32 0.0, %v1445
    %1447 = vmatprep.mubr.f32.mxu0 0.0
    %1448 = vmatmul.mubr.f32.gmra.mxu0 %v1333
    %v1449 = vpop.f32.mrf.mxu0
    %v1450 = vadd.f32 0.0, %v1449
    %v1451 = vpop.f32.mrf.mxu0
    %v1452 = vadd.f32 0.0, %v1451
    %1453 = vmatprep.mubr.f32.mxu0 0.0
    %1454 = vmatmul.mubr.f32.gmra.mxu0 %v1336
    %v1455 = vpop.f32.mrf.mxu0
    %v1456 = vadd.f32 0.0, %v1455
    %v1457 = vpop.f32.mrf.mxu0
    %v1458 = vadd.f32 0.0, %v1457
    %1459 = vmatprep.mubr.f32.mxu0 0.0
    %1460 = vmatmul.mubr.f32.gmra.mxu0 %v1339
    %v1461 = vpop.f32.mrf.mxu0
    %v1462 = vadd.f32 0.0, %v1461
    %v1463 = vpop.f32.mrf.mxu0
    %v1464 = vadd.f32 0.0, %v1463
    %1465 = vmatprep.mubr.f32.mxu0 0.0
    %1466 = vmatmul.mubr.f32.gmra.mxu0 %v1342
    %v1467 = vpop.f32.mrf.mxu0
    %v1468 = vadd.f32 0.0, %v1467
    %v1469 = vpop.f32.mrf.mxu0
    %v1470 = vadd.f32 0.0, %v1469
    %1471 = vmatprep.mubr.f32.mxu0 0.0
    %1472 = vmatmul.mubr.f32.gmra.mxu0 %v1345
    %v1473 = vpop.f32.mrf.mxu0
    %v1474 = vadd.f32 0.0, %v1473
    %v1475 = vpop.f32.mrf.mxu0
    %v1476 = vadd.f32 0.0, %v1475
    %1477 = vmatprep.mubr.f32.mxu0 0.0
    %1478 = vmatmul.mubr.f32.gmra.mxu0 %v1348
    %v1479 = vpop.f32.mrf.mxu0
    %v1480 = vadd.f32 0.0, %v1479
    %v1481 = vpop.f32.mrf.mxu0
    %v1482 = vadd.f32 0.0, %v1481
    %1483 = vmatprep.mubr.f32.mxu0 0.0
    %1484 = vmatmul.mubr.f32.gmra.mxu0 %v1351
    %v1485 = vpop.f32.mrf.mxu0
    %v1486 = vadd.f32 0.0, %v1485
    %v1487 = vpop.f32.mrf.mxu0
    %v1488 = vadd.f32 0.0, %v1487
    %1489 = vmatprep.mubr.f32.mxu0 0.0
    %1490 = vmatmul.mubr.f32.gmra.mxu0 %v1354
    %v1491 = vpop.f32.mrf.mxu0
    %v1492 = vadd.f32 0.0, %v1491
    %v1493 = vpop.f32.mrf.mxu0
    %v1494 = vadd.f32 0.0, %v1493
    %1495 = vmatprep.mubr.f32.mxu0 0.0
    %1496 = vmatmul.mubr.f32.gmra.mxu0 %v1357
    %v1497 = vpop.f32.mrf.mxu0
    %v1498 = vadd.f32 0.0, %v1497
    %v1499 = vpop.f32.mrf.mxu0
    %v1500 = vadd.f32 0.0, %v1499
    %1501 = vmatprep.mubr.f32.mxu0 0.0
    %1502 = vmatmul.mubr.f32.gmra.mxu0 %v1360
    %v1503 = vpop.f32.mrf.mxu0
    %v1504 = vadd.f32 0.0, %v1503
    %v1505 = vpop.f32.mrf.mxu0
    %v1506 = vadd.f32 0.0, %v1505
    %1507 = vmatprep.mubr.f32.mxu0 0.0
    %1508 = vmatmul.mubr.f32.gmra.mxu0 %v1363
    %v1509 = vpop.f32.mrf.mxu0
    %v1510 = vadd.f32 0.0, %v1509
    %v1511 = vpop.f32.mrf.mxu0
    %v1512 = vadd.f32 0.0, %v1511
    %1513 = vmatprep.mubr.f32.mxu0 0.0
    %1514 = vmatmul.mubr.f32.gmra.mxu0 %v1366
    %v1515 = vpop.f32.mrf.mxu0
    %v1516 = vadd.f32 0.0, %v1515
    %v1517 = vpop.f32.mrf.mxu0
    %v1518 = vadd.f32 0.0, %v1517
    %1519 = vmatprep.mubr.f32.mxu0 0.0
    %1520 = vmatmul.mubr.f32.gmra.mxu0 %v1369
    %v1521 = vpop.f32.mrf.mxu0
    %v1522 = vadd.f32 0.0, %v1521
    %v1523 = vpop.f32.mrf.mxu0
    %v1524 = vadd.f32 0.0, %v1523
    %1525 = vmatprep.mubr.f32.mxu0 0.0
    %1526 = vmatmul.mubr.f32.gmra.mxu0 %v1372
    %v1527 = vpop.f32.mrf.mxu0
    %v1528 = vadd.f32 0.0, %v1527
    %v1529 = vpop.f32.mrf.mxu0
    %v1530 = vadd.f32 0.0, %v1529
    %1531 = vmatprep.mubr.f32.mxu0 0.0
    %1532 = vmatmul.mubr.f32.gmra.mxu0 %v1375
    %v1533 = vpop.f32.mrf.mxu0
    %v1534 = vadd.f32 0.0, %v1533
    %v1535 = vpop.f32.mrf.mxu0
    %v1536 = vadd.f32 0.0, %v1535
    %1537 = vdwg.mxu0
    %1538 = vmatprep.subr.mxu0 0.0
    %1539 = vmatpush1.msra.mxu0 0.0
    %1540 = vmatprep.subr.mxu0 0.0
    %1541 = vmatpush1.msra.mxu0 0.0
    %1542 = vmatprep.subr.mxu0 0.0
    %1543 = vmatpush1.msra.mxu0 0.0
    %1544 = vmatprep.subr.mxu0 0.0
    %1545 = vmatpush1.msra.mxu0 0.0
    %1546 = vmatprep.subr.mxu0 0.0
    %1547 = vmatpush1.msra.mxu0 0.0
    %1548 = vmatprep.subr.mxu0 0.0
    %1549 = vmatpush1.msra.mxu0 0.0
    %1550 = vmatprep.subr.mxu0 0.0
    %1551 = vmatpush1.msra.mxu0 0.0
    %1552 = vmatprep.subr.mxu0 0.0
    %1553 = vmatpush1.msra.mxu0 0.0
    %1554 = vmatprep.subr.mxu0 0.0
    %1555 = vmatpush1.msra.mxu0 %v1328
    %1556 = vmatprep.subr.mxu0 0.0
    %1557 = vmatpush1.msra.mxu0 %v1325
    %1558 = vmatprep.subr.mxu0 0.0
    %1559 = vmatpush1.msra.mxu0 %v1322
    %1560 = vmatprep.subr.mxu0 0.0
    %1561 = vmatpush1.msra.mxu0 %v1319
    %1562 = vmatprep.subr.mxu0 0.0
    %1563 = vmatpush1.msra.mxu0 %v1316
    %1564 = vmatprep.subr.mxu0 0.0
    %1565 = vmatpush1.msra.mxu0 %v1313
    %1566 = vmatprep.subr.mxu0 0.0
    %1567 = vmatpush1.msra.mxu0 %v1310
    %1568 = vmatprep.subr.mxu0 0.0
    %1569 = vmatpush1.msra.mxu0 %v1307
    %1570 = vmatprep.subr.mxu0 0.0
    %1571 = vmatpush2.msra.mxu0 0.0
    %1572 = vmatprep.subr.mxu0 0.0
    %1573 = vmatpush2.msra.mxu0 0.0
    %1574 = vmatprep.subr.mxu0 0.0
    %1575 = vmatpush2.msra.mxu0 0.0
    %1576 = vmatprep.subr.mxu0 0.0
    %1577 = vmatpush2.msra.mxu0 0.0
    %1578 = vmatprep.subr.mxu0 0.0
    %1579 = vmatpush2.msra.mxu0 0.0
    %1580 = vmatprep.subr.mxu0 0.0
    %1581 = vmatpush2.msra.mxu0 0.0
    %1582 = vmatprep.subr.mxu0 0.0
    %1583 = vmatpush2.msra.mxu0 0.0
    %1584 = vmatprep.subr.mxu0 0.0
    %1585 = vmatpush2.msra.mxu0 0.0
    %1586 = vmatprep.subr.mxu0 0.0
    %1587 = vmatpush2.msra.mxu0 0.0
    %1588 = vmatprep.subr.mxu0 0.0
    %1589 = vmatpush2.msra.mxu0 0.0
    %1590 = vmatprep.subr.mxu0 0.0
    %1591 = vmatpush2.msra.mxu0 0.0
    %1592 = vmatprep.subr.mxu0 0.0
    %1593 = vmatpush2.msra.mxu0 0.0
    %1594 = vmatprep.subr.mxu0 0.0
    %1595 = vmatpush2.msra.mxu0 0.0
    %1596 = vmatprep.subr.mxu0 0.0
    %1597 = vmatpush2.msra.mxu0 0.0
    %1598 = vmatprep.subr.mxu0 0.0
    %1599 = vmatpush2.msra.mxu0 0.0
    %1600 = vmatprep.subr.mxu0 0.0
    %1601 = vmatpush2.msra.mxu0 0.0
    %1602 = vmatprep.mubr.f32.mxu0 0.0
    %1603 = vmatmul.mubr.f32.gmra.mxu0 %v1330
    %v1604 = vpop.f32.mrf.mxu0
    %v1605 = vadd.f32 0.0, %v1604
    %v1606 = vpop.f32.mrf.mxu0
    %1607 = vmatprep.mubr.f32.mxu0 0.0
    %1608 = vmatmul.mubr.f32.gmra.mxu0 %v1333
    %v1609 = vpop.f32.mrf.mxu0
    %v1610 = vadd.f32 0.0, %v1609
    %v1611 = vpop.f32.mrf.mxu0
    %1612 = vmatprep.mubr.f32.mxu0 0.0
    %1613 = vmatmul.mubr.f32.gmra.mxu0 %v1336
    %v1614 = vpop.f32.mrf.mxu0
    %v1615 = vadd.f32 0.0, %v1614
    %v1616 = vpop.f32.mrf.mxu0
    %1617 = vmatprep.mubr.f32.mxu0 0.0
    %1618 = vmatmul.mubr.f32.gmra.mxu0 %v1339
    %v1619 = vpop.f32.mrf.mxu0
    %v1620 = vadd.f32 0.0, %v1619
    %v1621 = vpop.f32.mrf.mxu0
    %1622 = vmatprep.mubr.f32.mxu0 0.0
    %1623 = vmatmul.mubr.f32.gmra.mxu0 %v1342
    %v1624 = vpop.f32.mrf.mxu0
    %v1625 = vadd.f32 0.0, %v1624
    %v1626 = vpop.f32.mrf.mxu0
    %1627 = vmatprep.mubr.f32.mxu0 0.0
    %1628 = vmatmul.mubr.f32.gmra.mxu0 %v1345
    %v1629 = vpop.f32.mrf.mxu0
    %v1630 = vadd.f32 0.0, %v1629
    %v1631 = vpop.f32.mrf.mxu0
    %1632 = vmatprep.mubr.f32.mxu0 0.0
    %1633 = vmatmul.mubr.f32.gmra.mxu0 %v1348
    %v1634 = vpop.f32.mrf.mxu0
    %v1635 = vadd.f32 0.0, %v1634
    %v1636 = vpop.f32.mrf.mxu0
    %1637 = vmatprep.mubr.f32.mxu0 0.0
    %1638 = vmatmul.mubr.f32.gmra.mxu0 %v1351
    %v1639 = vpop.f32.mrf.mxu0
    %v1640 = vadd.f32 0.0, %v1639
    %v1641 = vpop.f32.mrf.mxu0
    %1642 = vmatprep.mubr.f32.mxu0 0.0
    %1643 = vmatmul.mubr.f32.gmra.mxu0 %v1354
    %v1644 = vpop.f32.mrf.mxu0
    %v1645 = vadd.f32 0.0, %v1644
    %v1646 = vpop.f32.mrf.mxu0
    %1647 = vmatprep.mubr.f32.mxu0 0.0
    %1648 = vmatmul.mubr.f32.gmra.mxu0 %v1357
    %v1649 = vpop.f32.mrf.mxu0
    %v1650 = vadd.f32 0.0, %v1649
    %v1651 = vpop.f32.mrf.mxu0
    %1652 = vmatprep.mubr.f32.mxu0 0.0
    %1653 = vmatmul.mubr.f32.gmra.mxu0 %v1360
    %v1654 = vpop.f32.mrf.mxu0
    %v1655 = vadd.f32 0.0, %v1654
    %v1656 = vpop.f32.mrf.mxu0
    %1657 = vmatprep.mubr.f32.mxu0 0.0
    %1658 = vmatmul.mubr.f32.gmra.mxu0 %v1363
    %v1659 = vpop.f32.mrf.mxu0
    %v1660 = vadd.f32 0.0, %v1659
    %v1661 = vpop.f32.mrf.mxu0
    %1662 = vmatprep.mubr.f32.mxu0 0.0
    %1663 = vmatmul.mubr.f32.gmra.mxu0 %v1366
    %v1664 = vpop.f32.mrf.mxu0
    %v1665 = vadd.f32 0.0, %v1664
    %v1666 = vpop.f32.mrf.mxu0
    %1667 = vmatprep.mubr.f32.mxu0 0.0
    %1668 = vmatmul.mubr.f32.gmra.mxu0 %v1369
    %v1669 = vpop.f32.mrf.mxu0
    %v1670 = vadd.f32 0.0, %v1669
    %v1671 = vpop.f32.mrf.mxu0
    %1672 = vmatprep.mubr.f32.mxu0 0.0
    %1673 = vmatmul.mubr.f32.gmra.mxu0 %v1372
    %v1674 = vpop.f32.mrf.mxu0
    %v1675 = vadd.f32 0.0, %v1674
    %v1676 = vpop.f32.mrf.mxu0
    %1677 = vmatprep.mubr.f32.mxu0 0.0
    %1678 = vmatmul.mubr.f32.gmra.mxu0 %v1375
    %v1679 = vpop.f32.mrf.mxu0
    %v1680 = vadd.f32 0.0, %v1679
    %v1681 = vpop.f32.mrf.mxu0
    %1682 = vdwg.mxu0
    %v1683 = vadd.f32 %v1240, %v1444
    %v1684 = vadd.f32 %v1241, %v1446
    %v1685 = vadd.f32 %v1242, %v1605
    %v1686 = vadd.f32 %v1243, %v1450
    %v1687 = vadd.f32 %v1244, %v1452
    %v1688 = vadd.f32 %v1245, %v1610
    %v1689 = vadd.f32 %v1246, %v1456
    %v1690 = vadd.f32 %v1247, %v1458
    %v1691 = vadd.f32 %v1248, %v1615
    %v1692 = vadd.f32 %v1249, %v1462
    %v1693 = vadd.f32 %v1250, %v1464
    %v1694 = vadd.f32 %v1251, %v1620
    %v1695 = vadd.f32 %v1252, %v1468
    %v1696 = vadd.f32 %v1253, %v1470
    %v1697 = vadd.f32 %v1254, %v1625
    %v1698 = vadd.f32 %v1255, %v1474
    %v1699 = vadd.f32 %v1256, %v1476
    %v1700 = vadd.f32 %v1257, %v1630
    %v1701 = vadd.f32 %v1258, %v1480
    %v1702 = vadd.f32 %v1259, %v1482
    %v1703 = vadd.f32 %v1260, %v1635
    %v1704 = vadd.f32 %v1261, %v1486
    %v1705 = vadd.f32 %v1262, %v1488
    %v1706 = vadd.f32 %v1263, %v1640
    %v1707 = vadd.f32 %v1264, %v1492
    %v1708 = vadd.f32 %v1265, %v1494
    %v1709 = vadd.f32 %v1266, %v1645
    %v1710 = vadd.f32 %v1267, %v1498
    %v1711 = vadd.f32 %v1268, %v1500
    %v1712 = vadd.f32 %v1269, %v1650
    %v1713 = vadd.f32 %v1270, %v1504
    %v1714 = vadd.f32 %v1271, %v1506
    %v1715 = vadd.f32 %v1272, %v1655
    %v1716 = vadd.f32 %v1273, %v1510
    %v1717 = vadd.f32 %v1274, %v1512
    %v1718 = vadd.f32 %v1275, %v1660
    %v1719 = vadd.f32 %v1276, %v1516
    %v1720 = vadd.f32 %v1277, %v1518
    %v1721 = vadd.f32 %v1278, %v1665
    %v1722 = vadd.f32 %v1279, %v1522
    %v1723 = vadd.f32 %v1280, %v1524
    %v1724 = vadd.f32 %v1281, %v1670
    %v1725 = vadd.f32 %v1282, %v1528
    %v1726 = vadd.f32 %v1283, %v1530
    %v1727 = vadd.f32 %v1284, %v1675
    %v1728 = vadd.f32 %v1285, %v1534
    %v1729 = vadd.f32 %v1286, %v1536
    %v1730 = vadd.f32 %v1287, %v1680
    %v1731 = vld [vmem:[%s0 + $0x4] sm:$0xff]
    %v1732 = vld [vmem:[%s0 + $0xc] sm:$0xff]
    %v1733 = vld [vmem:[%s0 + $0x1c] sm:$0xff]
    %v1734 = vld [vmem:[%s0 + $0x24] sm:$0xff]
    %v1735 = vld [vmem:[%s0 + $0x34] sm:$0xff]
    %v1736 = vld [vmem:[%s0 + $0x3c] sm:$0xff]
    %v1737 = vld [vmem:[%s0 + $0x4c] sm:$0xff]
    %v1738 = vld [vmem:[%s0 + $0x54] sm:$0xff]
    %v1739 = vld [vmem:[%s0 + $0x64] sm:$0xff]
    %v1740 = vld [vmem:[%s0 + $0x6c] sm:$0xff]
    %v1741 = vld [vmem:[%s0 + $0x7c] sm:$0xff]
    %v1742 = vld [vmem:[%s0 + $0x84] sm:$0xff]
    %v1743 = vld [vmem:[%s0 + $0x94] sm:$0xff]
    %v1744 = vld [vmem:[%s0 + $0x9c] sm:$0xff]
    %v1745 = vld [vmem:[%s0 + $0xac] sm:$0xff]
    %v1746 = vld [vmem:[%s0 + $0xb4] sm:$0xff]
    %s1747 = scalar_lea.vmem [#allocation2], 768
    %v1748 = vld [vmem:[%s1747] sm:$0xff]
    %v1749 = vld [vmem:[%s1747 + $0x8] sm:$0xff]
    %v1750 = vld [vmem:[%s1747 + $0x10] sm:$0xff]
    %v1751 = vld [vmem:[%s1747 + $0x18] sm:$0xff]
    %v1752 = vld [vmem:[%s1747 + $0x20] sm:$0xff]
    %v1753 = vld [vmem:[%s1747 + $0x28] sm:$0xff]
    %v1754 = vld [vmem:[%s1747 + $0x30] sm:$0xff]
    %v1755 = vld [vmem:[%s1747 + $0x38] sm:$0xff]
    %v1756 = vld [vmem:[%s1747 + $0x40] sm:$0xff]
    %v1757 = vld [vmem:[%s1747 + $0x48] sm:$0xff]
    %v1758 = vld [vmem:[%s1747 + $0x50] sm:$0xff]
    %v1759 = vld [vmem:[%s1747 + $0x58] sm:$0xff]
    %v1760 = vld [vmem:[%s1747 + $0x60] sm:$0xff]
    %v1761 = vld [vmem:[%s1747 + $0x68] sm:$0xff]
    %v1762 = vld [vmem:[%s1747 + $0x70] sm:$0xff]
    %v1763 = vld [vmem:[%s1747 + $0x78] sm:$0xff]
    %v1764 = vld [vmem:[%s1747 + $0x80] sm:$0xff]
    %v1765 = vld [vmem:[%s1747 + $0x88] sm:$0xff]
    %v1766 = vld [vmem:[%s1747 + $0x90] sm:$0xff]
    %v1767 = vld [vmem:[%s1747 + $0x98] sm:$0xff]
    %v1768 = vld [vmem:[%s1747 + $0xa0] sm:$0xff]
    %v1769 = vld [vmem:[%s1747 + $0xa8] sm:$0xff]
    %v1770 = vld [vmem:[%s1747 + $0xb0] sm:$0xff]
    %v1771 = vld [vmem:[%s1747 + $0xb8] sm:$0xff]
    %v1773 = vsel %vm136, %v1731, 0
    %v1776 = vsel %vm136, %v1732, 0
    %v1779 = vsel %vm136, %v1733, 0
    %v1782 = vsel %vm136, %v1734, 0
    %v1785 = vsel %vm136, %v1735, 0
    %v1788 = vsel %vm136, %v1736, 0
    %v1791 = vsel %vm136, %v1737, 0
    %v1794 = vsel %vm136, %v1738, 0
    %v1797 = vsel %vm136, %v1739, 0
    %v1800 = vsel %vm136, %v1740, 0
    %v1803 = vsel %vm136, %v1741, 0
    %v1806 = vsel %vm136, %v1742, 0
    %v1809 = vsel %vm136, %v1743, 0
    %v1812 = vsel %vm136, %v1744, 0
    %v1815 = vsel %vm136, %v1745, 0
    %v1818 = vsel %vm136, %v1746, 0
    %1820 = vmatprep.subr.mxu0 0.0
    %1821 = vmatpush1.msra.mxu0 0.0
    %1822 = vmatprep.subr.mxu0 0.0
    %1823 = vmatpush1.msra.mxu0 0.0
    %1824 = vmatprep.subr.mxu0 0.0
    %1825 = vmatpush1.msra.mxu0 0.0
    %1826 = vmatprep.subr.mxu0 0.0
    %1827 = vmatpush1.msra.mxu0 0.0
    %1828 = vmatprep.subr.mxu0 0.0
    %1829 = vmatpush1.msra.mxu0 0.0
    %1830 = vmatprep.subr.mxu0 0.0
    %1831 = vmatpush1.msra.mxu0 0.0
    %1832 = vmatprep.subr.mxu0 0.0
    %1833 = vmatpush1.msra.mxu0 0.0
    %1834 = vmatprep.subr.mxu0 0.0
    %1835 = vmatpush1.msra.mxu0 0.0
    %1836 = vmatprep.subr.mxu0 %v1770
    %1837 = vmatpush1.msra.mxu0 %v1769
    %1838 = vmatprep.subr.mxu0 %v1767
    %1839 = vmatpush1.msra.mxu0 %v1766
    %1840 = vmatprep.subr.mxu0 %v1764
    %1841 = vmatpush1.msra.mxu0 %v1763
    %1842 = vmatprep.subr.mxu0 %v1761
    %1843 = vmatpush1.msra.mxu0 %v1760
    %1844 = vmatprep.subr.mxu0 %v1758
    %1845 = vmatpush1.msra.mxu0 %v1757
    %1846 = vmatprep.subr.mxu0 %v1755
    %1847 = vmatpush1.msra.mxu0 %v1754
    %1848 = vmatprep.subr.mxu0 %v1752
    %1849 = vmatpush1.msra.mxu0 %v1751
    %1850 = vmatprep.subr.mxu0 %v1749
    %1851 = vmatpush1.msra.mxu0 %v1748
    %1852 = vmatprep.subr.mxu0 0.0
    %1853 = vmatpush2.msra.mxu0 0.0
    %1854 = vmatprep.subr.mxu0 0.0
    %1855 = vmatpush2.msra.mxu0 0.0
    %1856 = vmatprep.subr.mxu0 0.0
    %1857 = vmatpush2.msra.mxu0 0.0
    %1858 = vmatprep.subr.mxu0 0.0
    %1859 = vmatpush2.msra.mxu0 0.0
    %1860 = vmatprep.subr.mxu0 0.0
    %1861 = vmatpush2.msra.mxu0 0.0
    %1862 = vmatprep.subr.mxu0 0.0
    %1863 = vmatpush2.msra.mxu0 0.0
    %1864 = vmatprep.subr.mxu0 0.0
    %1865 = vmatpush2.msra.mxu0 0.0
    %1866 = vmatprep.subr.mxu0 0.0
    %1867 = vmatpush2.msra.mxu0 0.0
    %1868 = vmatprep.subr.mxu0 0.0
    %1869 = vmatpush2.msra.mxu0 0.0
    %1870 = vmatprep.subr.mxu0 0.0
    %1871 = vmatpush2.msra.mxu0 0.0
    %1872 = vmatprep.subr.mxu0 0.0
    %1873 = vmatpush2.msra.mxu0 0.0
    %1874 = vmatprep.subr.mxu0 0.0
    %1875 = vmatpush2.msra.mxu0 0.0
    %1876 = vmatprep.subr.mxu0 0.0
    %1877 = vmatpush2.msra.mxu0 0.0
    %1878 = vmatprep.subr.mxu0 0.0
    %1879 = vmatpush2.msra.mxu0 0.0
    %1880 = vmatprep.subr.mxu0 0.0
    %1881 = vmatpush2.msra.mxu0 0.0
    %1882 = vmatprep.subr.mxu0 0.0
    %1883 = vmatpush2.msra.mxu0 0.0
    %1884 = vmatprep.mubr.f32.mxu0 0.0
    %1885 = vmatmul.mubr.f32.gmra.mxu0 %v1773
    %v1886 = vpop.f32.mrf.mxu0
    %v1887 = vadd.f32 0.0, %v1886
    %v1888 = vpop.f32.mrf.mxu0
    %v1889 = vadd.f32 0.0, %v1888
    %1890 = vmatprep.mubr.f32.mxu0 0.0
    %1891 = vmatmul.mubr.f32.gmra.mxu0 %v1776
    %v1892 = vpop.f32.mrf.mxu0
    %v1893 = vadd.f32 0.0, %v1892
    %v1894 = vpop.f32.mrf.mxu0
    %v1895 = vadd.f32 0.0, %v1894
    %1896 = vmatprep.mubr.f32.mxu0 0.0
    %1897 = vmatmul.mubr.f32.gmra.mxu0 %v1779
    %v1898 = vpop.f32.mrf.mxu0
    %v1899 = vadd.f32 0.0, %v1898
    %v1900 = vpop.f32.mrf.mxu0
    %v1901 = vadd.f32 0.0, %v1900
    %1902 = vmatprep.mubr.f32.mxu0 0.0
    %1903 = vmatmul.mubr.f32.gmra.mxu0 %v1782
    %v1904 = vpop.f32.mrf.mxu0
    %v1905 = vadd.f32 0.0, %v1904
    %v1906 = vpop.f32.mrf.mxu0
    %v1907 = vadd.f32 0.0, %v1906
    %1908 = vmatprep.mubr.f32.mxu0 0.0
    %1909 = vmatmul.mubr.f32.gmra.mxu0 %v1785
    %v1910 = vpop.f32.mrf.mxu0
    %v1911 = vadd.f32 0.0, %v1910
    %v1912 = vpop.f32.mrf.mxu0
    %v1913 = vadd.f32 0.0, %v1912
    %1914 = vmatprep.mubr.f32.mxu0 0.0
    %1915 = vmatmul.mubr.f32.gmra.mxu0 %v1788
    %v1916 = vpop.f32.mrf.mxu0
    %v1917 = vadd.f32 0.0, %v1916
    %v1918 = vpop.f32.mrf.mxu0
    %v1919 = vadd.f32 0.0, %v1918
    %1920 = vmatprep.mubr.f32.mxu0 0.0
    %1921 = vmatmul.mubr.f32.gmra.mxu0 %v1791
    %v1922 = vpop.f32.mrf.mxu0
    %v1923 = vadd.f32 0.0, %v1922
    %v1924 = vpop.f32.mrf.mxu0
    %v1925 = vadd.f32 0.0, %v1924
    %1926 = vmatprep.mubr.f32.mxu0 0.0
    %1927 = vmatmul.mubr.f32.gmra.mxu0 %v1794
    %v1928 = vpop.f32.mrf.mxu0
    %v1929 = vadd.f32 0.0, %v1928
    %v1930 = vpop.f32.mrf.mxu0
    %v1931 = vadd.f32 0.0, %v1930
    %1932 = vmatprep.mubr.f32.mxu0 0.0
    %1933 = vmatmul.mubr.f32.gmra.mxu0 %v1797
    %v1934 = vpop.f32.mrf.mxu0
    %v1935 = vadd.f32 0.0, %v1934
    %v1936 = vpop.f32.mrf.mxu0
    %v1937 = vadd.f32 0.0, %v1936
    %1938 = vmatprep.mubr.f32.mxu0 0.0
    %1939 = vmatmul.mubr.f32.gmra.mxu0 %v1800
    %v1940 = vpop.f32.mrf.mxu0
    %v1941 = vadd.f32 0.0, %v1940
    %v1942 = vpop.f32.mrf.mxu0
    %v1943 = vadd.f32 0.0, %v1942
    %1944 = vmatprep.mubr.f32.mxu0 0.0
    %1945 = vmatmul.mubr.f32.gmra.mxu0 %v1803
    %v1946 = vpop.f32.mrf.mxu0
    %v1947 = vadd.f32 0.0, %v1946
    %v1948 = vpop.f32.mrf.mxu0
    %v1949 = vadd.f32 0.0, %v1948
    %1950 = vmatprep.mubr.f32.mxu0 0.0
    %1951 = vmatmul.mubr.f32.gmra.mxu0 %v1806
    %v1952 = vpop.f32.mrf.mxu0
    %v1953 = vadd.f32 0.0, %v1952
    %v1954 = vpop.f32.mrf.mxu0
    %v1955 = vadd.f32 0.0, %v1954
    %1956 = vmatprep.mubr.f32.mxu0 0.0
    %1957 = vmatmul.mubr.f32.gmra.mxu0 %v1809
    %v1958 = vpop.f32.mrf.mxu0
    %v1959 = vadd.f32 0.0, %v1958
    %v1960 = vpop.f32.mrf.mxu0
    %v1961 = vadd.f32 0.0, %v1960
    %1962 = vmatprep.mubr.f32.mxu0 0.0
    %1963 = vmatmul.mubr.f32.gmra.mxu0 %v1812
    %v1964 = vpop.f32.mrf.mxu0
    %v1965 = vadd.f32 0.0, %v1964
    %v1966 = vpop.f32.mrf.mxu0
    %v1967 = vadd.f32 0.0, %v1966
    %1968 = vmatprep.mubr.f32.mxu0 0.0
    %1969 = vmatmul.mubr.f32.gmra.mxu0 %v1815
    %v1970 = vpop.f32.mrf.mxu0
    %v1971 = vadd.f32 0.0, %v1970
    %v1972 = vpop.f32.mrf.mxu0
    %v1973 = vadd.f32 0.0, %v1972
    %1974 = vmatprep.mubr.f32.mxu0 0.0
    %1975 = vmatmul.mubr.f32.gmra.mxu0 %v1818
    %v1976 = vpop.f32.mrf.mxu0
    %v1977 = vadd.f32 0.0, %v1976
    %v1978 = vpop.f32.mrf.mxu0
    %v1979 = vadd.f32 0.0, %v1978
    %1980 = vdwg.mxu0
    %1981 = vmatprep.subr.mxu0 0.0
    %1982 = vmatpush1.msra.mxu0 0.0
    %1983 = vmatprep.subr.mxu0 0.0
    %1984 = vmatpush1.msra.mxu0 0.0
    %1985 = vmatprep.subr.mxu0 0.0
    %1986 = vmatpush1.msra.mxu0 0.0
    %1987 = vmatprep.subr.mxu0 0.0
    %1988 = vmatpush1.msra.mxu0 0.0
    %1989 = vmatprep.subr.mxu0 0.0
    %1990 = vmatpush1.msra.mxu0 0.0
    %1991 = vmatprep.subr.mxu0 0.0
    %1992 = vmatpush1.msra.mxu0 0.0
    %1993 = vmatprep.subr.mxu0 0.0
    %1994 = vmatpush1.msra.mxu0 0.0
    %1995 = vmatprep.subr.mxu0 0.0
    %1996 = vmatpush1.msra.mxu0 0.0
    %1997 = vmatprep.subr.mxu0 0.0
    %1998 = vmatpush1.msra.mxu0 %v1771
    %1999 = vmatprep.subr.mxu0 0.0
    %2000 = vmatpush1.msra.mxu0 %v1768
    %2001 = vmatprep.subr.mxu0 0.0
    %2002 = vmatpush1.msra.mxu0 %v1765
    %2003 = vmatprep.subr.mxu0 0.0
    %2004 = vmatpush1.msra.mxu0 %v1762
    %2005 = vmatprep.subr.mxu0 0.0
    %2006 = vmatpush1.msra.mxu0 %v1759
    %2007 = vmatprep.subr.mxu0 0.0
    %2008 = vmatpush1.msra.mxu0 %v1756
    %2009 = vmatprep.subr.mxu0 0.0
    %2010 = vmatpush1.msra.mxu0 %v1753
    %2011 = vmatprep.subr.mxu0 0.0
    %2012 = vmatpush1.msra.mxu0 %v1750
    %2013 = vmatprep.subr.mxu0 0.0
    %2014 = vmatpush2.msra.mxu0 0.0
    %2015 = vmatprep.subr.mxu0 0.0
    %2016 = vmatpush2.msra.mxu0 0.0
    %2017 = vmatprep.subr.mxu0 0.0
    %2018 = vmatpush2.msra.mxu0 0.0
    %2019 = vmatprep.subr.mxu0 0.0
    %2020 = vmatpush2.msra.mxu0 0.0
    %2021 = vmatprep.subr.mxu0 0.0
    %2022 = vmatpush2.msra.mxu0 0.0
    %2023 = vmatprep.subr.mxu0 0.0
    %2024 = vmatpush2.msra.mxu0 0.0
    %2025 = vmatprep.subr.mxu0 0.0
    %2026 = vmatpush2.msra.mxu0 0.0
    %2027 = vmatprep.subr.mxu0 0.0
    %2028 = vmatpush2.msra.mxu0 0.0
    %2029 = vmatprep.subr.mxu0 0.0
    %2030 = vmatpush2.msra.mxu0 0.0
    %2031 = vmatprep.subr.mxu0 0.0
    %2032 = vmatpush2.msra.mxu0 0.0
    %2033 = vmatprep.subr.mxu0 0.0
    %2034 = vmatpush2.msra.mxu0 0.0
    %2035 = vmatprep.subr.mxu0 0.0
    %2036 = vmatpush2.msra.mxu0 0.0
    %2037 = vmatprep.subr.mxu0 0.0
    %2038 = vmatpush2.msra.mxu0 0.0
    %2039 = vmatprep.subr.mxu0 0.0
    %2040 = vmatpush2.msra.mxu0 0.0
    %2041 = vmatprep.subr.mxu0 0.0
    %2042 = vmatpush2.msra.mxu0 0.0
    %2043 = vmatprep.subr.mxu0 0.0
    %2044 = vmatpush2.msra.mxu0 0.0
    %2045 = vmatprep.mubr.f32.mxu0 0.0
    %2046 = vmatmul.mubr.f32.gmra.mxu0 %v1773
    %v2047 = vpop.f32.mrf.mxu0
    %v2048 = vadd.f32 0.0, %v2047
    %v2049 = vpop.f32.mrf.mxu0
    %2050 = vmatprep.mubr.f32.mxu0 0.0
    %2051 = vmatmul.mubr.f32.gmra.mxu0 %v1776
    %v2052 = vpop.f32.mrf.mxu0
    %v2053 = vadd.f32 0.0, %v2052
    %v2054 = vpop.f32.mrf.mxu0
    %2055 = vmatprep.mubr.f32.mxu0 0.0
    %2056 = vmatmul.mubr.f32.gmra.mxu0 %v1779
    %v2057 = vpop.f32.mrf.mxu0
    %v2058 = vadd.f32 0.0, %v2057
    %v2059 = vpop.f32.mrf.mxu0
    %2060 = vmatprep.mubr.f32.mxu0 0.0
    %2061 = vmatmul.mubr.f32.gmra.mxu0 %v1782
    %v2062 = vpop.f32.mrf.mxu0
    %v2063 = vadd.f32 0.0, %v2062
    %v2064 = vpop.f32.mrf.mxu0
    %2065 = vmatprep.mubr.f32.mxu0 0.0
    %2066 = vmatmul.mubr.f32.gmra.mxu0 %v1785
    %v2067 = vpop.f32.mrf.mxu0
    %v2068 = vadd.f32 0.0, %v2067
    %v2069 = vpop.f32.mrf.mxu0
    %2070 = vmatprep.mubr.f32.mxu0 0.0
    %2071 = vmatmul.mubr.f32.gmra.mxu0 %v1788
    %v2072 = vpop.f32.mrf.mxu0
    %v2073 = vadd.f32 0.0, %v2072
    %v2074 = vpop.f32.mrf.mxu0
    %2075 = vmatprep.mubr.f32.mxu0 0.0
    %2076 = vmatmul.mubr.f32.gmra.mxu0 %v1791
    %v2077 = vpop.f32.mrf.mxu0
    %v2078 = vadd.f32 0.0, %v2077
    %v2079 = vpop.f32.mrf.mxu0
    %2080 = vmatprep.mubr.f32.mxu0 0.0
    %2081 = vmatmul.mubr.f32.gmra.mxu0 %v1794
    %v2082 = vpop.f32.mrf.mxu0
    %v2083 = vadd.f32 0.0, %v2082
    %v2084 = vpop.f32.mrf.mxu0
    %2085 = vmatprep.mubr.f32.mxu0 0.0
    %2086 = vmatmul.mubr.f32.gmra.mxu0 %v1797
    %v2087 = vpop.f32.mrf.mxu0
    %v2088 = vadd.f32 0.0, %v2087
    %v2089 = vpop.f32.mrf.mxu0
    %2090 = vmatprep.mubr.f32.mxu0 0.0
    %2091 = vmatmul.mubr.f32.gmra.mxu0 %v1800
    %v2092 = vpop.f32.mrf.mxu0
    %v2093 = vadd.f32 0.0, %v2092
    %v2094 = vpop.f32.mrf.mxu0
    %2095 = vmatprep.mubr.f32.mxu0 0.0
    %2096 = vmatmul.mubr.f32.gmra.mxu0 %v1803
    %v2097 = vpop.f32.mrf.mxu0
    %v2098 = vadd.f32 0.0, %v2097
    %v2099 = vpop.f32.mrf.mxu0
    %2100 = vmatprep.mubr.f32.mxu0 0.0
    %2101 = vmatmul.mubr.f32.gmra.mxu0 %v1806
    %v2102 = vpop.f32.mrf.mxu0
    %v2103 = vadd.f32 0.0, %v2102
    %v2104 = vpop.f32.mrf.mxu0
    %2105 = vmatprep.mubr.f32.mxu0 0.0
    %2106 = vmatmul.mubr.f32.gmra.mxu0 %v1809
    %v2107 = vpop.f32.mrf.mxu0
    %v2108 = vadd.f32 0.0, %v2107
    %v2109 = vpop.f32.mrf.mxu0
    %2110 = vmatprep.mubr.f32.mxu0 0.0
    %2111 = vmatmul.mubr.f32.gmra.mxu0 %v1812
    %v2112 = vpop.f32.mrf.mxu0
    %v2113 = vadd.f32 0.0, %v2112
    %v2114 = vpop.f32.mrf.mxu0
    %2115 = vmatprep.mubr.f32.mxu0 0.0
    %2116 = vmatmul.mubr.f32.gmra.mxu0 %v1815
    %v2117 = vpop.f32.mrf.mxu0
    %v2118 = vadd.f32 0.0, %v2117
    %v2119 = vpop.f32.mrf.mxu0
    %2120 = vmatprep.mubr.f32.mxu0 0.0
    %2121 = vmatmul.mubr.f32.gmra.mxu0 %v1818
    %v2122 = vpop.f32.mrf.mxu0
    %v2123 = vadd.f32 0.0, %v2122
    %v2124 = vpop.f32.mrf.mxu0
    %2125 = vdwg.mxu0
    %v2126 = vadd.f32 %v1683, %v1887
    %v2127 = vadd.f32 %v1684, %v1889
    %v2128 = vadd.f32 %v1685, %v2048
    %v2129 = vadd.f32 %v1686, %v1893
    %v2130 = vadd.f32 %v1687, %v1895
    %v2131 = vadd.f32 %v1688, %v2053
    %v2132 = vadd.f32 %v1689, %v1899
    %v2133 = vadd.f32 %v1690, %v1901
    %v2134 = vadd.f32 %v1691, %v2058
    %v2135 = vadd.f32 %v1692, %v1905
    %v2136 = vadd.f32 %v1693, %v1907
    %v2137 = vadd.f32 %v1694, %v2063
    %v2138 = vadd.f32 %v1695, %v1911
    %v2139 = vadd.f32 %v1696, %v1913
    %v2140 = vadd.f32 %v1697, %v2068
    %v2141 = vadd.f32 %v1698, %v1917
    %v2142 = vadd.f32 %v1699, %v1919
    %v2143 = vadd.f32 %v1700, %v2073
    %v2144 = vadd.f32 %v1701, %v1923
    %v2145 = vadd.f32 %v1702, %v1925
    %v2146 = vadd.f32 %v1703, %v2078
    %v2147 = vadd.f32 %v1704, %v1929
    %v2148 = vadd.f32 %v1705, %v1931
    %v2149 = vadd.f32 %v1706, %v2083
    %v2150 = vadd.f32 %v1707, %v1935
    %v2151 = vadd.f32 %v1708, %v1937
    %v2152 = vadd.f32 %v1709, %v2088
    %v2153 = vadd.f32 %v1710, %v1941
    %v2154 = vadd.f32 %v1711, %v1943
    %v2155 = vadd.f32 %v1712, %v2093
    %v2156 = vadd.f32 %v1713, %v1947
    %v2157 = vadd.f32 %v1714, %v1949
    %v2158 = vadd.f32 %v1715, %v2098
    %v2159 = vadd.f32 %v1716, %v1953
    %v2160 = vadd.f32 %v1717, %v1955
    %v2161 = vadd.f32 %v1718, %v2103
    %v2162 = vadd.f32 %v1719, %v1959
    %v2163 = vadd.f32 %v1720, %v1961
    %v2164 = vadd.f32 %v1721, %v2108
    %v2165 = vadd.f32 %v1722, %v1965
    %v2166 = vadd.f32 %v1723, %v1967
    %v2167 = vadd.f32 %v1724, %v2113
    %v2168 = vadd.f32 %v1725, %v1971
    %v2169 = vadd.f32 %v1726, %v1973
    %v2170 = vadd.f32 %v1727, %v2118
    %v2171 = vadd.f32 %v1728, %v1977
    %v2172 = vadd.f32 %v1729, %v1979
    %v2173 = vadd.f32 %v1730, %v2123
    %v2174 = vld [vmem:[%s0 + $0x5] sm:$0xff]
    %v2175 = vld [vmem:[%s0 + $0xd] sm:$0xff]
    %v2176 = vld [vmem:[%s0 + $0x1d] sm:$0xff]
    %v2177 = vld [vmem:[%s0 + $0x25] sm:$0xff]
    %v2178 = vld [vmem:[%s0 + $0x35] sm:$0xff]
    %v2179 = vld [vmem:[%s0 + $0x3d] sm:$0xff]
    %v2180 = vld [vmem:[%s0 + $0x4d] sm:$0xff]
    %v2181 = vld [vmem:[%s0 + $0x55] sm:$0xff]
    %v2182 = vld [vmem:[%s0 + $0x65] sm:$0xff]
    %v2183 = vld [vmem:[%s0 + $0x6d] sm:$0xff]
    %v2184 = vld [vmem:[%s0 + $0x7d] sm:$0xff]
    %v2185 = vld [vmem:[%s0 + $0x85] sm:$0xff]
    %v2186 = vld [vmem:[%s0 + $0x95] sm:$0xff]
    %v2187 = vld [vmem:[%s0 + $0x9d] sm:$0xff]
    %v2188 = vld [vmem:[%s0 + $0xad] sm:$0xff]
    %v2189 = vld [vmem:[%s0 + $0xb5] sm:$0xff]
    %s2190 = scalar_lea.vmem [#allocation2], 960
    %v2191 = vld [vmem:[%s2190] sm:$0xff]
    %v2192 = vld [vmem:[%s2190 + $0x8] sm:$0xff]
    %v2193 = vld [vmem:[%s2190 + $0x10] sm:$0xff]
    %v2194 = vld [vmem:[%s2190 + $0x18] sm:$0xff]
    %v2195 = vld [vmem:[%s2190 + $0x20] sm:$0xff]
    %v2196 = vld [vmem:[%s2190 + $0x28] sm:$0xff]
    %v2197 = vld [vmem:[%s2190 + $0x30] sm:$0xff]
    %v2198 = vld [vmem:[%s2190 + $0x38] sm:$0xff]
    %v2199 = vld [vmem:[%s2190 + $0x40] sm:$0xff]
    %v2200 = vld [vmem:[%s2190 + $0x48] sm:$0xff]
    %v2201 = vld [vmem:[%s2190 + $0x50] sm:$0xff]
    %v2202 = vld [vmem:[%s2190 + $0x58] sm:$0xff]
    %v2203 = vld [vmem:[%s2190 + $0x60] sm:$0xff]
    %v2204 = vld [vmem:[%s2190 + $0x68] sm:$0xff]
    %v2205 = vld [vmem:[%s2190 + $0x70] sm:$0xff]
    %v2206 = vld [vmem:[%s2190 + $0x78] sm:$0xff]
    %v2207 = vld [vmem:[%s2190 + $0x80] sm:$0xff]
    %v2208 = vld [vmem:[%s2190 + $0x88] sm:$0xff]
    %v2209 = vld [vmem:[%s2190 + $0x90] sm:$0xff]
    %v2210 = vld [vmem:[%s2190 + $0x98] sm:$0xff]
    %v2211 = vld [vmem:[%s2190 + $0xa0] sm:$0xff]
    %v2212 = vld [vmem:[%s2190 + $0xa8] sm:$0xff]
    %v2213 = vld [vmem:[%s2190 + $0xb0] sm:$0xff]
    %v2214 = vld [vmem:[%s2190 + $0xb8] sm:$0xff]
    %v2216 = vsel %vm136, %v2174, 0
    %v2219 = vsel %vm136, %v2175, 0
    %v2222 = vsel %vm136, %v2176, 0
    %v2225 = vsel %vm136, %v2177, 0
    %v2228 = vsel %vm136, %v2178, 0
    %v2231 = vsel %vm136, %v2179, 0
    %v2234 = vsel %vm136, %v2180, 0
    %v2237 = vsel %vm136, %v2181, 0
    %v2240 = vsel %vm136, %v2182, 0
    %v2243 = vsel %vm136, %v2183, 0
    %v2246 = vsel %vm136, %v2184, 0
    %v2249 = vsel %vm136, %v2185, 0
    %v2252 = vsel %vm136, %v2186, 0
    %v2255 = vsel %vm136, %v2187, 0
    %v2258 = vsel %vm136, %v2188, 0
    %v2261 = vsel %vm136, %v2189, 0
    %2263 = vmatprep.subr.mxu0 0.0
    %2264 = vmatpush1.msra.mxu0 0.0
    %2265 = vmatprep.subr.mxu0 0.0
    %2266 = vmatpush1.msra.mxu0 0.0
    %2267 = vmatprep.subr.mxu0 0.0
    %2268 = vmatpush1.msra.mxu0 0.0
    %2269 = vmatprep.subr.mxu0 0.0
    %2270 = vmatpush1.msra.mxu0 0.0
    %2271 = vmatprep.subr.mxu0 0.0
    %2272 = vmatpush1.msra.mxu0 0.0
    %2273 = vmatprep.subr.mxu0 0.0
    %2274 = vmatpush1.msra.mxu0 0.0
    %2275 = vmatprep.subr.mxu0 0.0
    %2276 = vmatpush1.msra.mxu0 0.0
    %2277 = vmatprep.subr.mxu0 0.0
    %2278 = vmatpush1.msra.mxu0 0.0
    %2279 = vmatprep.subr.mxu0 %v2213
    %2280 = vmatpush1.msra.mxu0 %v2212
    %2281 = vmatprep.subr.mxu0 %v2210
    %2282 = vmatpush1.msra.mxu0 %v2209
    %2283 = vmatprep.subr.mxu0 %v2207
    %2284 = vmatpush1.msra.mxu0 %v2206
    %2285 = vmatprep.subr.mxu0 %v2204
    %2286 = vmatpush1.msra.mxu0 %v2203
    %2287 = vmatprep.subr.mxu0 %v2201
    %2288 = vmatpush1.msra.mxu0 %v2200
    %2289 = vmatprep.subr.mxu0 %v2198
    %2290 = vmatpush1.msra.mxu0 %v2197
    %2291 = vmatprep.subr.mxu0 %v2195
    %2292 = vmatpush1.msra.mxu0 %v2194
    %2293 = vmatprep.subr.mxu0 %v2192
    %2294 = vmatpush1.msra.mxu0 %v2191
    %2295 = vmatprep.subr.mxu0 0.0
    %2296 = vmatpush2.msra.mxu0 0.0
    %2297 = vmatprep.subr.mxu0 0.0
    %2298 = vmatpush2.msra.mxu0 0.0
    %2299 = vmatprep.subr.mxu0 0.0
    %2300 = vmatpush2.msra.mxu0 0.0
    %2301 = vmatprep.subr.mxu0 0.0
    %2302 = vmatpush2.msra.mxu0 0.0
    %2303 = vmatprep.subr.mxu0 0.0
    %2304 = vmatpush2.msra.mxu0 0.0
    %2305 = vmatprep.subr.mxu0 0.0
    %2306 = vmatpush2.msra.mxu0 0.0
    %2307 = vmatprep.subr.mxu0 0.0
    %2308 = vmatpush2.msra.mxu0 0.0
    %2309 = vmatprep.subr.mxu0 0.0
    %2310 = vmatpush2.msra.mxu0 0.0
    %2311 = vmatprep.subr.mxu0 0.0
    %2312 = vmatpush2.msra.mxu0 0.0
    %2313 = vmatprep.subr.mxu0 0.0
    %2314 = vmatpush2.msra.mxu0 0.0
    %2315 = vmatprep.subr.mxu0 0.0
    %2316 = vmatpush2.msra.mxu0 0.0
    %2317 = vmatprep.subr.mxu0 0.0
    %2318 = vmatpush2.msra.mxu0 0.0
    %2319 = vmatprep.subr.mxu0 0.0
    %2320 = vmatpush2.msra.mxu0 0.0
    %2321 = vmatprep.subr.mxu0 0.0
    %2322 = vmatpush2.msra.mxu0 0.0
    %2323 = vmatprep.subr.mxu0 0.0
    %2324 = vmatpush2.msra.mxu0 0.0
    %2325 = vmatprep.subr.mxu0 0.0
    %2326 = vmatpush2.msra.mxu0 0.0
    %2327 = vmatprep.mubr.f32.mxu0 0.0
    %2328 = vmatmul.mubr.f32.gmra.mxu0 %v2216
    %v2329 = vpop.f32.mrf.mxu0
    %v2330 = vadd.f32 0.0, %v2329
    %v2331 = vpop.f32.mrf.mxu0
    %v2332 = vadd.f32 0.0, %v2331
    %2333 = vmatprep.mubr.f32.mxu0 0.0
    %2334 = vmatmul.mubr.f32.gmra.mxu0 %v2219
    %v2335 = vpop.f32.mrf.mxu0
    %v2336 = vadd.f32 0.0, %v2335
    %v2337 = vpop.f32.mrf.mxu0
    %v2338 = vadd.f32 0.0, %v2337
    %2339 = vmatprep.mubr.f32.mxu0 0.0
    %2340 = vmatmul.mubr.f32.gmra.mxu0 %v2222
    %v2341 = vpop.f32.mrf.mxu0
    %v2342 = vadd.f32 0.0, %v2341
    %v2343 = vpop.f32.mrf.mxu0
    %v2344 = vadd.f32 0.0, %v2343
    %2345 = vmatprep.mubr.f32.mxu0 0.0
    %2346 = vmatmul.mubr.f32.gmra.mxu0 %v2225
    %v2347 = vpop.f32.mrf.mxu0
    %v2348 = vadd.f32 0.0, %v2347
    %v2349 = vpop.f32.mrf.mxu0
    %v2350 = vadd.f32 0.0, %v2349
    %2351 = vmatprep.mubr.f32.mxu0 0.0
    %2352 = vmatmul.mubr.f32.gmra.mxu0 %v2228
    %v2353 = vpop.f32.mrf.mxu0
    %v2354 = vadd.f32 0.0, %v2353
    %v2355 = vpop.f32.mrf.mxu0
    %v2356 = vadd.f32 0.0, %v2355
    %2357 = vmatprep.mubr.f32.mxu0 0.0
    %2358 = vmatmul.mubr.f32.gmra.mxu0 %v2231
    %v2359 = vpop.f32.mrf.mxu0
    %v2360 = vadd.f32 0.0, %v2359
    %v2361 = vpop.f32.mrf.mxu0
    %v2362 = vadd.f32 0.0, %v2361
    %2363 = vmatprep.mubr.f32.mxu0 0.0
    %2364 = vmatmul.mubr.f32.gmra.mxu0 %v2234
    %v2365 = vpop.f32.mrf.mxu0
    %v2366 = vadd.f32 0.0, %v2365
    %v2367 = vpop.f32.mrf.mxu0
    %v2368 = vadd.f32 0.0, %v2367
    %2369 = vmatprep.mubr.f32.mxu0 0.0
    %2370 = vmatmul.mubr.f32.gmra.mxu0 %v2237
    %v2371 = vpop.f32.mrf.mxu0
    %v2372 = vadd.f32 0.0, %v2371
    %v2373 = vpop.f32.mrf.mxu0
    %v2374 = vadd.f32 0.0, %v2373
    %2375 = vmatprep.mubr.f32.mxu0 0.0
    %2376 = vmatmul.mubr.f32.gmra.mxu0 %v2240
    %v2377 = vpop.f32.mrf.mxu0
    %v2378 = vadd.f32 0.0, %v2377
    %v2379 = vpop.f32.mrf.mxu0
    %v2380 = vadd.f32 0.0, %v2379
    %2381 = vmatprep.mubr.f32.mxu0 0.0
    %2382 = vmatmul.mubr.f32.gmra.mxu0 %v2243
    %v2383 = vpop.f32.mrf.mxu0
    %v2384 = vadd.f32 0.0, %v2383
    %v2385 = vpop.f32.mrf.mxu0
    %v2386 = vadd.f32 0.0, %v2385
    %2387 = vmatprep.mubr.f32.mxu0 0.0
    %2388 = vmatmul.mubr.f32.gmra.mxu0 %v2246
    %v2389 = vpop.f32.mrf.mxu0
    %v2390 = vadd.f32 0.0, %v2389
    %v2391 = vpop.f32.mrf.mxu0
    %v2392 = vadd.f32 0.0, %v2391
    %2393 = vmatprep.mubr.f32.mxu0 0.0
    %2394 = vmatmul.mubr.f32.gmra.mxu0 %v2249
    %v2395 = vpop.f32.mrf.mxu0
    %v2396 = vadd.f32 0.0, %v2395
    %v2397 = vpop.f32.mrf.mxu0
    %v2398 = vadd.f32 0.0, %v2397
    %2399 = vmatprep.mubr.f32.mxu0 0.0
    %2400 = vmatmul.mubr.f32.gmra.mxu0 %v2252
    %v2401 = vpop.f32.mrf.mxu0
    %v2402 = vadd.f32 0.0, %v2401
    %v2403 = vpop.f32.mrf.mxu0
    %v2404 = vadd.f32 0.0, %v2403
    %2405 = vmatprep.mubr.f32.mxu0 0.0
    %2406 = vmatmul.mubr.f32.gmra.mxu0 %v2255
    %v2407 = vpop.f32.mrf.mxu0
    %v2408 = vadd.f32 0.0, %v2407
    %v2409 = vpop.f32.mrf.mxu0
    %v2410 = vadd.f32 0.0, %v2409
    %2411 = vmatprep.mubr.f32.mxu0 0.0
    %2412 = vmatmul.mubr.f32.gmra.mxu0 %v2258
    %v2413 = vpop.f32.mrf.mxu0
    %v2414 = vadd.f32 0.0, %v2413
    %v2415 = vpop.f32.mrf.mxu0
    %v2416 = vadd.f32 0.0, %v2415
    %2417 = vmatprep.mubr.f32.mxu0 0.0
    %2418 = vmatmul.mubr.f32.gmra.mxu0 %v2261
    %v2419 = vpop.f32.mrf.mxu0
    %v2420 = vadd.f32 0.0, %v2419
    %v2421 = vpop.f32.mrf.mxu0
    %v2422 = vadd.f32 0.0, %v2421
    %2423 = vdwg.mxu0
    %2424 = vmatprep.subr.mxu0 0.0
    %2425 = vmatpush1.msra.mxu0 0.0
    %2426 = vmatprep.subr.mxu0 0.0
    %2427 = vmatpush1.msra.mxu0 0.0
    %2428 = vmatprep.subr.mxu0 0.0
    %2429 = vmatpush1.msra.mxu0 0.0
    %2430 = vmatprep.subr.mxu0 0.0
    %2431 = vmatpush1.msra.mxu0 0.0
    %2432 = vmatprep.subr.mxu0 0.0
    %2433 = vmatpush1.msra.mxu0 0.0
    %2434 = vmatprep.subr.mxu0 0.0
    %2435 = vmatpush1.msra.mxu0 0.0
    %2436 = vmatprep.subr.mxu0 0.0
    %2437 = vmatpush1.msra.mxu0 0.0
    %2438 = vmatprep.subr.mxu0 0.0
    %2439 = vmatpush1.msra.mxu0 0.0
    %2440 = vmatprep.subr.mxu0 0.0
    %2441 = vmatpush1.msra.mxu0 %v2214
    %2442 = vmatprep.subr.mxu0 0.0
    %2443 = vmatpush1.msra.mxu0 %v2211
    %2444 = vmatprep.subr.mxu0 0.0
    %2445 = vmatpush1.msra.mxu0 %v2208
    %2446 = vmatprep.subr.mxu0 0.0
    %2447 = vmatpush1.msra.mxu0 %v2205
    %2448 = vmatprep.subr.mxu0 0.0
    %2449 = vmatpush1.msra.mxu0 %v2202
    %2450 = vmatprep.subr.mxu0 0.0
    %2451 = vmatpush1.msra.mxu0 %v2199
    %2452 = vmatprep.subr.mxu0 0.0
    %2453 = vmatpush1.msra.mxu0 %v2196
    %2454 = vmatprep.subr.mxu0 0.0
    %2455 = vmatpush1.msra.mxu0 %v2193
    %2456 = vmatprep.subr.mxu0 0.0
    %2457 = vmatpush2.msra.mxu0 0.0
    %2458 = vmatprep.subr.mxu0 0.0
    %2459 = vmatpush2.msra.mxu0 0.0
    %2460 = vmatprep.subr.mxu0 0.0
    %2461 = vmatpush2.msra.mxu0 0.0
    %2462 = vmatprep.subr.mxu0 0.0
    %2463 = vmatpush2.msra.mxu0 0.0
    %2464 = vmatprep.subr.mxu0 0.0
    %2465 = vmatpush2.msra.mxu0 0.0
    %2466 = vmatprep.subr.mxu0 0.0
    %2467 = vmatpush2.msra.mxu0 0.0
    %2468 = vmatprep.subr.mxu0 0.0
    %2469 = vmatpush2.msra.mxu0 0.0
    %2470 = vmatprep.subr.mxu0 0.0
    %2471 = vmatpush2.msra.mxu0 0.0
    %2472 = vmatprep.subr.mxu0 0.0
    %2473 = vmatpush2.msra.mxu0 0.0
    %2474 = vmatprep.subr.mxu0 0.0
    %2475 = vmatpush2.msra.mxu0 0.0
    %2476 = vmatprep.subr.mxu0 0.0
    %2477 = vmatpush2.msra.mxu0 0.0
    %2478 = vmatprep.subr.mxu0 0.0
    %2479 = vmatpush2.msra.mxu0 0.0
    %2480 = vmatprep.subr.mxu0 0.0
    %2481 = vmatpush2.msra.mxu0 0.0
    %2482 = vmatprep.subr.mxu0 0.0
    %2483 = vmatpush2.msra.mxu0 0.0
    %2484 = vmatprep.subr.mxu0 0.0
    %2485 = vmatpush2.msra.mxu0 0.0
    %2486 = vmatprep.subr.mxu0 0.0
    %2487 = vmatpush2.msra.mxu0 0.0
    %2488 = vmatprep.mubr.f32.mxu0 0.0
    %2489 = vmatmul.mubr.f32.gmra.mxu0 %v2216
    %v2490 = vpop.f32.mrf.mxu0
    %v2491 = vadd.f32 0.0, %v2490
    %v2492 = vpop.f32.mrf.mxu0
    %2493 = vmatprep.mubr.f32.mxu0 0.0
    %2494 = vmatmul.mubr.f32.gmra.mxu0 %v2219
    %v2495 = vpop.f32.mrf.mxu0
    %v2496 = vadd.f32 0.0, %v2495
    %v2497 = vpop.f32.mrf.mxu0
    %2498 = vmatprep.mubr.f32.mxu0 0.0
    %2499 = vmatmul.mubr.f32.gmra.mxu0 %v2222
    %v2500 = vpop.f32.mrf.mxu0
    %v2501 = vadd.f32 0.0, %v2500
    %v2502 = vpop.f32.mrf.mxu0
    %2503 = vmatprep.mubr.f32.mxu0 0.0
    %2504 = vmatmul.mubr.f32.gmra.mxu0 %v2225
    %v2505 = vpop.f32.mrf.mxu0
    %v2506 = vadd.f32 0.0, %v2505
    %v2507 = vpop.f32.mrf.mxu0
    %2508 = vmatprep.mubr.f32.mxu0 0.0
    %2509 = vmatmul.mubr.f32.gmra.mxu0 %v2228
    %v2510 = vpop.f32.mrf.mxu0
    %v2511 = vadd.f32 0.0, %v2510
    %v2512 = vpop.f32.mrf.mxu0
    %2513 = vmatprep.mubr.f32.mxu0 0.0
    %2514 = vmatmul.mubr.f32.gmra.mxu0 %v2231
    %v2515 = vpop.f32.mrf.mxu0
    %v2516 = vadd.f32 0.0, %v2515
    %v2517 = vpop.f32.mrf.mxu0
    %2518 = vmatprep.mubr.f32.mxu0 0.0
    %2519 = vmatmul.mubr.f32.gmra.mxu0 %v2234
    %v2520 = vpop.f32.mrf.mxu0
    %v2521 = vadd.f32 0.0, %v2520
    %v2522 = vpop.f32.mrf.mxu0
    %2523 = vmatprep.mubr.f32.mxu0 0.0
    %2524 = vmatmul.mubr.f32.gmra.mxu0 %v2237
    %v2525 = vpop.f32.mrf.mxu0
    %v2526 = vadd.f32 0.0, %v2525
    %v2527 = vpop.f32.mrf.mxu0
    %2528 = vmatprep.mubr.f32.mxu0 0.0
    %2529 = vmatmul.mubr.f32.gmra.mxu0 %v2240
    %v2530 = vpop.f32.mrf.mxu0
    %v2531 = vadd.f32 0.0, %v2530
    %v2532 = vpop.f32.mrf.mxu0
    %2533 = vmatprep.mubr.f32.mxu0 0.0
    %2534 = vmatmul.mubr.f32.gmra.mxu0 %v2243
    %v2535 = vpop.f32.mrf.mxu0
    %v2536 = vadd.f32 0.0, %v2535
    %v2537 = vpop.f32.mrf.mxu0
    %2538 = vmatprep.mubr.f32.mxu0 0.0
    %2539 = vmatmul.mubr.f32.gmra.mxu0 %v2246
    %v2540 = vpop.f32.mrf.mxu0
    %v2541 = vadd.f32 0.0, %v2540
    %v2542 = vpop.f32.mrf.mxu0
    %2543 = vmatprep.mubr.f32.mxu0 0.0
    %2544 = vmatmul.mubr.f32.gmra.mxu0 %v2249
    %v2545 = vpop.f32.mrf.mxu0
    %v2546 = vadd.f32 0.0, %v2545
    %v2547 = vpop.f32.mrf.mxu0
    %2548 = vmatprep.mubr.f32.mxu0 0.0
    %2549 = vmatmul.mubr.f32.gmra.mxu0 %v2252
    %v2550 = vpop.f32.mrf.mxu0
    %v2551 = vadd.f32 0.0, %v2550
    %v2552 = vpop.f32.mrf.mxu0
    %2553 = vmatprep.mubr.f32.mxu0 0.0
    %2554 = vmatmul.mubr.f32.gmra.mxu0 %v2255
    %v2555 = vpop.f32.mrf.mxu0
    %v2556 = vadd.f32 0.0, %v2555
    %v2557 = vpop.f32.mrf.mxu0
    %2558 = vmatprep.mubr.f32.mxu0 0.0
    %2559 = vmatmul.mubr.f32.gmra.mxu0 %v2258
    %v2560 = vpop.f32.mrf.mxu0
    %v2561 = vadd.f32 0.0, %v2560
    %v2562 = vpop.f32.mrf.mxu0
    %2563 = vmatprep.mubr.f32.mxu0 0.0
    %2564 = vmatmul.mubr.f32.gmra.mxu0 %v2261
    %v2565 = vpop.f32.mrf.mxu0
    %v2566 = vadd.f32 0.0, %v2565
    %v2567 = vpop.f32.mrf.mxu0
    %2568 = vdwg.mxu0
    %v2569 = vadd.f32 %v2126, %v2330
    %v2570 = vadd.f32 %v2127, %v2332
    %v2571 = vadd.f32 %v2128, %v2491
    %v2572 = vadd.f32 %v2129, %v2336
    %v2573 = vadd.f32 %v2130, %v2338
    %v2574 = vadd.f32 %v2131, %v2496
    %v2575 = vadd.f32 %v2132, %v2342
    %v2576 = vadd.f32 %v2133, %v2344
    %v2577 = vadd.f32 %v2134, %v2501
    %v2578 = vadd.f32 %v2135, %v2348
    %v2579 = vadd.f32 %v2136, %v2350
    %v2580 = vadd.f32 %v2137, %v2506
    %v2581 = vadd.f32 %v2138, %v2354
    %v2582 = vadd.f32 %v2139, %v2356
    %v2583 = vadd.f32 %v2140, %v2511
    %v2584 = vadd.f32 %v2141, %v2360
    %v2585 = vadd.f32 %v2142, %v2362
    %v2586 = vadd.f32 %v2143, %v2516
    %v2587 = vadd.f32 %v2144, %v2366
    %v2588 = vadd.f32 %v2145, %v2368
    %v2589 = vadd.f32 %v2146, %v2521
    %v2590 = vadd.f32 %v2147, %v2372
    %v2591 = vadd.f32 %v2148, %v2374
    %v2592 = vadd.f32 %v2149, %v2526
    %v2593 = vadd.f32 %v2150, %v2378
    %v2594 = vadd.f32 %v2151, %v2380
    %v2595 = vadd.f32 %v2152, %v2531
    %v2596 = vadd.f32 %v2153, %v2384
    %v2597 = vadd.f32 %v2154, %v2386
    %v2598 = vadd.f32 %v2155, %v2536
    %v2599 = vadd.f32 %v2156, %v2390
    %v2600 = vadd.f32 %v2157, %v2392
    %v2601 = vadd.f32 %v2158, %v2541
    %v2602 = vadd.f32 %v2159, %v2396
    %v2603 = vadd.f32 %v2160, %v2398
    %v2604 = vadd.f32 %v2161, %v2546
    %v2605 = vadd.f32 %v2162, %v2402
    %v2606 = vadd.f32 %v2163, %v2404
    %v2607 = vadd.f32 %v2164, %v2551
    %v2608 = vadd.f32 %v2165, %v2408
    %v2609 = vadd.f32 %v2166, %v2410
    %v2610 = vadd.f32 %v2167, %v2556
    %v2611 = vadd.f32 %v2168, %v2414
    %v2612 = vadd.f32 %v2169, %v2416
    %v2613 = vadd.f32 %v2170, %v2561
    %v2614 = vadd.f32 %v2171, %v2420
    %v2615 = vadd.f32 %v2172, %v2422
    %v2616 = vadd.f32 %v2173, %v2566
    %v2617 = vld [vmem:[%s0 + $0x6] sm:$0xff]
    %v2618 = vld [vmem:[%s0 + $0xe] sm:$0xff]
    %v2619 = vld [vmem:[%s0 + $0x1e] sm:$0xff]
    %v2620 = vld [vmem:[%s0 + $0x26] sm:$0xff]
    %v2621 = vld [vmem:[%s0 + $0x36] sm:$0xff]
    %v2622 = vld [vmem:[%s0 + $0x3e] sm:$0xff]
    %v2623 = vld [vmem:[%s0 + $0x4e] sm:$0xff]
    %v2624 = vld [vmem:[%s0 + $0x56] sm:$0xff]
    %v2625 = vld [vmem:[%s0 + $0x66] sm:$0xff]
    %v2626 = vld [vmem:[%s0 + $0x6e] sm:$0xff]
    %v2627 = vld [vmem:[%s0 + $0x7e] sm:$0xff]
    %v2628 = vld [vmem:[%s0 + $0x86] sm:$0xff]
    %v2629 = vld [vmem:[%s0 + $0x96] sm:$0xff]
    %v2630 = vld [vmem:[%s0 + $0x9e] sm:$0xff]
    %v2631 = vld [vmem:[%s0 + $0xae] sm:$0xff]
    %v2632 = vld [vmem:[%s0 + $0xb6] sm:$0xff]
    %s2633 = scalar_lea.vmem [#allocation2], 1152
    %v2634 = vld [vmem:[%s2633] sm:$0xff]
    %v2635 = vld [vmem:[%s2633 + $0x8] sm:$0xff]
    %v2636 = vld [vmem:[%s2633 + $0x10] sm:$0xff]
    %v2637 = vld [vmem:[%s2633 + $0x18] sm:$0xff]
    %v2638 = vld [vmem:[%s2633 + $0x20] sm:$0xff]
    %v2639 = vld [vmem:[%s2633 + $0x28] sm:$0xff]
    %v2640 = vld [vmem:[%s2633 + $0x30] sm:$0xff]
    %v2641 = vld [vmem:[%s2633 + $0x38] sm:$0xff]
    %v2642 = vld [vmem:[%s2633 + $0x40] sm:$0xff]
    %v2643 = vld [vmem:[%s2633 + $0x48] sm:$0xff]
    %v2644 = vld [vmem:[%s2633 + $0x50] sm:$0xff]
    %v2645 = vld [vmem:[%s2633 + $0x58] sm:$0xff]
    %v2646 = vld [vmem:[%s2633 + $0x60] sm:$0xff]
    %v2647 = vld [vmem:[%s2633 + $0x68] sm:$0xff]
    %v2648 = vld [vmem:[%s2633 + $0x70] sm:$0xff]
    %v2649 = vld [vmem:[%s2633 + $0x78] sm:$0xff]
    %v2650 = vld [vmem:[%s2633 + $0x80] sm:$0xff]
    %v2651 = vld [vmem:[%s2633 + $0x88] sm:$0xff]
    %v2652 = vld [vmem:[%s2633 + $0x90] sm:$0xff]
    %v2653 = vld [vmem:[%s2633 + $0x98] sm:$0xff]
    %v2654 = vld [vmem:[%s2633 + $0xa0] sm:$0xff]
    %v2655 = vld [vmem:[%s2633 + $0xa8] sm:$0xff]
    %v2656 = vld [vmem:[%s2633 + $0xb0] sm:$0xff]
    %v2657 = vld [vmem:[%s2633 + $0xb8] sm:$0xff]
    %v2659 = vsel %vm136, %v2617, 0
    %v2662 = vsel %vm136, %v2618, 0
    %v2665 = vsel %vm136, %v2619, 0
    %v2668 = vsel %vm136, %v2620, 0
    %v2671 = vsel %vm136, %v2621, 0
    %v2674 = vsel %vm136, %v2622, 0
    %v2677 = vsel %vm136, %v2623, 0
    %v2680 = vsel %vm136, %v2624, 0
    %v2683 = vsel %vm136, %v2625, 0
    %v2686 = vsel %vm136, %v2626, 0
    %v2689 = vsel %vm136, %v2627, 0
    %v2692 = vsel %vm136, %v2628, 0
    %v2695 = vsel %vm136, %v2629, 0
    %v2698 = vsel %vm136, %v2630, 0
    %v2701 = vsel %vm136, %v2631, 0
    %v2704 = vsel %vm136, %v2632, 0
    %2706 = vmatprep.subr.mxu0 0.0
    %2707 = vmatpush1.msra.mxu0 0.0
    %2708 = vmatprep.subr.mxu0 0.0
    %2709 = vmatpush1.msra.mxu0 0.0
    %2710 = vmatprep.subr.mxu0 0.0
    %2711 = vmatpush1.msra.mxu0 0.0
    %2712 = vmatprep.subr.mxu0 0.0
    %2713 = vmatpush1.msra.mxu0 0.0
    %2714 = vmatprep.subr.mxu0 0.0
    %2715 = vmatpush1.msra.mxu0 0.0
    %2716 = vmatprep.subr.mxu0 0.0
    %2717 = vmatpush1.msra.mxu0 0.0
    %2718 = vmatprep.subr.mxu0 0.0
    %2719 = vmatpush1.msra.mxu0 0.0
    %2720 = vmatprep.subr.mxu0 0.0
    %2721 = vmatpush1.msra.mxu0 0.0
    %2722 = vmatprep.subr.mxu0 %v2656
    %2723 = vmatpush1.msra.mxu0 %v2655
    %2724 = vmatprep.subr.mxu0 %v2653
    %2725 = vmatpush1.msra.mxu0 %v2652
    %2726 = vmatprep.subr.mxu0 %v2650
    %2727 = vmatpush1.msra.mxu0 %v2649
    %2728 = vmatprep.subr.mxu0 %v2647
    %2729 = vmatpush1.msra.mxu0 %v2646
    %2730 = vmatprep.subr.mxu0 %v2644
    %2731 = vmatpush1.msra.mxu0 %v2643
    %2732 = vmatprep.subr.mxu0 %v2641
    %2733 = vmatpush1.msra.mxu0 %v2640
    %2734 = vmatprep.subr.mxu0 %v2638
    %2735 = vmatpush1.msra.mxu0 %v2637
    %2736 = vmatprep.subr.mxu0 %v2635
    %2737 = vmatpush1.msra.mxu0 %v2634
    %2738 = vmatprep.subr.mxu0 0.0
    %2739 = vmatpush2.msra.mxu0 0.0
    %2740 = vmatprep.subr.mxu0 0.0
    %2741 = vmatpush2.msra.mxu0 0.0
    %2742 = vmatprep.subr.mxu0 0.0
    %2743 = vmatpush2.msra.mxu0 0.0
    %2744 = vmatprep.subr.mxu0 0.0
    %2745 = vmatpush2.msra.mxu0 0.0
    %2746 = vmatprep.subr.mxu0 0.0
    %2747 = vmatpush2.msra.mxu0 0.0
    %2748 = vmatprep.subr.mxu0 0.0
    %2749 = vmatpush2.msra.mxu0 0.0
    %2750 = vmatprep.subr.mxu0 0.0
    %2751 = vmatpush2.msra.mxu0 0.0
    %2752 = vmatprep.subr.mxu0 0.0
    %2753 = vmatpush2.msra.mxu0 0.0
    %2754 = vmatprep.subr.mxu0 0.0
    %2755 = vmatpush2.msra.mxu0 0.0
    %2756 = vmatprep.subr.mxu0 0.0
    %2757 = vmatpush2.msra.mxu0 0.0
    %2758 = vmatprep.subr.mxu0 0.0
    %2759 = vmatpush2.msra.mxu0 0.0
    %2760 = vmatprep.subr.mxu0 0.0
    %2761 = vmatpush2.msra.mxu0 0.0
    %2762 = vmatprep.subr.mxu0 0.0
    %2763 = vmatpush2.msra.mxu0 0.0
    %2764 = vmatprep.subr.mxu0 0.0
    %2765 = vmatpush2.msra.mxu0 0.0
    %2766 = vmatprep.subr.mxu0 0.0
    %2767 = vmatpush2.msra.mxu0 0.0
    %2768 = vmatprep.subr.mxu0 0.0
    %2769 = vmatpush2.msra.mxu0 0.0
    %2770 = vmatprep.mubr.f32.mxu0 0.0
    %2771 = vmatmul.mubr.f32.gmra.mxu0 %v2659
    %v2772 = vpop.f32.mrf.mxu0
    %v2773 = vadd.f32 0.0, %v2772
    %v2774 = vpop.f32.mrf.mxu0
    %v2775 = vadd.f32 0.0, %v2774
    %2776 = vmatprep.mubr.f32.mxu0 0.0
    %2777 = vmatmul.mubr.f32.gmra.mxu0 %v2662
    %v2778 = vpop.f32.mrf.mxu0
    %v2779 = vadd.f32 0.0, %v2778
    %v2780 = vpop.f32.mrf.mxu0
    %v2781 = vadd.f32 0.0, %v2780
    %2782 = vmatprep.mubr.f32.mxu0 0.0
    %2783 = vmatmul.mubr.f32.gmra.mxu0 %v2665
    %v2784 = vpop.f32.mrf.mxu0
    %v2785 = vadd.f32 0.0, %v2784
    %v2786 = vpop.f32.mrf.mxu0
    %v2787 = vadd.f32 0.0, %v2786
    %2788 = vmatprep.mubr.f32.mxu0 0.0
    %2789 = vmatmul.mubr.f32.gmra.mxu0 %v2668
    %v2790 = vpop.f32.mrf.mxu0
    %v2791 = vadd.f32 0.0, %v2790
    %v2792 = vpop.f32.mrf.mxu0
    %v2793 = vadd.f32 0.0, %v2792
    %2794 = vmatprep.mubr.f32.mxu0 0.0
    %2795 = vmatmul.mubr.f32.gmra.mxu0 %v2671
    %v2796 = vpop.f32.mrf.mxu0
    %v2797 = vadd.f32 0.0, %v2796
    %v2798 = vpop.f32.mrf.mxu0
    %v2799 = vadd.f32 0.0, %v2798
    %2800 = vmatprep.mubr.f32.mxu0 0.0
    %2801 = vmatmul.mubr.f32.gmra.mxu0 %v2674
    %v2802 = vpop.f32.mrf.mxu0
    %v2803 = vadd.f32 0.0, %v2802
    %v2804 = vpop.f32.mrf.mxu0
    %v2805 = vadd.f32 0.0, %v2804
    %2806 = vmatprep.mubr.f32.mxu0 0.0
    %2807 = vmatmul.mubr.f32.gmra.mxu0 %v2677
    %v2808 = vpop.f32.mrf.mxu0
    %v2809 = vadd.f32 0.0, %v2808
    %v2810 = vpop.f32.mrf.mxu0
    %v2811 = vadd.f32 0.0, %v2810
    %2812 = vmatprep.mubr.f32.mxu0 0.0
    %2813 = vmatmul.mubr.f32.gmra.mxu0 %v2680
    %v2814 = vpop.f32.mrf.mxu0
    %v2815 = vadd.f32 0.0, %v2814
    %v2816 = vpop.f32.mrf.mxu0
    %v2817 = vadd.f32 0.0, %v2816
    %2818 = vmatprep.mubr.f32.mxu0 0.0
    %2819 = vmatmul.mubr.f32.gmra.mxu0 %v2683
    %v2820 = vpop.f32.mrf.mxu0
    %v2821 = vadd.f32 0.0, %v2820
    %v2822 = vpop.f32.mrf.mxu0
    %v2823 = vadd.f32 0.0, %v2822
    %2824 = vmatprep.mubr.f32.mxu0 0.0
    %2825 = vmatmul.mubr.f32.gmra.mxu0 %v2686
    %v2826 = vpop.f32.mrf.mxu0
    %v2827 = vadd.f32 0.0, %v2826
    %v2828 = vpop.f32.mrf.mxu0
    %v2829 = vadd.f32 0.0, %v2828
    %2830 = vmatprep.mubr.f32.mxu0 0.0
    %2831 = vmatmul.mubr.f32.gmra.mxu0 %v2689
    %v2832 = vpop.f32.mrf.mxu0
    %v2833 = vadd.f32 0.0, %v2832
    %v2834 = vpop.f32.mrf.mxu0
    %v2835 = vadd.f32 0.0, %v2834
    %2836 = vmatprep.mubr.f32.mxu0 0.0
    %2837 = vmatmul.mubr.f32.gmra.mxu0 %v2692
    %v2838 = vpop.f32.mrf.mxu0
    %v2839 = vadd.f32 0.0, %v2838
    %v2840 = vpop.f32.mrf.mxu0
    %v2841 = vadd.f32 0.0, %v2840
    %2842 = vmatprep.mubr.f32.mxu0 0.0
    %2843 = vmatmul.mubr.f32.gmra.mxu0 %v2695
    %v2844 = vpop.f32.mrf.mxu0
    %v2845 = vadd.f32 0.0, %v2844
    %v2846 = vpop.f32.mrf.mxu0
    %v2847 = vadd.f32 0.0, %v2846
    %2848 = vmatprep.mubr.f32.mxu0 0.0
    %2849 = vmatmul.mubr.f32.gmra.mxu0 %v2698
    %v2850 = vpop.f32.mrf.mxu0
    %v2851 = vadd.f32 0.0, %v2850
    %v2852 = vpop.f32.mrf.mxu0
    %v2853 = vadd.f32 0.0, %v2852
    %2854 = vmatprep.mubr.f32.mxu0 0.0
    %2855 = vmatmul.mubr.f32.gmra.mxu0 %v2701
    %v2856 = vpop.f32.mrf.mxu0
    %v2857 = vadd.f32 0.0, %v2856
    %v2858 = vpop.f32.mrf.mxu0
    %v2859 = vadd.f32 0.0, %v2858
    %2860 = vmatprep.mubr.f32.mxu0 0.0
    %2861 = vmatmul.mubr.f32.gmra.mxu0 %v2704
    %v2862 = vpop.f32.mrf.mxu0
    %v2863 = vadd.f32 0.0, %v2862
    %v2864 = vpop.f32.mrf.mxu0
    %v2865 = vadd.f32 0.0, %v2864
    %2866 = vdwg.mxu0
    %2867 = vmatprep.subr.mxu0 0.0
    %2868 = vmatpush1.msra.mxu0 0.0
    %2869 = vmatprep.subr.mxu0 0.0
    %2870 = vmatpush1.msra.mxu0 0.0
    %2871 = vmatprep.subr.mxu0 0.0
    %2872 = vmatpush1.msra.mxu0 0.0
    %2873 = vmatprep.subr.mxu0 0.0
    %2874 = vmatpush1.msra.mxu0 0.0
    %2875 = vmatprep.subr.mxu0 0.0
    %2876 = vmatpush1.msra.mxu0 0.0
    %2877 = vmatprep.subr.mxu0 0.0
    %2878 = vmatpush1.msra.mxu0 0.0
    %2879 = vmatprep.subr.mxu0 0.0
    %2880 = vmatpush1.msra.mxu0 0.0
    %2881 = vmatprep.subr.mxu0 0.0
    %2882 = vmatpush1.msra.mxu0 0.0
    %2883 = vmatprep.subr.mxu0 0.0
    %2884 = vmatpush1.msra.mxu0 %v2657
    %2885 = vmatprep.subr.mxu0 0.0
    %2886 = vmatpush1.msra.mxu0 %v2654
    %2887 = vmatprep.subr.mxu0 0.0
    %2888 = vmatpush1.msra.mxu0 %v2651
    %2889 = vmatprep.subr.mxu0 0.0
    %2890 = vmatpush1.msra.mxu0 %v2648
    %2891 = vmatprep.subr.mxu0 0.0
    %2892 = vmatpush1.msra.mxu0 %v2645
    %2893 = vmatprep.subr.mxu0 0.0
    %2894 = vmatpush1.msra.mxu0 %v2642
    %2895 = vmatprep.subr.mxu0 0.0
    %2896 = vmatpush1.msra.mxu0 %v2639
    %2897 = vmatprep.subr.mxu0 0.0
    %2898 = vmatpush1.msra.mxu0 %v2636
    %2899 = vmatprep.subr.mxu0 0.0
    %2900 = vmatpush2.msra.mxu0 0.0
    %2901 = vmatprep.subr.mxu0 0.0
    %2902 = vmatpush2.msra.mxu0 0.0
    %2903 = vmatprep.subr.mxu0 0.0
    %2904 = vmatpush2.msra.mxu0 0.0
    %2905 = vmatprep.subr.mxu0 0.0
    %2906 = vmatpush2.msra.mxu0 0.0
    %2907 = vmatprep.subr.mxu0 0.0
    %2908 = vmatpush2.msra.mxu0 0.0
    %2909 = vmatprep.subr.mxu0 0.0
    %2910 = vmatpush2.msra.mxu0 0.0
    %2911 = vmatprep.subr.mxu0 0.0
    %2912 = vmatpush2.msra.mxu0 0.0
    %2913 = vmatprep.subr.mxu0 0.0
    %2914 = vmatpush2.msra.mxu0 0.0
    %2915 = vmatprep.subr.mxu0 0.0
    %2916 = vmatpush2.msra.mxu0 0.0
    %2917 = vmatprep.subr.mxu0 0.0
    %2918 = vmatpush2.msra.mxu0 0.0
    %2919 = vmatprep.subr.mxu0 0.0
    %2920 = vmatpush2.msra.mxu0 0.0
    %2921 = vmatprep.subr.mxu0 0.0
    %2922 = vmatpush2.msra.mxu0 0.0
    %2923 = vmatprep.subr.mxu0 0.0
    %2924 = vmatpush2.msra.mxu0 0.0
    %2925 = vmatprep.subr.mxu0 0.0
    %2926 = vmatpush2.msra.mxu0 0.0
    %2927 = vmatprep.subr.mxu0 0.0
    %2928 = vmatpush2.msra.mxu0 0.0
    %2929 = vmatprep.subr.mxu0 0.0
    %2930 = vmatpush2.msra.mxu0 0.0
    %2931 = vmatprep.mubr.f32.mxu0 0.0
    %2932 = vmatmul.mubr.f32.gmra.mxu0 %v2659
    %v2933 = vpop.f32.mrf.mxu0
    %v2934 = vadd.f32 0.0, %v2933
    %v2935 = vpop.f32.mrf.mxu0
    %2936 = vmatprep.mubr.f32.mxu0 0.0
    %2937 = vmatmul.mubr.f32.gmra.mxu0 %v2662
    %v2938 = vpop.f32.mrf.mxu0
    %v2939 = vadd.f32 0.0, %v2938
    %v2940 = vpop.f32.mrf.mxu0
    %2941 = vmatprep.mubr.f32.mxu0 0.0
    %2942 = vmatmul.mubr.f32.gmra.mxu0 %v2665
    %v2943 = vpop.f32.mrf.mxu0
    %v2944 = vadd.f32 0.0, %v2943
    %v2945 = vpop.f32.mrf.mxu0
    %2946 = vmatprep.mubr.f32.mxu0 0.0
    %2947 = vmatmul.mubr.f32.gmra.mxu0 %v2668
    %v2948 = vpop.f32.mrf.mxu0
    %v2949 = vadd.f32 0.0, %v2948
    %v2950 = vpop.f32.mrf.mxu0
    %2951 = vmatprep.mubr.f32.mxu0 0.0
    %2952 = vmatmul.mubr.f32.gmra.mxu0 %v2671
    %v2953 = vpop.f32.mrf.mxu0
    %v2954 = vadd.f32 0.0, %v2953
    %v2955 = vpop.f32.mrf.mxu0
    %2956 = vmatprep.mubr.f32.mxu0 0.0
    %2957 = vmatmul.mubr.f32.gmra.mxu0 %v2674
    %v2958 = vpop.f32.mrf.mxu0
    %v2959 = vadd.f32 0.0, %v2958
    %v2960 = vpop.f32.mrf.mxu0
    %2961 = vmatprep.mubr.f32.mxu0 0.0
    %2962 = vmatmul.mubr.f32.gmra.mxu0 %v2677
    %v2963 = vpop.f32.mrf.mxu0
    %v2964 = vadd.f32 0.0, %v2963
    %v2965 = vpop.f32.mrf.mxu0
    %2966 = vmatprep.mubr.f32.mxu0 0.0
    %2967 = vmatmul.mubr.f32.gmra.mxu0 %v2680
    %v2968 = vpop.f32.mrf.mxu0
    %v2969 = vadd.f32 0.0, %v2968
    %v2970 = vpop.f32.mrf.mxu0
    %2971 = vmatprep.mubr.f32.mxu0 0.0
    %2972 = vmatmul.mubr.f32.gmra.mxu0 %v2683
    %v2973 = vpop.f32.mrf.mxu0
    %v2974 = vadd.f32 0.0, %v2973
    %v2975 = vpop.f32.mrf.mxu0
    %2976 = vmatprep.mubr.f32.mxu0 0.0
    %2977 = vmatmul.mubr.f32.gmra.mxu0 %v2686
    %v2978 = vpop.f32.mrf.mxu0
    %v2979 = vadd.f32 0.0, %v2978
    %v2980 = vpop.f32.mrf.mxu0
    %2981 = vmatprep.mubr.f32.mxu0 0.0
    %2982 = vmatmul.mubr.f32.gmra.mxu0 %v2689
    %v2983 = vpop.f32.mrf.mxu0
    %v2984 = vadd.f32 0.0, %v2983
    %v2985 = vpop.f32.mrf.mxu0
    %2986 = vmatprep.mubr.f32.mxu0 0.0
    %2987 = vmatmul.mubr.f32.gmra.mxu0 %v2692
    %v2988 = vpop.f32.mrf.mxu0
    %v2989 = vadd.f32 0.0, %v2988
    %v2990 = vpop.f32.mrf.mxu0
    %2991 = vmatprep.mubr.f32.mxu0 0.0
    %2992 = vmatmul.mubr.f32.gmra.mxu0 %v2695
    %v2993 = vpop.f32.mrf.mxu0
    %v2994 = vadd.f32 0.0, %v2993
    %v2995 = vpop.f32.mrf.mxu0
    %2996 = vmatprep.mubr.f32.mxu0 0.0
    %2997 = vmatmul.mubr.f32.gmra.mxu0 %v2698
    %v2998 = vpop.f32.mrf.mxu0
    %v2999 = vadd.f32 0.0, %v2998
    %v3000 = vpop.f32.mrf.mxu0
    %3001 = vmatprep.mubr.f32.mxu0 0.0
    %3002 = vmatmul.mubr.f32.gmra.mxu0 %v2701
    %v3003 = vpop.f32.mrf.mxu0
    %v3004 = vadd.f32 0.0, %v3003
    %v3005 = vpop.f32.mrf.mxu0
    %3006 = vmatprep.mubr.f32.mxu0 0.0
    %3007 = vmatmul.mubr.f32.gmra.mxu0 %v2704
    %v3008 = vpop.f32.mrf.mxu0
    %v3009 = vadd.f32 0.0, %v3008
    %v3010 = vpop.f32.mrf.mxu0
    %3011 = vdwg.mxu0
    %v3012 = vadd.f32 %v2569, %v2773
    %v3013 = vadd.f32 %v2570, %v2775
    %v3014 = vadd.f32 %v2571, %v2934
    %v3015 = vadd.f32 %v2572, %v2779
    %v3016 = vadd.f32 %v2573, %v2781
    %v3017 = vadd.f32 %v2574, %v2939
    %v3018 = vadd.f32 %v2575, %v2785
    %v3019 = vadd.f32 %v2576, %v2787
    %v3020 = vadd.f32 %v2577, %v2944
    %v3021 = vadd.f32 %v2578, %v2791
    %v3022 = vadd.f32 %v2579, %v2793
    %v3023 = vadd.f32 %v2580, %v2949
    %v3024 = vadd.f32 %v2581, %v2797
    %v3025 = vadd.f32 %v2582, %v2799
    %v3026 = vadd.f32 %v2583, %v2954
    %v3027 = vadd.f32 %v2584, %v2803
    %v3028 = vadd.f32 %v2585, %v2805
    %v3029 = vadd.f32 %v2586, %v2959
    %v3030 = vadd.f32 %v2587, %v2809
    %v3031 = vadd.f32 %v2588, %v2811
    %v3032 = vadd.f32 %v2589, %v2964
    %v3033 = vadd.f32 %v2590, %v2815
    %v3034 = vadd.f32 %v2591, %v2817
    %v3035 = vadd.f32 %v2592, %v2969
    %v3036 = vadd.f32 %v2593, %v2821
    %v3037 = vadd.f32 %v2594, %v2823
    %v3038 = vadd.f32 %v2595, %v2974
    %v3039 = vadd.f32 %v2596, %v2827
    %v3040 = vadd.f32 %v2597, %v2829
    %v3041 = vadd.f32 %v2598, %v2979
    %v3042 = vadd.f32 %v2599, %v2833
    %v3043 = vadd.f32 %v2600, %v2835
    %v3044 = vadd.f32 %v2601, %v2984
    %v3045 = vadd.f32 %v2602, %v2839
    %v3046 = vadd.f32 %v2603, %v2841
    %v3047 = vadd.f32 %v2604, %v2989
    %v3048 = vadd.f32 %v2605, %v2845
    %v3049 = vadd.f32 %v2606, %v2847
    %v3050 = vadd.f32 %v2607, %v2994
    %v3051 = vadd.f32 %v2608, %v2851
    %v3052 = vadd.f32 %v2609, %v2853
    %v3053 = vadd.f32 %v2610, %v2999
    %v3054 = vadd.f32 %v2611, %v2857
    %v3055 = vadd.f32 %v2612, %v2859
    %v3056 = vadd.f32 %v2613, %v3004
    %v3057 = vadd.f32 %v2614, %v2863
    %v3058 = vadd.f32 %v2615, %v2865
    %v3059 = vadd.f32 %v2616, %v3009
    %v3060 = vmul.f32 %v3012, 0.5
    %v3061 = vmul.f32 %v3013, 0.5
    %v3062 = vmul.f32 %v3014, 0.5
    %v3063 = vmul.f32 %v3015, 0.5
    %v3064 = vmul.f32 %v3016, 0.5
    %v3065 = vmul.f32 %v3017, 0.5
    %v3066 = vmul.f32 %v3018, 0.5
    %v3067 = vmul.f32 %v3019, 0.5
    %v3068 = vmul.f32 %v3020, 0.5
    %v3069 = vmul.f32 %v3021, 0.5
    %v3070 = vmul.f32 %v3022, 0.5
    %v3071 = vmul.f32 %v3023, 0.5
    %v3072 = vmul.f32 %v3024, 0.5
    %v3073 = vmul.f32 %v3025, 0.5
    %v3074 = vmul.f32 %v3026, 0.5
    %v3075 = vmul.f32 %v3027, 0.5
    %v3076 = vmul.f32 %v3028, 0.5
    %v3077 = vmul.f32 %v3029, 0.5
    %v3078 = vmul.f32 %v3030, 0.5
    %v3079 = vmul.f32 %v3031, 0.5
    %v3080 = vmul.f32 %v3032, 0.5
    %v3081 = vmul.f32 %v3033, 0.5
    %v3082 = vmul.f32 %v3034, 0.5
    %v3083 = vmul.f32 %v3035, 0.5
    %v3084 = vmul.f32 %v3036, 0.5
    %v3085 = vmul.f32 %v3037, 0.5
    %v3086 = vmul.f32 %v3038, 0.5
    %v3087 = vmul.f32 %v3039, 0.5
    %v3088 = vmul.f32 %v3040, 0.5
    %v3089 = vmul.f32 %v3041, 0.5
    %v3090 = vmul.f32 %v3042, 0.5
    %v3091 = vmul.f32 %v3043, 0.5
    %v3092 = vmul.f32 %v3044, 0.5
    %v3093 = vmul.f32 %v3045, 0.5
    %v3094 = vmul.f32 %v3046, 0.5
    %v3095 = vmul.f32 %v3047, 0.5
    %v3096 = vmul.f32 %v3048, 0.5
    %v3097 = vmul.f32 %v3049, 0.5
    %v3098 = vmul.f32 %v3050, 0.5
    %v3099 = vmul.f32 %v3051, 0.5
    %v3100 = vmul.f32 %v3052, 0.5
    %v3101 = vmul.f32 %v3053, 0.5
    %v3102 = vmul.f32 %v3054, 0.5
    %v3103 = vmul.f32 %v3055, 0.5
    %v3104 = vmul.f32 %v3056, 0.5
    %v3105 = vmul.f32 %v3057, 0.5
    %v3106 = vmul.f32 %v3058, 0.5
    %v3107 = vmul.f32 %v3059, 0.5
    %v3108 = vrcp.pop 1.4142135
    %v3109 = vmul.f32 %v3012, %v3108
    %v3110 = vmul.f32 %v3013, %v3108
    %v3111 = vmul.f32 %v3014, %v3108
    %v3112 = vmul.f32 %v3015, %v3108
    %v3113 = vmul.f32 %v3016, %v3108
    %v3114 = vmul.f32 %v3017, %v3108
    %v3115 = vmul.f32 %v3018, %v3108
    %v3116 = vmul.f32 %v3019, %v3108
    %v3117 = vmul.f32 %v3020, %v3108
    %v3118 = vmul.f32 %v3021, %v3108
    %v3119 = vmul.f32 %v3022, %v3108
    %v3120 = vmul.f32 %v3023, %v3108
    %v3121 = vmul.f32 %v3024, %v3108
    %v3122 = vmul.f32 %v3025, %v3108
    %v3123 = vmul.f32 %v3026, %v3108
    %v3124 = vmul.f32 %v3027, %v3108
    %v3125 = vmul.f32 %v3028, %v3108
    %v3126 = vmul.f32 %v3029, %v3108
    %v3127 = vmul.f32 %v3030, %v3108
    %v3128 = vmul.f32 %v3031, %v3108
    %v3129 = vmul.f32 %v3032, %v3108
    %v3130 = vmul.f32 %v3033, %v3108
    %v3131 = vmul.f32 %v3034, %v3108
    %v3132 = vmul.f32 %v3035, %v3108
    %v3133 = vmul.f32 %v3036, %v3108
    %v3134 = vmul.f32 %v3037, %v3108
    %v3135 = vmul.f32 %v3038, %v3108
    %v3136 = vmul.f32 %v3039, %v3108
    %v3137 = vmul.f32 %v3040, %v3108
    %v3138 = vmul.f32 %v3041, %v3108
    %v3139 = vmul.f32 %v3042, %v3108
    %v3140 = vmul.f32 %v3043, %v3108
    %v3141 = vmul.f32 %v3044, %v3108
    %v3142 = vmul.f32 %v3045, %v3108
    %v3143 = vmul.f32 %v3046, %v3108
    %v3144 = vmul.f32 %v3047, %v3108
    %v3145 = vmul.f32 %v3048, %v3108
    %v3146 = vmul.f32 %v3049, %v3108
    %v3147 = vmul.f32 %v3050, %v3108
    %v3148 = vmul.f32 %v3051, %v3108
    %v3149 = vmul.f32 %v3052, %v3108
    %v3150 = vmul.f32 %v3053, %v3108
    %v3151 = vmul.f32 %v3054, %v3108
    %v3152 = vmul.f32 %v3055, %v3108
    %v3153 = vmul.f32 %v3056, %v3108
    %v3154 = vmul.f32 %v3057, %v3108
    %v3155 = vmul.f32 %v3058, %v3108
    %v3156 = vmul.f32 %v3059, %v3108
    %v3157 = verf.f32.pop %v3109
    %v3158 = verf.f32.pop %v3110
    %v3159 = verf.f32.pop %v3111
    %v3160 = verf.f32.pop %v3112
    %v3161 = verf.f32.pop %v3113
    %v3162 = verf.f32.pop %v3114
    %v3163 = verf.f32.pop %v3115
    %v3164 = verf.f32.pop %v3116
    %v3165 = verf.f32.pop %v3117
    %v3166 = verf.f32.pop %v3118
    %v3167 = verf.f32.pop %v3119
    %v3168 = verf.f32.pop %v3120
    %v3169 = verf.f32.pop %v3121
    %v3170 = verf.f32.pop %v3122
    %v3171 = verf.f32.pop %v3123
    %v3172 = verf.f32.pop %v3124
    %v3173 = verf.f32.pop %v3125
    %v3174 = verf.f32.pop %v3126
    %v3175 = verf.f32.pop %v3127
    %v3176 = verf.f32.pop %v3128
    %v3177 = verf.f32.pop %v3129
    %v3178 = verf.f32.pop %v3130
    %v3179 = verf.f32.pop %v3131
    %v3180 = verf.f32.pop %v3132
    %v3181 = verf.f32.pop %v3133
    %v3182 = verf.f32.pop %v3134
    %v3183 = verf.f32.pop %v3135
    %v3184 = verf.f32.pop %v3136
    %v3185 = verf.f32.pop %v3137
    %v3186 = verf.f32.pop %v3138
    %v3187 = verf.f32.pop %v3139
    %v3188 = verf.f32.pop %v3140
    %v3189 = verf.f32.pop %v3141
    %v3190 = verf.f32.pop %v3142
    %v3191 = verf.f32.pop %v3143
    %v3192 = verf.f32.pop %v3144
    %v3193 = verf.f32.pop %v3145
    %v3194 = verf.f32.pop %v3146
    %v3195 = verf.f32.pop %v3147
    %v3196 = verf.f32.pop %v3148
    %v3197 = verf.f32.pop %v3149
    %v3198 = verf.f32.pop %v3150
    %v3199 = verf.f32.pop %v3151
    %v3200 = verf.f32.pop %v3152
    %v3201 = verf.f32.pop %v3153
    %v3202 = verf.f32.pop %v3154
    %v3203 = verf.f32.pop %v3155
    %v3204 = verf.f32.pop %v3156
    %v3205 = vadd.f32 %v3157, 1.0
    %v3206 = vadd.f32 %v3158, 1.0
    %v3207 = vadd.f32 %v3159, 1.0
    %v3208 = vadd.f32 %v3160, 1.0
    %v3209 = vadd.f32 %v3161, 1.0
    %v3210 = vadd.f32 %v3162, 1.0
    %v3211 = vadd.f32 %v3163, 1.0
    %v3212 = vadd.f32 %v3164, 1.0
    %v3213 = vadd.f32 %v3165, 1.0
    %v3214 = vadd.f32 %v3166, 1.0
    %v3215 = vadd.f32 %v3167, 1.0
    %v3216 = vadd.f32 %v3168, 1.0
    %v3217 = vadd.f32 %v3169, 1.0
    %v3218 = vadd.f32 %v3170, 1.0
    %v3219 = vadd.f32 %v3171, 1.0
    %v3220 = vadd.f32 %v3172, 1.0
    %v3221 = vadd.f32 %v3173, 1.0
    %v3222 = vadd.f32 %v3174, 1.0
    %v3223 = vadd.f32 %v3175, 1.0
    %v3224 = vadd.f32 %v3176, 1.0
    %v3225 = vadd.f32 %v3177, 1.0
    %v3226 = vadd.f32 %v3178, 1.0
    %v3227 = vadd.f32 %v3179, 1.0
    %v3228 = vadd.f32 %v3180, 1.0
    %v3229 = vadd.f32 %v3181, 1.0
    %v3230 = vadd.f32 %v3182, 1.0
    %v3231 = vadd.f32 %v3183, 1.0
    %v3232 = vadd.f32 %v3184, 1.0
    %v3233 = vadd.f32 %v3185, 1.0
    %v3234 = vadd.f32 %v3186, 1.0
    %v3235 = vadd.f32 %v3187, 1.0
    %v3236 = vadd.f32 %v3188, 1.0
    %v3237 = vadd.f32 %v3189, 1.0
    %v3238 = vadd.f32 %v3190, 1.0
    %v3239 = vadd.f32 %v3191, 1.0
    %v3240 = vadd.f32 %v3192, 1.0
    %v3241 = vadd.f32 %v3193, 1.0
    %v3242 = vadd.f32 %v3194, 1.0
    %v3243 = vadd.f32 %v3195, 1.0
    %v3244 = vadd.f32 %v3196, 1.0
    %v3245 = vadd.f32 %v3197, 1.0
    %v3246 = vadd.f32 %v3198, 1.0
    %v3247 = vadd.f32 %v3199, 1.0
    %v3248 = vadd.f32 %v3200, 1.0
    %v3249 = vadd.f32 %v3201, 1.0
    %v3250 = vadd.f32 %v3202, 1.0
    %v3251 = vadd.f32 %v3203, 1.0
    %v3252 = vadd.f32 %v3204, 1.0
    %v3253 = vmul.f32 %v3060, %v3205
    %v3254 = vmul.f32 %v3061, %v3206
    %v3255 = vmul.f32 %v3062, %v3207
    %v3256 = vmul.f32 %v3063, %v3208
    %v3257 = vmul.f32 %v3064, %v3209
    %v3258 = vmul.f32 %v3065, %v3210
    %v3259 = vmul.f32 %v3066, %v3211
    %v3260 = vmul.f32 %v3067, %v3212
    %v3261 = vmul.f32 %v3068, %v3213
    %v3262 = vmul.f32 %v3069, %v3214
    %v3263 = vmul.f32 %v3070, %v3215
    %v3264 = vmul.f32 %v3071, %v3216
    %v3265 = vmul.f32 %v3072, %v3217
    %v3266 = vmul.f32 %v3073, %v3218
    %v3267 = vmul.f32 %v3074, %v3219
    %v3268 = vmul.f32 %v3075, %v3220
    %v3269 = vmul.f32 %v3076, %v3221
    %v3270 = vmul.f32 %v3077, %v3222
    %v3271 = vmul.f32 %v3078, %v3223
    %v3272 = vmul.f32 %v3079, %v3224
    %v3273 = vmul.f32 %v3080, %v3225
    %v3274 = vmul.f32 %v3081, %v3226
    %v3275 = vmul.f32 %v3082, %v3227
    %v3276 = vmul.f32 %v3083, %v3228
    %v3277 = vmul.f32 %v3084, %v3229
    %v3278 = vmul.f32 %v3085, %v3230
    %v3279 = vmul.f32 %v3086, %v3231
    %v3280 = vmul.f32 %v3087, %v3232
    %v3281 = vmul.f32 %v3088, %v3233
    %v3282 = vmul.f32 %v3089, %v3234
    %v3283 = vmul.f32 %v3090, %v3235
    %v3284 = vmul.f32 %v3091, %v3236
    %v3285 = vmul.f32 %v3092, %v3237
    %v3286 = vmul.f32 %v3093, %v3238
    %v3287 = vmul.f32 %v3094, %v3239
    %v3288 = vmul.f32 %v3095, %v3240
    %v3289 = vmul.f32 %v3096, %v3241
    %v3290 = vmul.f32 %v3097, %v3242
    %v3291 = vmul.f32 %v3098, %v3243
    %v3292 = vmul.f32 %v3099, %v3244
    %v3293 = vmul.f32 %v3100, %v3245
    %v3294 = vmul.f32 %v3101, %v3246
    %v3295 = vmul.f32 %v3102, %v3247
    %v3296 = vmul.f32 %v3103, %v3248
    %v3297 = vmul.f32 %v3104, %v3249
    %v3298 = vmul.f32 %v3105, %v3250
    %v3299 = vmul.f32 %v3106, %v3251
    %v3300 = vmul.f32 %v3107, %v3252
    %v3301 = vld [vmem:[%s1] sm:$0xff]
    %v3302 = vld [vmem:[%s1 + $0x8] sm:$0xff]
    %v3303 = vld [vmem:[%s1 + $0x10] sm:$0xff]
    %v3304 = vld [vmem:[%s1 + $0x18] sm:$0xff]
    %v3305 = vld [vmem:[%s1 + $0x20] sm:$0xff]
    %v3306 = vld [vmem:[%s1 + $0x28] sm:$0xff]
    %v3307 = vld [vmem:[%s1 + $0x30] sm:$0xff]
    %v3308 = vld [vmem:[%s1 + $0x38] sm:$0xff]
    %v3309 = vld [vmem:[%s1 + $0x40] sm:$0xff]
    %v3310 = vld [vmem:[%s1 + $0x48] sm:$0xff]
    %v3311 = vld [vmem:[%s1 + $0x50] sm:$0xff]
    %v3312 = vld [vmem:[%s1 + $0x58] sm:$0xff]
    %v3313 = vld [vmem:[%s1 + $0x60] sm:$0xff]
    %v3314 = vld [vmem:[%s1 + $0x68] sm:$0xff]
    %v3315 = vld [vmem:[%s1 + $0x70] sm:$0xff]
    %v3316 = vld [vmem:[%s1 + $0x78] sm:$0xff]
    %vm3317 = vcmp.eq.f32.partialorder %v3301, 0.0
    %vm3318 = vcmp.eq.f32.partialorder %v3302, 0.0
    %vm3319 = vcmp.eq.f32.partialorder %v3303, 0.0
    %vm3320 = vcmp.eq.f32.partialorder %v3304, 0.0
    %vm3321 = vcmp.eq.f32.partialorder %v3305, 0.0
    %vm3322 = vcmp.eq.f32.partialorder %v3306, 0.0
    %vm3323 = vcmp.eq.f32.partialorder %v3307, 0.0
    %vm3324 = vcmp.eq.f32.partialorder %v3308, 0.0
    %vm3325 = vcmp.eq.f32.partialorder %v3309, 0.0
    %vm3326 = vcmp.eq.f32.partialorder %v3310, 0.0
    %vm3327 = vcmp.eq.f32.partialorder %v3311, 0.0
    %vm3328 = vcmp.eq.f32.partialorder %v3312, 0.0
    %vm3329 = vcmp.eq.f32.partialorder %v3313, 0.0
    %vm3330 = vcmp.eq.f32.partialorder %v3314, 0.0
    %vm3331 = vcmp.eq.f32.partialorder %v3315, 0.0
    %vm3332 = vcmp.eq.f32.partialorder %v3316, 0.0
    %v3333 = vsel %vm3317, 1, 0
    %v3334 = vsel %vm3318, 1, 0
    %v3335 = vsel %vm3319, 1, 0
    %v3336 = vsel %vm3320, 1, 0
    %v3337 = vsel %vm3321, 1, 0
    %v3338 = vsel %vm3322, 1, 0
    %v3339 = vsel %vm3323, 1, 0
    %v3340 = vsel %vm3324, 1, 0
    %v3341 = vsel %vm3325, 1, 0
    %v3342 = vsel %vm3326, 1, 0
    %v3343 = vsel %vm3327, 1, 0
    %v3344 = vsel %vm3328, 1, 0
    %v3345 = vsel %vm3329, 1, 0
    %v3346 = vsel %vm3330, 1, 0
    %v3347 = vsel %vm3331, 1, 0
    %v3348 = vsel %vm3332, 1, 0
    %3349 = vset.pattern.permute.xlu0 0
    %3350 = vperm.xlu0 %3349, %v3333
    %v3351 = vpop.permute.xlu0 %3350
    %3352 = vset.pattern.permute.xlu0 0
    %3353 = vperm.xlu0 %3352, %v3334
    %v3354 = vpop.permute.xlu0 %3353
    %3355 = vset.pattern.permute.xlu0 0
    %3356 = vperm.xlu0 %3355, %v3335
    %v3357 = vpop.permute.xlu0 %3356
    %3358 = vset.pattern.permute.xlu0 0
    %3359 = vperm.xlu0 %3358, %v3336
    %v3360 = vpop.permute.xlu0 %3359
    %3361 = vset.pattern.permute.xlu0 0
    %3362 = vperm.xlu0 %3361, %v3337
    %v3363 = vpop.permute.xlu0 %3362
    %3364 = vset.pattern.permute.xlu0 0
    %3365 = vperm.xlu0 %3364, %v3338
    %v3366 = vpop.permute.xlu0 %3365
    %3367 = vset.pattern.permute.xlu0 0
    %3368 = vperm.xlu0 %3367, %v3339
    %v3369 = vpop.permute.xlu0 %3368
    %3370 = vset.pattern.permute.xlu0 0
    %3371 = vperm.xlu0 %3370, %v3340
    %v3372 = vpop.permute.xlu0 %3371
    %3373 = vset.pattern.permute.xlu0 0
    %3374 = vperm.xlu0 %3373, %v3341
    %v3375 = vpop.permute.xlu0 %3374
    %3376 = vset.pattern.permute.xlu0 0
    %3377 = vperm.xlu0 %3376, %v3342
    %v3378 = vpop.permute.xlu0 %3377
    %3379 = vset.pattern.permute.xlu0 0
    %3380 = vperm.xlu0 %3379, %v3343
    %v3381 = vpop.permute.xlu0 %3380
    %3382 = vset.pattern.permute.xlu0 0
    %3383 = vperm.xlu0 %3382, %v3344
    %v3384 = vpop.permute.xlu0 %3383
    %3385 = vset.pattern.permute.xlu0 0
    %3386 = vperm.xlu0 %3385, %v3345
    %v3387 = vpop.permute.xlu0 %3386
    %3388 = vset.pattern.permute.xlu0 0
    %3389 = vperm.xlu0 %3388, %v3346
    %v3390 = vpop.permute.xlu0 %3389
    %3391 = vset.pattern.permute.xlu0 0
    %3392 = vperm.xlu0 %3391, %v3347
    %v3393 = vpop.permute.xlu0 %3392
    %3394 = vset.pattern.permute.xlu0 0
    %3395 = vperm.xlu0 %3394, %v3348
    %v3396 = vpop.permute.xlu0 %3395
    %vm3397 = vcmp.eq.s32.totalorder %v3351, 1
    %vm3398 = vcmp.eq.s32.totalorder %v3354, 1
    %vm3399 = vcmp.eq.s32.totalorder %v3357, 1
    %vm3400 = vcmp.eq.s32.totalorder %v3360, 1
    %vm3401 = vcmp.eq.s32.totalorder %v3363, 1
    %vm3402 = vcmp.eq.s32.totalorder %v3366, 1
    %vm3403 = vcmp.eq.s32.totalorder %v3369, 1
    %vm3404 = vcmp.eq.s32.totalorder %v3372, 1
    %vm3405 = vcmp.eq.s32.totalorder %v3375, 1
    %vm3406 = vcmp.eq.s32.totalorder %v3378, 1
    %vm3407 = vcmp.eq.s32.totalorder %v3381, 1
    %vm3408 = vcmp.eq.s32.totalorder %v3384, 1
    %vm3409 = vcmp.eq.s32.totalorder %v3387, 1
    %vm3410 = vcmp.eq.s32.totalorder %v3390, 1
    %vm3411 = vcmp.eq.s32.totalorder %v3393, 1
    %vm3412 = vcmp.eq.s32.totalorder %v3396, 1
    %3414 = vset.pattern.permute.xlu0 0
    %3415 = vperm.xlu0 %3414, %v3301
    %v3416 = vpop.permute.xlu0 %3415
    %3419 = vset.pattern.permute.xlu0 0
    %3420 = vperm.xlu0 %3419, %v3302
    %v3421 = vpop.permute.xlu0 %3420
    %3424 = vset.pattern.permute.xlu0 0
    %3425 = vperm.xlu0 %3424, %v3303
    %v3426 = vpop.permute.xlu0 %3425
    %3429 = vset.pattern.permute.xlu0 0
    %3430 = vperm.xlu0 %3429, %v3304
    %v3431 = vpop.permute.xlu0 %3430
    %3434 = vset.pattern.permute.xlu0 0
    %3435 = vperm.xlu0 %3434, %v3305
    %v3436 = vpop.permute.xlu0 %3435
    %3439 = vset.pattern.permute.xlu0 0
    %3440 = vperm.xlu0 %3439, %v3306
    %v3441 = vpop.permute.xlu0 %3440
    %3444 = vset.pattern.permute.xlu0 0
    %3445 = vperm.xlu0 %3444, %v3307
    %v3446 = vpop.permute.xlu0 %3445
    %3449 = vset.pattern.permute.xlu0 0
    %3450 = vperm.xlu0 %3449, %v3308
    %v3451 = vpop.permute.xlu0 %3450
    %3454 = vset.pattern.permute.xlu0 0
    %3455 = vperm.xlu0 %3454, %v3309
    %v3456 = vpop.permute.xlu0 %3455
    %3459 = vset.pattern.permute.xlu0 0
    %3460 = vperm.xlu0 %3459, %v3310
    %v3461 = vpop.permute.xlu0 %3460
    %3464 = vset.pattern.permute.xlu0 0
    %3465 = vperm.xlu0 %3464, %v3311
    %v3466 = vpop.permute.xlu0 %3465
    %3469 = vset.pattern.permute.xlu0 0
    %3470 = vperm.xlu0 %3469, %v3312
    %v3471 = vpop.permute.xlu0 %3470
    %3474 = vset.pattern.permute.xlu0 0
    %3475 = vperm.xlu0 %3474, %v3313
    %v3476 = vpop.permute.xlu0 %3475
    %3479 = vset.pattern.permute.xlu0 0
    %3480 = vperm.xlu0 %3479, %v3314
    %v3481 = vpop.permute.xlu0 %3480
    %3484 = vset.pattern.permute.xlu0 0
    %3485 = vperm.xlu0 %3484, %v3315
    %v3486 = vpop.permute.xlu0 %3485
    %3489 = vset.pattern.permute.xlu0 0
    %3490 = vperm.xlu0 %3489, %v3316
    %v3491 = vpop.permute.xlu0 %3490
    %v3493 = vsel %vm3397, %v3253, %v3416
    %v3494 = vsel %vm3397, %v3254, %v3416
    %v3495 = vsel %vm3397, %v3255, %v3416
    %v3496 = vsel %vm3398, %v3256, %v3421
    %v3497 = vsel %vm3398, %v3257, %v3421
    %v3498 = vsel %vm3398, %v3258, %v3421
    %v3499 = vsel %vm3399, %v3259, %v3426
    %v3500 = vsel %vm3399, %v3260, %v3426
    %v3501 = vsel %vm3399, %v3261, %v3426
    %v3502 = vsel %vm3400, %v3262, %v3431
    %v3503 = vsel %vm3400, %v3263, %v3431
    %v3504 = vsel %vm3400, %v3264, %v3431
    %v3505 = vsel %vm3401, %v3265, %v3436
    %v3506 = vsel %vm3401, %v3266, %v3436
    %v3507 = vsel %vm3401, %v3267, %v3436
    %v3508 = vsel %vm3402, %v3268, %v3441
    %v3509 = vsel %vm3402, %v3269, %v3441
    %v3510 = vsel %vm3402, %v3270, %v3441
    %v3511 = vsel %vm3403, %v3271, %v3446
    %v3512 = vsel %vm3403, %v3272, %v3446
    %v3513 = vsel %vm3403, %v3273, %v3446
    %v3514 = vsel %vm3404, %v3274, %v3451
    %v3515 = vsel %vm3404, %v3275, %v3451
    %v3516 = vsel %vm3404, %v3276, %v3451
    %v3517 = vsel %vm3405, %v3277, %v3456
    %v3518 = vsel %vm3405, %v3278, %v3456
    %v3519 = vsel %vm3405, %v3279, %v3456
    %v3520 = vsel %vm3406, %v3280, %v3461
    %v3521 = vsel %vm3406, %v3281, %v3461
    %v3522 = vsel %vm3406, %v3282, %v3461
    %v3523 = vsel %vm3407, %v3283, %v3466
    %v3524 = vsel %vm3407, %v3284, %v3466
    %v3525 = vsel %vm3407, %v3285, %v3466
    %v3526 = vsel %vm3408, %v3286, %v3471
    %v3527 = vsel %vm3408, %v3287, %v3471
    %v3528 = vsel %vm3408, %v3288, %v3471
    %v3529 = vsel %vm3409, %v3289, %v3476
    %v3530 = vsel %vm3409, %v3290, %v3476
    %v3531 = vsel %vm3409, %v3291, %v3476
    %v3532 = vsel %vm3410, %v3292, %v3481
    %v3533 = vsel %vm3410, %v3293, %v3481
    %v3534 = vsel %vm3410, %v3294, %v3481
    %v3535 = vsel %vm3411, %v3295, %v3486
    %v3536 = vsel %vm3411, %v3296, %v3486
    %v3537 = vsel %vm3411, %v3297, %v3486
    %v3538 = vsel %vm3412, %v3298, %v3491
    %v3539 = vsel %vm3412, %v3299, %v3491
    %v3540 = vsel %vm3412, %v3300, %v3491
    %v3541 = vmax.f32 %v3493, %v3496
    %v3542 = vrot.slane %v3541, 4
    %v3543 = vmax.f32 %v3541, %v3542
    %v3544 = vrot.slane %v3543, 2
    %v3545 = vmax.f32 %v3543, %v3544
    %v3546 = vrot.slane %v3545, 1
    %v3547 = vmax.f32 %v3545, %v3546
    %v3548 = vmax.f32 %v3494, %v3497
    %v3549 = vrot.slane %v3548, 4
    %v3550 = vmax.f32 %v3548, %v3549
    %v3551 = vrot.slane %v3550, 2
    %v3552 = vmax.f32 %v3550, %v3551
    %v3553 = vrot.slane %v3552, 1
    %v3554 = vmax.f32 %v3552, %v3553
    %v3555 = vmax.f32 %v3495, %v3498
    %v3556 = vrot.slane %v3555, 4
    %v3557 = vmax.f32 %v3555, %v3556
    %v3558 = vrot.slane %v3557, 2
    %v3559 = vmax.f32 %v3557, %v3558
    %v3560 = vrot.slane %v3559, 1
    %v3561 = vmax.f32 %v3559, %v3560
    %v3562 = vmax.f32 %v3499, %v3502
    %v3563 = vrot.slane %v3562, 4
    %v3564 = vmax.f32 %v3562, %v3563
    %v3565 = vrot.slane %v3564, 2
    %v3566 = vmax.f32 %v3564, %v3565
    %v3567 = vrot.slane %v3566, 1
    %v3568 = vmax.f32 %v3566, %v3567
    %v3569 = vmax.f32 %v3500, %v3503
    %v3570 = vrot.slane %v3569, 4
    %v3571 = vmax.f32 %v3569, %v3570
    %v3572 = vrot.slane %v3571, 2
    %v3573 = vmax.f32 %v3571, %v3572
    %v3574 = vrot.slane %v3573, 1
    %v3575 = vmax.f32 %v3573, %v3574
    %v3576 = vmax.f32 %v3501, %v3504
    %v3577 = vrot.slane %v3576, 4
    %v3578 = vmax.f32 %v3576, %v3577
    %v3579 = vrot.slane %v3578, 2
    %v3580 = vmax.f32 %v3578, %v3579
    %v3581 = vrot.slane %v3580, 1
    %v3582 = vmax.f32 %v3580, %v3581
    %v3583 = vmax.f32 %v3505, %v3508
    %v3584 = vrot.slane %v3583, 4
    %v3585 = vmax.f32 %v3583, %v3584
    %v3586 = vrot.slane %v3585, 2
    %v3587 = vmax.f32 %v3585, %v3586
    %v3588 = vrot.slane %v3587, 1
    %v3589 = vmax.f32 %v3587, %v3588
    %v3590 = vmax.f32 %v3506, %v3509
    %v3591 = vrot.slane %v3590, 4
    %v3592 = vmax.f32 %v3590, %v3591
    %v3593 = vrot.slane %v3592, 2
    %v3594 = vmax.f32 %v3592, %v3593
    %v3595 = vrot.slane %v3594, 1
    %v3596 = vmax.f32 %v3594, %v3595
    %v3597 = vmax.f32 %v3507, %v3510
    %v3598 = vrot.slane %v3597, 4
    %v3599 = vmax.f32 %v3597, %v3598
    %v3600 = vrot.slane %v3599, 2
    %v3601 = vmax.f32 %v3599, %v3600
    %v3602 = vrot.slane %v3601, 1
    %v3603 = vmax.f32 %v3601, %v3602
    %v3604 = vmax.f32 %v3511, %v3514
    %v3605 = vrot.slane %v3604, 4
    %v3606 = vmax.f32 %v3604, %v3605
    %v3607 = vrot.slane %v3606, 2
    %v3608 = vmax.f32 %v3606, %v3607
    %v3609 = vrot.slane %v3608, 1
    %v3610 = vmax.f32 %v3608, %v3609
    %v3611 = vmax.f32 %v3512, %v3515
    %v3612 = vrot.slane %v3611, 4
    %v3613 = vmax.f32 %v3611, %v3612
    %v3614 = vrot.slane %v3613, 2
    %v3615 = vmax.f32 %v3613, %v3614
    %v3616 = vrot.slane %v3615, 1
    %v3617 = vmax.f32 %v3615, %v3616
    %v3618 = vmax.f32 %v3513, %v3516
    %v3619 = vrot.slane %v3618, 4
    %v3620 = vmax.f32 %v3618, %v3619
    %v3621 = vrot.slane %v3620, 2
    %v3622 = vmax.f32 %v3620, %v3621
    %v3623 = vrot.slane %v3622, 1
    %v3624 = vmax.f32 %v3622, %v3623
    %v3625 = vmax.f32 %v3517, %v3520
    %v3626 = vrot.slane %v3625, 4
    %v3627 = vmax.f32 %v3625, %v3626
    %v3628 = vrot.slane %v3627, 2
    %v3629 = vmax.f32 %v3627, %v3628
    %v3630 = vrot.slane %v3629, 1
    %v3631 = vmax.f32 %v3629, %v3630
    %v3632 = vmax.f32 %v3518, %v3521
    %v3633 = vrot.slane %v3632, 4
    %v3634 = vmax.f32 %v3632, %v3633
    %v3635 = vrot.slane %v3634, 2
    %v3636 = vmax.f32 %v3634, %v3635
    %v3637 = vrot.slane %v3636, 1
    %v3638 = vmax.f32 %v3636, %v3637
    %v3639 = vmax.f32 %v3519, %v3522
    %v3640 = vrot.slane %v3639, 4
    %v3641 = vmax.f32 %v3639, %v3640
    %v3642 = vrot.slane %v3641, 2
    %v3643 = vmax.f32 %v3641, %v3642
    %v3644 = vrot.slane %v3643, 1
    %v3645 = vmax.f32 %v3643, %v3644
    %v3646 = vmax.f32 %v3523, %v3526
    %v3647 = vrot.slane %v3646, 4
    %v3648 = vmax.f32 %v3646, %v3647
    %v3649 = vrot.slane %v3648, 2
    %v3650 = vmax.f32 %v3648, %v3649
    %v3651 = vrot.slane %v3650, 1
    %v3652 = vmax.f32 %v3650, %v3651
    %v3653 = vmax.f32 %v3524, %v3527
    %v3654 = vrot.slane %v3653, 4
    %v3655 = vmax.f32 %v3653, %v3654
    %v3656 = vrot.slane %v3655, 2
    %v3657 = vmax.f32 %v3655, %v3656
    %v3658 = vrot.slane %v3657, 1
    %v3659 = vmax.f32 %v3657, %v3658
    %v3660 = vmax.f32 %v3525, %v3528
    %v3661 = vrot.slane %v3660, 4
    %v3662 = vmax.f32 %v3660, %v3661
    %v3663 = vrot.slane %v3662, 2
    %v3664 = vmax.f32 %v3662, %v3663
    %v3665 = vrot.slane %v3664, 1
    %v3666 = vmax.f32 %v3664, %v3665
    %v3667 = vmax.f32 %v3529, %v3532
    %v3668 = vrot.slane %v3667, 4
    %v3669 = vmax.f32 %v3667, %v3668
    %v3670 = vrot.slane %v3669, 2
    %v3671 = vmax.f32 %v3669, %v3670
    %v3672 = vrot.slane %v3671, 1
    %v3673 = vmax.f32 %v3671, %v3672
    %v3674 = vmax.f32 %v3530, %v3533
    %v3675 = vrot.slane %v3674, 4
    %v3676 = vmax.f32 %v3674, %v3675
    %v3677 = vrot.slane %v3676, 2
    %v3678 = vmax.f32 %v3676, %v3677
    %v3679 = vrot.slane %v3678, 1
    %v3680 = vmax.f32 %v3678, %v3679
    %v3681 = vmax.f32 %v3531, %v3534
    %v3682 = vrot.slane %v3681, 4
    %v3683 = vmax.f32 %v3681, %v3682
    %v3684 = vrot.slane %v3683, 2
    %v3685 = vmax.f32 %v3683, %v3684
    %v3686 = vrot.slane %v3685, 1
    %v3687 = vmax.f32 %v3685, %v3686
    %v3688 = vmax.f32 %v3535, %v3538
    %v3689 = vrot.slane %v3688, 4
    %v3690 = vmax.f32 %v3688, %v3689
    %v3691 = vrot.slane %v3690, 2
    %v3692 = vmax.f32 %v3690, %v3691
    %v3693 = vrot.slane %v3692, 1
    %v3694 = vmax.f32 %v3692, %v3693
    %v3695 = vmax.f32 %v3536, %v3539
    %v3696 = vrot.slane %v3695, 4
    %v3697 = vmax.f32 %v3695, %v3696
    %v3698 = vrot.slane %v3697, 2
    %v3699 = vmax.f32 %v3697, %v3698
    %v3700 = vrot.slane %v3699, 1
    %v3701 = vmax.f32 %v3699, %v3700
    %v3702 = vmax.f32 %v3537, %v3540
    %v3703 = vrot.slane %v3702, 4
    %v3704 = vmax.f32 %v3702, %v3703
    %v3705 = vrot.slane %v3704, 2
    %v3706 = vmax.f32 %v3704, %v3705
    %v3707 = vrot.slane %v3706, 1
    %v3708 = vmax.f32 %v3706, %v3707
    %v3709 = vld [vmem:[%s3] sm:$0xff]
    %v3710 = vld [vmem:[%s3 + $0x8] sm:$0xff]
    %v3711 = vld [vmem:[%s3 + $0x10] sm:$0xff]
    %v3712 = vld [vmem:[%s3 + $0x18] sm:$0xff]
    %v3713 = vld [vmem:[%s3 + $0x20] sm:$0xff]
    %v3714 = vld [vmem:[%s3 + $0x28] sm:$0xff]
    %v3715 = vld [vmem:[%s3 + $0x30] sm:$0xff]
    %v3716 = vld [vmem:[%s3 + $0x38] sm:$0xff]
    %v3717 = vld [vmem:[%s3 + $0x40] sm:$0xff]
    %v3718 = vld [vmem:[%s3 + $0x48] sm:$0xff]
    %v3719 = vld [vmem:[%s3 + $0x50] sm:$0xff]
    %v3720 = vld [vmem:[%s3 + $0x58] sm:$0xff]
    %v3721 = vld [vmem:[%s3 + $0x60] sm:$0xff]
    %v3722 = vld [vmem:[%s3 + $0x68] sm:$0xff]
    %v3723 = vld [vmem:[%s3 + $0x70] sm:$0xff]
    %v3724 = vld [vmem:[%s3 + $0x78] sm:$0xff]
    %v3725 = vld [vmem:[%s3 + $0x80] sm:$0xff]
    %v3726 = vld [vmem:[%s3 + $0x88] sm:$0xff]
    %v3727 = vld [vmem:[%s3 + $0x90] sm:$0xff]
    %v3728 = vld [vmem:[%s3 + $0x98] sm:$0xff]
    %v3729 = vld [vmem:[%s3 + $0xa0] sm:$0xff]
    %v3730 = vld [vmem:[%s3 + $0xa8] sm:$0xff]
    %v3731 = vld [vmem:[%s3 + $0xb0] sm:$0xff]
    %v3732 = vld [vmem:[%s3 + $0xb8] sm:$0xff]
    %v3733 = vld [vmem:[%s3 + $0xc0] sm:$0xff]
    %v3734 = vld [vmem:[%s3 + $0xc8] sm:$0xff]
    %v3735 = vld [vmem:[%s3 + $0xd0] sm:$0xff]
    %v3736 = vld [vmem:[%s3 + $0xd8] sm:$0xff]
    %v3737 = vld [vmem:[%s3 + $0xe0] sm:$0xff]
    %v3738 = vld [vmem:[%s3 + $0xe8] sm:$0xff]
    %v3739 = vld [vmem:[%s3 + $0xf0] sm:$0xff]
    %v3740 = vld [vmem:[%s3 + $0xf8] sm:$0xff]
    %v3741 = vld [vmem:[%s3 + $0x100] sm:$0xff]
    %v3742 = vld [vmem:[%s3 + $0x108] sm:$0xff]
    %v3743 = vld [vmem:[%s3 + $0x110] sm:$0xff]
    %v3744 = vld [vmem:[%s3 + $0x118] sm:$0xff]
    %v3745 = vld [vmem:[%s3 + $0x120] sm:$0xff]
    %v3746 = vld [vmem:[%s3 + $0x128] sm:$0xff]
    %v3747 = vld [vmem:[%s3 + $0x130] sm:$0xff]
    %v3748 = vld [vmem:[%s3 + $0x138] sm:$0xff]
    %v3749 = vld [vmem:[%s3 + $0x140] sm:$0xff]
    %v3750 = vld [vmem:[%s3 + $0x148] sm:$0xff]
    %v3751 = vld [vmem:[%s3 + $0x150] sm:$0xff]
    %v3752 = vld [vmem:[%s3 + $0x158] sm:$0xff]
    %v3753 = vld [vmem:[%s3 + $0x160] sm:$0xff]
    %v3754 = vld [vmem:[%s3 + $0x168] sm:$0xff]
    %v3755 = vld [vmem:[%s3 + $0x170] sm:$0xff]
    %v3756 = vld [vmem:[%s3 + $0x178] sm:$0xff]
    %v3757 = vld [vmem:[%s4] sm:$0x1]
    %v3759 = vlaneseq
    %v3760 = vshrl.u32 %v3759, 7
    %v3761 = vsub.s32 0, %v3760
    %v3762 = vrot.slane %v3757, %v3761
    %vm3788 = vcmask 1041409
    %v3789 = vsel %vm3788, %v3568, %v3547
    %vm3790 = vcmask 1042434
    %v3791 = vsel %vm3790, %v3589, %v3789
    %vm3792 = vcmask 1043459
    %v3793 = vsel %vm3792, %v3610, %v3791
    %vm3794 = vcmask 1044484
    %v3795 = vsel %vm3794, %v3631, %v3793
    %vm3796 = vcmask 1045509
    %v3797 = vsel %vm3796, %v3652, %v3795
    %vm3798 = vcmask 1046534
    %v3799 = vsel %vm3798, %v3673, %v3797
    %vm3800 = vcmask 1047559
    %v3801 = vsel %vm3800, %v3694, %v3799
    %v3802 = vsel %vm3788, %v3575, %v3554
    %v3803 = vsel %vm3790, %v3596, %v3802
    %v3804 = vsel %vm3792, %v3617, %v3803
    %v3805 = vsel %vm3794, %v3638, %v3804
    %v3806 = vsel %vm3796, %v3659, %v3805
    %v3807 = vsel %vm3798, %v3680, %v3806
    %v3808 = vsel %vm3800, %v3701, %v3807
    %v3809 = vsel %vm3788, %v3582, %v3561
    %v3810 = vsel %vm3790, %v3603, %v3809
    %v3811 = vsel %vm3792, %v3624, %v3810
    %v3812 = vsel %vm3794, %v3645, %v3811
    %v3813 = vsel %vm3796, %v3666, %v3812
    %v3814 = vsel %vm3798, %v3687, %v3813
    %v3815 = vsel %vm3800, %v3708, %v3814
    %3819 = vmatprep.subr.mxu0 0.0
    %3820 = vmatpush1.msra.mxu0 %v3724
    %3821 = vmatprep.subr.mxu0 0.0
    %3822 = vmatpush1.msra.mxu0 %v3723
    %3823 = vmatprep.subr.mxu0 0.0
    %3824 = vmatpush1.msra.mxu0 %v3722
    %3825 = vmatprep.subr.mxu0 0.0
    %3826 = vmatpush1.msra.mxu0 %v3721
    %3827 = vmatprep.subr.mxu0 0.0
    %3828 = vmatpush1.msra.mxu0 %v3720
    %3829 = vmatprep.subr.mxu0 0.0
    %3830 = vmatpush1.msra.mxu0 %v3719
    %3831 = vmatprep.subr.mxu0 0.0
    %3832 = vmatpush1.msra.mxu0 %v3718
    %3833 = vmatprep.subr.mxu0 0.0
    %3834 = vmatpush1.msra.mxu0 %v3717
    %3835 = vmatprep.subr.mxu0 0.0
    %3836 = vmatpush1.msra.mxu0 %v3716
    %3837 = vmatprep.subr.mxu0 0.0
    %3838 = vmatpush1.msra.mxu0 %v3715
    %3839 = vmatprep.subr.mxu0 0.0
    %3840 = vmatpush1.msra.mxu0 %v3714
    %3841 = vmatprep.subr.mxu0 0.0
    %3842 = vmatpush1.msra.mxu0 %v3713
    %3843 = vmatprep.subr.mxu0 0.0
    %3844 = vmatpush1.msra.mxu0 %v3712
    %3845 = vmatprep.subr.mxu0 0.0
    %3846 = vmatpush1.msra.mxu0 %v3711
    %3847 = vmatprep.subr.mxu0 0.0
    %3848 = vmatpush1.msra.mxu0 %v3710
    %3849 = vmatprep.subr.mxu0 0.0
    %3850 = vmatpush1.msra.mxu0 %v3709
    %3851 = vmatprep.subr.mxu0 0.0
    %3852 = vmatpush2.msra.mxu0 %v3740
    %3853 = vmatprep.subr.mxu0 0.0
    %3854 = vmatpush2.msra.mxu0 %v3739
    %3855 = vmatprep.subr.mxu0 0.0
    %3856 = vmatpush2.msra.mxu0 %v3738
    %3857 = vmatprep.subr.mxu0 0.0
    %3858 = vmatpush2.msra.mxu0 %v3737
    %3859 = vmatprep.subr.mxu0 0.0
    %3860 = vmatpush2.msra.mxu0 %v3736
    %3861 = vmatprep.subr.mxu0 0.0
    %3862 = vmatpush2.msra.mxu0 %v3735
    %3863 = vmatprep.subr.mxu0 0.0
    %3864 = vmatpush2.msra.mxu0 %v3734
    %3865 = vmatprep.subr.mxu0 0.0
    %3866 = vmatpush2.msra.mxu0 %v3733
    %3867 = vmatprep.subr.mxu0 0.0
    %3868 = vmatpush2.msra.mxu0 %v3732
    %3869 = vmatprep.subr.mxu0 0.0
    %3870 = vmatpush2.msra.mxu0 %v3731
    %3871 = vmatprep.subr.mxu0 0.0
    %3872 = vmatpush2.msra.mxu0 %v3730
    %3873 = vmatprep.subr.mxu0 0.0
    %3874 = vmatpush2.msra.mxu0 %v3729
    %3875 = vmatprep.subr.mxu0 0.0
    %3876 = vmatpush2.msra.mxu0 %v3728
    %3877 = vmatprep.subr.mxu0 0.0
    %3878 = vmatpush2.msra.mxu0 %v3727
    %3879 = vmatprep.subr.mxu0 0.0
    %3880 = vmatpush2.msra.mxu0 %v3726
    %3881 = vmatprep.subr.mxu0 0.0
    %3882 = vmatpush2.msra.mxu0 %v3725
    %3883 = vmatprep.mubr.f32.mxu0 %v3808
    %3884 = vmatmul.mubr.f32.gmra.mxu0 %v3801
    %v3885 = vpop.f32.mrf.mxu0
    %v3886 = vadd.f32 %v3762, %v3885
    %v3887 = vpop.f32.mrf.mxu0
    %3888 = vdwg.mxu0
    %3889 = vmatprep.subr.mxu0 0.0
    %3890 = vmatpush1.msra.mxu0 %v3756
    %3891 = vmatprep.subr.mxu0 0.0
    %3892 = vmatpush1.msra.mxu0 %v3755
    %3893 = vmatprep.subr.mxu0 0.0
    %3894 = vmatpush1.msra.mxu0 %v3754
    %3895 = vmatprep.subr.mxu0 0.0
    %3896 = vmatpush1.msra.mxu0 %v3753
    %3897 = vmatprep.subr.mxu0 0.0
    %3898 = vmatpush1.msra.mxu0 %v3752
    %3899 = vmatprep.subr.mxu0 0.0
    %3900 = vmatpush1.msra.mxu0 %v3751
    %3901 = vmatprep.subr.mxu0 0.0
    %3902 = vmatpush1.msra.mxu0 %v3750
    %3903 = vmatprep.subr.mxu0 0.0
    %3904 = vmatpush1.msra.mxu0 %v3749
    %3905 = vmatprep.subr.mxu0 0.0
    %3906 = vmatpush1.msra.mxu0 %v3748
    %3907 = vmatprep.subr.mxu0 0.0
    %3908 = vmatpush1.msra.mxu0 %v3747
    %3909 = vmatprep.subr.mxu0 0.0
    %3910 = vmatpush1.msra.mxu0 %v3746
    %3911 = vmatprep.subr.mxu0 0.0
    %3912 = vmatpush1.msra.mxu0 %v3745
    %3913 = vmatprep.subr.mxu0 0.0
    %3914 = vmatpush1.msra.mxu0 %v3744
    %3915 = vmatprep.subr.mxu0 0.0
    %3916 = vmatpush1.msra.mxu0 %v3743
    %3917 = vmatprep.subr.mxu0 0.0
    %3918 = vmatpush1.msra.mxu0 %v3742
    %3919 = vmatprep.subr.mxu0 0.0
    %3920 = vmatpush1.msra.mxu0 %v3741
    %3921 = vmatprep.subr.mxu0 0.0
    %3922 = vmatpush2.msra.mxu0 0.0
    %3923 = vmatprep.subr.mxu0 0.0
    %3924 = vmatpush2.msra.mxu0 0.0
    %3925 = vmatprep.subr.mxu0 0.0
    %3926 = vmatpush2.msra.mxu0 0.0
    %3927 = vmatprep.subr.mxu0 0.0
    %3928 = vmatpush2.msra.mxu0 0.0
    %3929 = vmatprep.subr.mxu0 0.0
    %3930 = vmatpush2.msra.mxu0 0.0
    %3931 = vmatprep.subr.mxu0 0.0
    %3932 = vmatpush2.msra.mxu0 0.0
    %3933 = vmatprep.subr.mxu0 0.0
    %3934 = vmatpush2.msra.mxu0 0.0
    %3935 = vmatprep.subr.mxu0 0.0
    %3936 = vmatpush2.msra.mxu0 0.0
    %3937 = vmatprep.subr.mxu0 0.0
    %3938 = vmatpush2.msra.mxu0 0.0
    %3939 = vmatprep.subr.mxu0 0.0
    %3940 = vmatpush2.msra.mxu0 0.0
    %3941 = vmatprep.subr.mxu0 0.0
    %3942 = vmatpush2.msra.mxu0 0.0
    %3943 = vmatprep.subr.mxu0 0.0
    %3944 = vmatpush2.msra.mxu0 0.0
    %3945 = vmatprep.subr.mxu0 0.0
    %3946 = vmatpush2.msra.mxu0 0.0
    %3947 = vmatprep.subr.mxu0 0.0
    %3948 = vmatpush2.msra.mxu0 0.0
    %3949 = vmatprep.subr.mxu0 0.0
    %3950 = vmatpush2.msra.mxu0 0.0
    %3951 = vmatprep.subr.mxu0 0.0
    %3952 = vmatpush2.msra.mxu0 0.0
    %3953 = vmatprep.mubr.f32.mxu0 0.0
    %3954 = vmatmul.mubr.f32.gmra.mxu0 %v3815
    %v3955 = vpop.f32.mrf.mxu0
    %v3956 = vadd.f32 %v3886, %v3955
    %v3957 = vpop.f32.mrf.mxu0
    %3958 = vdwg.mxu0
    %vm3959 = vcmp.gt.f32.partialorder %v3956, 0.0
    %v3960 = vmul.f32 %v3956, 0.01
    %v3961 = vsel %vm3959, %v3956, %v3960
    %v3962 = vld [vmem:[#allocation5] sm:$0xff]
    %v3963 = vld [vmem:[#allocation5 + $0x8] sm:$0xff]
    %v3964 = vld [vmem:[#allocation5 + $0x10] sm:$0xff]
    %v3965 = vld [vmem:[#allocation5 + $0x18] sm:$0xff]
    %v3966 = vld [vmem:[#allocation5 + $0x20] sm:$0xff]
    %v3967 = vld [vmem:[#allocation5 + $0x28] sm:$0xff]
    %v3968 = vld [vmem:[#allocation5 + $0x30] sm:$0xff]
    %v3969 = vld [vmem:[#allocation5 + $0x38] sm:$0xff]
    %v3970 = vld [vmem:[#allocation5 + $0x40] sm:$0xff]
    %v3971 = vld [vmem:[#allocation5 + $0x48] sm:$0xff]
    %v3972 = vld [vmem:[#allocation5 + $0x50] sm:$0xff]
    %v3973 = vld [vmem:[#allocation5 + $0x58] sm:$0xff]
    %v3974 = vld [vmem:[#allocation5 + $0x60] sm:$0xff]
    %v3975 = vld [vmem:[#allocation5 + $0x68] sm:$0xff]
    %v3976 = vld [vmem:[#allocation5 + $0x70] sm:$0xff]
    %v3977 = vld [vmem:[#allocation5 + $0x78] sm:$0xff]
    %v3978 = vld [vmem:[%s6] sm:$0x1]
    %v3980 = vlaneseq
    %v3981 = vshrl.u32 %v3980, 7
    %v3982 = vsub.s32 0, %v3981
    %v3983 = vrot.slane %v3978, %v3982
    %3985 = vmatprep.subr.mxu0 0.0
    %3986 = vmatpush1.msra.mxu0 %v3977
    %3987 = vmatprep.subr.mxu0 0.0
    %3988 = vmatpush1.msra.mxu0 %v3976
    %3989 = vmatprep.subr.mxu0 0.0
    %3990 = vmatpush1.msra.mxu0 %v3975
    %3991 = vmatprep.subr.mxu0 0.0
    %3992 = vmatpush1.msra.mxu0 %v3974
    %3993 = vmatprep.subr.mxu0 0.0
    %3994 = vmatpush1.msra.mxu0 %v3973
    %3995 = vmatprep.subr.mxu0 0.0
    %3996 = vmatpush1.msra.mxu0 %v3972
    %3997 = vmatprep.subr.mxu0 0.0
    %3998 = vmatpush1.msra.mxu0 %v3971
    %3999 = vmatprep.subr.mxu0 0.0
    %4000 = vmatpush1.msra.mxu0 %v3970
    %4001 = vmatprep.subr.mxu0 0.0
    %4002 = vmatpush1.msra.mxu0 %v3969
    %4003 = vmatprep.subr.mxu0 0.0
    %4004 = vmatpush1.msra.mxu0 %v3968
    %4005 = vmatprep.subr.mxu0 0.0
    %4006 = vmatpush1.msra.mxu0 %v3967
    %4007 = vmatprep.subr.mxu0 0.0
    %4008 = vmatpush1.msra.mxu0 %v3966
    %4009 = vmatprep.subr.mxu0 0.0
    %4010 = vmatpush1.msra.mxu0 %v3965
    %4011 = vmatprep.subr.mxu0 0.0
    %4012 = vmatpush1.msra.mxu0 %v3964
    %4013 = vmatprep.subr.mxu0 0.0
    %4014 = vmatpush1.msra.mxu0 %v3963
    %4015 = vmatprep.subr.mxu0 0.0
    %4016 = vmatpush1.msra.mxu0 %v3962
    %4017 = vmatprep.subr.mxu0 0.0
    %4018 = vmatpush2.msra.mxu0 0.0
    %4019 = vmatprep.subr.mxu0 0.0
    %4020 = vmatpush2.msra.mxu0 0.0
    %4021 = vmatprep.subr.mxu0 0.0
    %4022 = vmatpush2.msra.mxu0 0.0
    %4023 = vmatprep.subr.mxu0 0.0
    %4024 = vmatpush2.msra.mxu0 0.0
    %4025 = vmatprep.subr.mxu0 0.0
    %4026 = vmatpush2.msra.mxu0 0.0
    %4027 = vmatprep.subr.mxu0 0.0
    %4028 = vmatpush2.msra.mxu0 0.0
    %4029 = vmatprep.subr.mxu0 0.0
    %4030 = vmatpush2.msra.mxu0 0.0
    %4031 = vmatprep.subr.mxu0 0.0
    %4032 = vmatpush2.msra.mxu0 0.0
    %4033 = vmatprep.subr.mxu0 0.0
    %4034 = vmatpush2.msra.mxu0 0.0
    %4035 = vmatprep.subr.mxu0 0.0
    %4036 = vmatpush2.msra.mxu0 0.0
    %4037 = vmatprep.subr.mxu0 0.0
    %4038 = vmatpush2.msra.mxu0 0.0
    %4039 = vmatprep.subr.mxu0 0.0
    %4040 = vmatpush2.msra.mxu0 0.0
    %4041 = vmatprep.subr.mxu0 0.0
    %4042 = vmatpush2.msra.mxu0 0.0
    %4043 = vmatprep.subr.mxu0 0.0
    %4044 = vmatpush2.msra.mxu0 0.0
    %4045 = vmatprep.subr.mxu0 0.0
    %4046 = vmatpush2.msra.mxu0 0.0
    %4047 = vmatprep.subr.mxu0 0.0
    %4048 = vmatpush2.msra.mxu0 0.0
    %4049 = vmatprep.mubr.f32.mxu0 0.0
    %4050 = vmatmul.mubr.f32.gmra.mxu0 %v3961
    %v4051 = vpop.f32.mrf.mxu0
    %v4052 = vadd.f32 %v3983, %v4051
    %v4053 = vpop.f32.mrf.mxu0
    %4054 = vdwg.mxu0
    %4055 = vst [vmem:[#allocation7] sm:$0xff] %v4052
    // Predicated region
    $region38: #{tpu_custom_call.1} parent=1 // pred_check
      _
    $region39: #{tpu_custom_call.1} parent=1 // pred_check_branch
      %4057 = sbr.rel (0) target = $region41
    $region40: #{tpu_custom_call.1} parent=1 // pred_region
      %s4059 = ssub.s32 128, 128
      %4060 = vsyncadd [#allocation4], %s4059
      %s4062 = sshll.u32 [#allocation7], 4
      %s4063 = int_to_ptr.vmem [resolvable:$true] %s4062
      %4065 = dma.vmem_to_hbm [thread:$0]  %s4063, 128, %s7, [#allocation4]
    $region41: #{tpu_custom_call.1} parent=1 // pred_fallthru
      _
    // Predicated region
    $region42: #{tpu_custom_call.1} parent=1 // pred_check
      _
    $region43: #{tpu_custom_call.1} parent=1 // pred_check_branch
      %4067 = sbr.rel (0) target = $region45
    $region44: #{tpu_custom_call.1} parent=1 // pred_region
      %4068 = dma.done [#allocation4], 128
    $region45: #{tpu_custom_call.1} parent=1 // pred_fallthru
      _
    %4069 = vsyncpa [#allocation3], 1
    %4070 = vsyncpa [#allocation6], 1
    %4071 = vsyncpa [#allocation4], 1

</llo_original>
